<compile_context>
chip_gen: v6e
topology: v6e:2x2x1
jax: 0.10.0
libtpu: 0.0.40
codegen_flags: <defaults>
</compile_context>

<pallas_src>
import functools

import jax
import jax.numpy as jnp
from jax.experimental import pallas as pl
from jax.experimental.pallas import tpu as pltpu


def _layernorm(v, alpha, bias, eps=1e-6):
    # Matches the classic `Norm` module: alpha * (x - mean) / (std + eps) + bias,
    # with torch's unbiased std (ddof=1). Statistics stay in f32.
    d = v.shape[-1]
    mu = jnp.mean(v, axis=-1, keepdims=True)
    c = v - mu
    var = jnp.sum(c * c, axis=-1, keepdims=True) * (1.0 / (d - 1))
    inv = pl.reciprocal(jnp.sqrt(var) + eps, approx=True)   # (rows, 1) on the EUP slot
    return alpha * (c * inv) + bias


def encoder_layer_kernel(x_ref, cm_ref, notfirst_ref, notlast_ref,
                         n1a_ref, n1b_ref,
                         w1_ref, b1_ref,
                         wconv_ref,
                         w2_ref, b2_ref,
                         n2a_ref, n2b_ref,
                         wf1_ref, bf1_ref,
                         wf2_ref, bf2_ref,
                         o_ref, *, ff_chunks):
    rows, d = x_ref.shape
    x = x_ref[...]                       # (rows, D) f32, rows = batch_block * S
    cm = cm_ref[...]                     # (rows, 1) f32 0/1 padding mask

    # ---------- sublayer 1: norm_1 -> LightweightConvLayer -> residual ----------
    h = _layernorm(x, n1a_ref[0], n1b_ref[0])

    # linear_1 (D -> 2D) + GLU   (bf16 operands, f32 accumulate)
    z = jnp.dot(h.astype(jnp.bfloat16), w1_ref[...],
                preferred_element_type=jnp.float32) + b1_ref[0]
    g = z[:, :d] * jax.nn.sigmoid(z[:, d:])

    # masked_fill(conv_mask == 0, 0): mask is already 0/1 -> plain multiply
    g = g * cm

    # LightweightConv1dTBC: kernel_size=3, padding_l=1, per-head softmaxed weights
    # expanded per-channel to (3, D).  Sequence boundaries inside the fused-batch
    # block are handled by the precomputed (rows, 1) not_first / not_last multipliers
    # (they also zero the block wrap-around introduced by pltpu.roll).
    x_prev = pltpu.roll(g, shift=1, axis=0) * notfirst_ref[...]
    x_next = pltpu.roll(g, shift=rows - 1, axis=0) * notlast_ref[...]
    conv = wconv_ref[0] * x_prev + wconv_ref[1] * g + wconv_ref[2] * x_next

    # linear_2 (conv_dim -> D)
    y = jnp.dot(conv.astype(jnp.bfloat16), w2_ref[...],
                preferred_element_type=jnp.float32) + b2_ref[0]
    x1 = x + y                           # dropout_1 == identity in eval

    # ---------- sublayer 2: norm_2 -> FeedForward -> residual ----------
    h2 = _layernorm(x1, n2a_ref[0], n2b_ref[0])
    h2b = h2.astype(jnp.bfloat16)

    def ff_chunk(c, acc):
        # wf1_ref: (n_chunks, D, fc), bf1_ref: (n_chunks, 1, fc), wf2_ref: (n_chunks, fc, D)
        f = jnp.dot(h2b, wf1_ref[c], preferred_element_type=jnp.float32) + bf1_ref[c]
        f = jnp.maximum(f, 0.0)
        return acc + jnp.dot(f.astype(jnp.bfloat16), wf2_ref[c],
                             preferred_element_type=jnp.float32)

    acc0 = jnp.zeros((rows, d), jnp.float32)
    if ff_chunks == 1:
        acc = ff_chunk(0, acc0)
    else:
        acc = jax.lax.fori_loop(0, ff_chunks, ff_chunk, acc0,
                                unroll=(ff_chunks <= 8))

    o_ref[...] = x1 + acc + bf2_ref[0]   # dropout_2 == identity in eval


def _pick_batch_block(B, S, target_rows=256):
    # smallest divisor of B whose row count satisfies the (8,128) rule and fills the MXU
    cands = [tb for tb in range(1, B + 1)
             if B % tb == 0 and ((tb * S) % 8 == 0 or tb == B)]
    for tb in cands:
        if tb * S >= target_rows:
            return tb
    return cands[-1]


def _pick_ff_chunk(F):
    if F <= 1024:
        return F
    for fc in (1024, 512, 256, 128):
        if F % fc == 0:
            return fc
    return F


def _vmem_limit_bytes():
    try:
        cap = pltpu.get_tpu_info().vmem_capacity_bytes
        return int(min(100 * 2 ** 20, (cap * 3) // 4))   # 96 MiB on v5e/v6e, 48 MiB on v7x
    except Exception:
        return 32 * 2 ** 20


def encoder_layer(x, mask, params, *, batch_block=None, ff_chunk=None,
                  single_buffer_weights=True):
    B, S, D = x.shape
    F = params["wf1"].shape[1]
    H, K = params["conv_w"].shape
    assert K == 3 and D % H == 0

    # ---- glue (cheap JAX preprocessing outside the kernel) ----
    conv_mask = mask[:, -1, :].astype(jnp.float32).reshape(B * S, 1)

    # per-head softmaxed conv weights expanded per-channel -> (K, D)
    w_sm = jax.nn.softmax(params["conv_w"].astype(jnp.float32), axis=-1)
    wconv = jnp.repeat(w_sm, D // H, axis=0).T                       # (K, D)

    if batch_block is None:
        batch_block = _pick_batch_block(B, S)
    assert B % batch_block == 0
    rows = batch_block * S
    n_blocks = B // batch_block

    if ff_chunk is None:
        ff_chunk = _pick_ff_chunk(F)
    assert F % ff_chunk == 0
    n_chunks = F // ff_chunk

    # sequence-boundary multipliers for the depthwise conv inside a fused-batch block
    r = jnp.arange(rows) % S
    not_first = (r != 0).astype(jnp.float32)[:, None]                # (rows, 1)
    not_last = (r != S - 1).astype(jnp.float32)[:, None]             # (rows, 1)

    # matmul weights as bf16 (MXU-native); biases / norm params stay f32
    w1 = params["w1"].astype(jnp.bfloat16)
    w2 = params["w2"].astype(jnp.bfloat16)
    wf1 = (params["wf1"].astype(jnp.bfloat16)
           .reshape(D, n_chunks, ff_chunk).transpose(1, 0, 2))       # (n, D, fc)
    bf1 = (params["bf1"].astype(jnp.float32)
           .reshape(1, n_chunks, ff_chunk).transpose(1, 0, 2))       # (n, 1, fc)
    wf2 = params["wf2"].astype(jnp.bfloat16).reshape(n_chunks, ff_chunk, D)

    x_flat = x.reshape(B * S, D).astype(jnp.float32)

    def _inv_spec(shape, buffered):
        idx = lambda b, n=len(shape): (0,) * n
        if buffered:
            return pl.BlockSpec(shape, idx, pipeline_mode=pl.Buffered(1))
        return pl.BlockSpec(shape, idx)

    def _build(buffered):
        in_specs = [
            pl.BlockSpec((rows, D), lambda b: (b, 0)),                   # x (flattened)
            pl.BlockSpec((rows, 1), lambda b: (b, 0)),                   # conv/padding mask
            _inv_spec((rows, 1), buffered),                              # not_first
            _inv_spec((rows, 1), buffered),                              # not_last
            _inv_spec((1, D), buffered), _inv_spec((1, D), buffered),    # norm_1 alpha/bias
            _inv_spec((D, 2 * D), buffered), _inv_spec((1, 2 * D), buffered),  # linear_1
            _inv_spec((K, D), buffered),                                 # conv weights
            _inv_spec((D, D), buffered), _inv_spec((1, D), buffered),    # linear_2
            _inv_spec((1, D), buffered), _inv_spec((1, D), buffered),    # norm_2 alpha/bias
            _inv_spec((n_chunks, D, ff_chunk), buffered),                # ff linear_1 W (chunked)
            _inv_spec((n_chunks, 1, ff_chunk), buffered),                # ff linear_1 b (chunked)
            _inv_spec((n_chunks, ff_chunk, D), buffered),                # ff linear_2 W (chunked)
            _inv_spec((1, D), buffered),                                 # ff linear_2 b
        ]
        grid_spec = pltpu.PrefetchScalarGridSpec(
            num_scalar_prefetch=0,
            grid=(n_blocks,),
            in_specs=in_specs,
            out_specs=pl.BlockSpec((rows, D), lambda b: (b, 0)),
        )
        return pl.pallas_call(
            functools.partial(encoder_layer_kernel, ff_chunks=n_chunks),
            out_shape=jax.ShapeDtypeStruct((B * S, D), jnp.float32),
            grid_spec=grid_spec,
            compiler_params=pltpu.CompilerParams(
                dimension_semantics=("parallel",),
                vmem_limit_bytes=_vmem_limit_bytes()),
        )

    args = (x_flat, conv_mask, not_first, not_last,
            params["n1a"], params["n1b"], w1, params["b1"], wconv,
            w2, params["b2"], params["n2a"], params["n2b"],
            wf1, bf1, wf2, params["bf2"])

    use_buffered = single_buffer_weights and hasattr(pl, "Buffered")
    if use_buffered:
        try:
            out = _build(True)(*args)
        except Exception:
            # conservative fallback if Buffered(1) single-buffering is rejected
            out = _build(False)(*args)
    else:
        out = _build(False)(*args)
    return out.reshape(B, S, D)


def encoder_layer_ref(x, mask, params):
    # pure-JAX f32 reference (same math) for a sanity check
    B, S, D = x.shape
    H, K = params["conv_w"].shape
    R = D // H
    cm = mask[:, -1, :].astype(jnp.float32)[..., None]

    def ln(v, a, b):
        mu = jnp.mean(v, -1, keepdims=True)
        std = jnp.sqrt(jnp.sum((v - mu) ** 2, -1, keepdims=True) / (D - 1))
        return a * (v - mu) / (std + 1e-6) + b

    h = ln(x, params["n1a"][0], params["n1b"][0])
    z = h @ params["w1"] + params["b1"][0]
    h = z[..., :D] * jax.nn.sigmoid(z[..., D:])
    h = h * cm
    w_sm = jax.nn.softmax(params["conv_w"], -1)
    wfull = jnp.repeat(w_sm, R, axis=0).T                    # (K, D)
    hp = jnp.pad(h, ((0, 0), (1, 1), (0, 0)))
    conv = wfull[0] * hp[:, :S] + wfull[1] * hp[:, 1:S + 1] + wfull[2] * hp[:, 2:S + 2]
    y = conv @ params["w2"] + params["b2"][0]
    x1 = x + y
    h2 = ln(x1, params["n2a"][0], params["n2b"][0])
    f = jnp.maximum(h2 @ params["wf1"] + params["bf1"][0], 0.0)
    f = f @ params["wf2"] + params["bf2"][0]
    return x1 + f


if __name__ == "__main__":
    # lane-dense feature dims (multiples of 128) as recommended for TPU
    B, S, D, HEADS, FF, K = 4, 16, 128, 4, 512, 3

    key = jax.random.PRNGKey(0)
    ks = jax.random.split(key, 16)
    scale = 0.05
    params = {
        "n1a": 1.0 + 0.1 * jax.random.normal(ks[6], (1, D), jnp.float32),
        "n1b": 0.1 * jax.random.normal(ks[7], (1, D), jnp.float32),
        "w1": scale * jax.random.normal(ks[0], (D, 2 * D), jnp.float32),
        "b1": 0.05 * jax.random.normal(ks[8], (1, 2 * D), jnp.float32),
        "conv_w": jax.random.normal(ks[1], (HEADS, K), jnp.float32),
        "w2": scale * jax.random.normal(ks[2], (D, D), jnp.float32),
        "b2": 0.05 * jax.random.normal(ks[9], (1, D), jnp.float32),
        "n2a": 1.0 + 0.1 * jax.random.normal(ks[10], (1, D), jnp.float32),
        "n2b": 0.1 * jax.random.normal(ks[11], (1, D), jnp.float32),
        "wf1": scale * jax.random.normal(ks[3], (D, FF), jnp.float32),
        "bf1": 0.05 * jax.random.normal(ks[12], (1, FF), jnp.float32),
        "wf2": scale * jax.random.normal(ks[4], (FF, D), jnp.float32),
        "bf2": 0.05 * jax.random.normal(ks[13], (1, D), jnp.float32),
    }

    x = jax.random.normal(ks[5], (B, S, D), jnp.float32)
    # mask (B, 1, S): padded positions at the tail of sequences 1 and 3
    mask = jnp.ones((B, 1, S), jnp.int32)
    mask = mask.at[1, 0, 12:].set(0).at[3, 0, 5:].set(0)

    # batch_block=2 -> a 2-step grid (exercises single-buffered invariant weights across steps),
    # ff_chunk=256  -> 2 feed-forward chunks (exercises the chunked FF accumulation loop).
    out = encoder_layer(x, mask, params, batch_block=2, ff_chunk=256)
    out = jax.block_until_ready(out)

    ref = encoder_layer_ref(x, mask, params)
    assert out.shape == (B, S, D)
    assert bool(jnp.all(jnp.isfinite(out)))
    assert bool(jnp.allclose(out, ref, rtol=5e-2, atol=5e-2)), \
        float(jnp.max(jnp.abs(out - ref)))

    print("KERNEL_OK")
</pallas_src>

<mosaic_0001>
module attributes {stable_mosaic.version = 11 : i64} {
  func.func @encoder_layer_kernel(%arg0: i32, %arg1: memref<32x128xf32, #tpu.memory_space<vmem>>, %arg2: memref<32x1xf32, #tpu.memory_space<vmem>>, %arg3: memref<32x1xf32, #tpu.memory_space<vmem>>, %arg4: memref<32x1xf32, #tpu.memory_space<vmem>>, %arg5: memref<1x128xf32, #tpu.memory_space<vmem>>, %arg6: memref<1x128xf32, #tpu.memory_space<vmem>>, %arg7: memref<128x256xbf16, #tpu.memory_space<vmem>>, %arg8: memref<1x256xf32, #tpu.memory_space<vmem>>, %arg9: memref<3x128xf32, #tpu.memory_space<vmem>>, %arg10: memref<128x128xbf16, #tpu.memory_space<vmem>>, %arg11: memref<1x128xf32, #tpu.memory_space<vmem>>, %arg12: memref<1x128xf32, #tpu.memory_space<vmem>>, %arg13: memref<1x128xf32, #tpu.memory_space<vmem>>, %arg14: memref<2x128x256xbf16, #tpu.memory_space<vmem>>, %arg15: memref<2x1x256xf32, #tpu.memory_space<vmem>>, %arg16: memref<2x256x128xbf16, #tpu.memory_space<vmem>>, %arg17: memref<1x128xf32, #tpu.memory_space<vmem>>, %arg18: memref<32x128xf32, #tpu.memory_space<vmem>>) attributes {dimension_semantics = [#tpu.dimension_semantics<parallel>], iteration_bounds = array<i64: 2>, scalar_prefetch = 0 : i64, scratch_operands = 0 : i64, tpu.core_type = #tpu.core_type<tc>, window_params = [{transform_indices = @transform_0, window_bounds = array<i64: 32, 128>}, {transform_indices = @transform_1, window_bounds = array<i64: 32, 1>}, {pipeline_mode = #tpu.pipeline_mode<synchronous>, transform_indices = @transform_2, window_bounds = array<i64: 32, 1>}, {pipeline_mode = #tpu.pipeline_mode<synchronous>, transform_indices = @transform_3, window_bounds = array<i64: 32, 1>}, {pipeline_mode = #tpu.pipeline_mode<synchronous>, transform_indices = @transform_4, window_bounds = array<i64: 1, 128>}, {pipeline_mode = #tpu.pipeline_mode<synchronous>, transform_indices = @transform_5, window_bounds = array<i64: 1, 128>}, {pipeline_mode = #tpu.pipeline_mode<synchronous>, transform_indices = @transform_6, window_bounds = array<i64: 128, 256>}, {pipeline_mode = #tpu.pipeline_mode<synchronous>, transform_indices = @transform_7, window_bounds = array<i64: 1, 256>}, {pipeline_mode = #tpu.pipeline_mode<synchronous>, transform_indices = @transform_8, window_bounds = array<i64: 3, 128>}, {pipeline_mode = #tpu.pipeline_mode<synchronous>, transform_indices = @transform_9, window_bounds = array<i64: 128, 128>}, {pipeline_mode = #tpu.pipeline_mode<synchronous>, transform_indices = @transform_10, window_bounds = array<i64: 1, 128>}, {pipeline_mode = #tpu.pipeline_mode<synchronous>, transform_indices = @transform_11, window_bounds = array<i64: 1, 128>}, {pipeline_mode = #tpu.pipeline_mode<synchronous>, transform_indices = @transform_12, window_bounds = array<i64: 1, 128>}, {pipeline_mode = #tpu.pipeline_mode<synchronous>, transform_indices = @transform_13, window_bounds = array<i64: 2, 128, 256>}, {pipeline_mode = #tpu.pipeline_mode<synchronous>, transform_indices = @transform_14, window_bounds = array<i64: 2, 1, 256>}, {pipeline_mode = #tpu.pipeline_mode<synchronous>, transform_indices = @transform_15, window_bounds = array<i64: 2, 256, 128>}, {pipeline_mode = #tpu.pipeline_mode<synchronous>, transform_indices = @transform_16, window_bounds = array<i64: 1, 128>}, {transform_indices = @transform_17, window_bounds = array<i64: 32, 128>}]} {
    %c0 = arith.constant 0 : index
    %c0_0 = arith.constant 0 : index
    %0 = vector.load %arg1[%c0, %c0_0] : memref<32x128xf32, #tpu.memory_space<vmem>>, vector<32x128xf32>
    %c0_1 = arith.constant 0 : index
    %c0_2 = arith.constant 0 : index
    %1 = vector.load %arg2[%c0_1, %c0_2] : memref<32x1xf32, #tpu.memory_space<vmem>>, vector<32x1xf32>
    %c0_3 = arith.constant 0 : index
    %c0_4 = arith.constant 0 : index
    %2 = vector.load %arg5[%c0_3, %c0_4] : memref<1x128xf32, #tpu.memory_space<vmem>>, vector<1x128xf32>
    %3 = vector.shape_cast %2 : vector<1x128xf32> to vector<128xf32>
    %c0_5 = arith.constant 0 : index
    %c0_6 = arith.constant 0 : index
    %4 = vector.load %arg6[%c0_5, %c0_6] : memref<1x128xf32, #tpu.memory_space<vmem>>, vector<1x128xf32>
    %5 = vector.shape_cast %4 : vector<1x128xf32> to vector<128xf32>
    %cst = arith.constant dense<0.000000e+00> : vector<32xf32>
    %6 = vector.multi_reduction <add>, %0, %cst [1] : vector<32x128xf32> to vector<32xf32>
    %7 = vector.shape_cast %6 : vector<32xf32> to vector<32x1xf32>
    %cst_7 = arith.constant 1.280000e+02 : f32
    %8 = vector.broadcast %cst_7 : f32 to vector<32x1xf32>
    %9 = arith.divf %7, %8 : vector<32x1xf32>
    %10 = vector.broadcast %9 : vector<32x1xf32> to vector<32x128xf32>
    %11 = arith.subf %0, %10 : vector<32x128xf32>
    %12 = arith.mulf %11, %11 : vector<32x128xf32>
    %cst_8 = arith.constant dense<0.000000e+00> : vector<32xf32>
    %13 = vector.multi_reduction <add>, %12, %cst_8 [1] : vector<32x128xf32> to vector<32xf32>
    %14 = vector.shape_cast %13 : vector<32xf32> to vector<32x1xf32>
    %cst_9 = arith.constant 0.00787401571 : f32
    %15 = vector.broadcast %cst_9 : f32 to vector<32x1xf32>
    %16 = arith.mulf %14, %15 : vector<32x1xf32>
    %17 = math.sqrt %16 : vector<32x1xf32>
    %cst_10 = arith.constant 9.99999997E-7 : f32
    %18 = vector.broadcast %cst_10 : f32 to vector<32x1xf32>
    %19 = arith.addf %17, %18 : vector<32x1xf32>
    %20 = tpu.reciprocal %19 {approx = true} : vector<32x1xf32> -> vector<32x1xf32>
    %21 = vector.broadcast %20 : vector<32x1xf32> to vector<32x128xf32>
    %22 = arith.mulf %11, %21 : vector<32x128xf32>
    %23 = vector.shape_cast %3 : vector<128xf32> to vector<1x128xf32>
    %24 = vector.broadcast %23 : vector<1x128xf32> to vector<32x128xf32>
    %25 = arith.mulf %24, %22 : vector<32x128xf32>
    %26 = vector.shape_cast %5 : vector<128xf32> to vector<1x128xf32>
    %27 = vector.broadcast %26 : vector<1x128xf32> to vector<32x128xf32>
    %28 = arith.addf %25, %27 : vector<32x128xf32>
    %29 = arith.truncf %28 : vector<32x128xf32> to vector<32x128xbf16>
    %c0_11 = arith.constant 0 : index
    %c0_12 = arith.constant 0 : index
    %30 = vector.load %arg7[%c0_11, %c0_12] : memref<128x256xbf16, #tpu.memory_space<vmem>>, vector<128x256xbf16>
    %cst_13 = arith.constant dense<0.000000e+00> : vector<32x256xf32>
    %31 = tpu.matmul %29, %30, %cst_13 {dimension_numbers = #tpu.dot_dimension_numbers<[1], [0], [0], [1], [0, 0, 1, 1], [], []>} : vector<32x128xbf16>, vector<128x256xbf16>, vector<32x256xf32> -> vector<32x256xf32>
    %c0_14 = arith.constant 0 : index
    %c0_15 = arith.constant 0 : index
    %32 = vector.load %arg8[%c0_14, %c0_15] : memref<1x256xf32, #tpu.memory_space<vmem>>, vector<1x256xf32>
    %33 = vector.shape_cast %32 : vector<1x256xf32> to vector<256xf32>
    %34 = vector.shape_cast %33 : vector<256xf32> to vector<1x256xf32>
    %35 = vector.broadcast %34 : vector<1x256xf32> to vector<32x256xf32>
    %36 = arith.addf %31, %35 : vector<32x256xf32>
    %37 = vector.extract_strided_slice %36 {offsets = [0, 0], sizes = [32, 128], strides = [1, 1]} : vector<32x256xf32> to vector<32x128xf32>
    %38 = vector.extract_strided_slice %36 {offsets = [0, 128], sizes = [32, 128], strides = [1, 1]} : vector<32x256xf32> to vector<32x128xf32>
    %39 = arith.negf %38 : vector<32x128xf32>
    %40 = math.exp %39 : vector<32x128xf32>
    %cst_16 = arith.constant 1.000000e+00 : f32
    %41 = vector.broadcast %cst_16 : f32 to vector<32x128xf32>
    %42 = arith.addf %41, %40 : vector<32x128xf32>
    %43 = arith.divf %41, %42 : vector<32x128xf32>
    %44 = arith.mulf %37, %43 : vector<32x128xf32>
    %45 = vector.broadcast %1 : vector<32x1xf32> to vector<32x128xf32>
    %46 = arith.mulf %44, %45 : vector<32x128xf32>
    %c1_i32 = arith.constant 1 : i32
    %47 = tpu.dynamic_rotate %46 by %c1_i32 dim 0 : vector<32x128xf32>, i32 -> vector<32x128xf32>
    %c0_17 = arith.constant 0 : index
    %c0_18 = arith.constant 0 : index
    %48 = vector.load %arg3[%c0_17, %c0_18] : memref<32x1xf32, #tpu.memory_space<vmem>>, vector<32x1xf32>
    %49 = vector.broadcast %48 : vector<32x1xf32> to vector<32x128xf32>
    %50 = arith.mulf %47, %49 : vector<32x128xf32>
    %c31_i32 = arith.constant 31 : i32
    %51 = tpu.dynamic_rotate %46 by %c31_i32 dim 0 : vector<32x128xf32>, i32 -> vector<32x128xf32>
    %c0_19 = arith.constant 0 : index
    %c0_20 = arith.constant 0 : index
    %52 = vector.load %arg4[%c0_19, %c0_20] : memref<32x1xf32, #tpu.memory_space<vmem>>, vector<32x1xf32>
    %53 = vector.broadcast %52 : vector<32x1xf32> to vector<32x128xf32>
    %54 = arith.mulf %51, %53 : vector<32x128xf32>
    %c0_21 = arith.constant 0 : index
    %c0_22 = arith.constant 0 : index
    %55 = vector.load %arg9[%c0_21, %c0_22] : memref<3x128xf32, #tpu.memory_space<vmem>>, vector<1x128xf32>
    %56 = vector.shape_cast %55 : vector<1x128xf32> to vector<128xf32>
    %57 = vector.shape_cast %56 : vector<128xf32> to vector<1x128xf32>
    %58 = vector.broadcast %57 : vector<1x128xf32> to vector<32x128xf32>
    %59 = arith.mulf %58, %50 : vector<32x128xf32>
    %c1 = arith.constant 1 : index
    %c0_23 = arith.constant 0 : index
    %60 = vector.load %arg9[%c1, %c0_23] : memref<3x128xf32, #tpu.memory_space<vmem>>, vector<1x128xf32>
    %61 = vector.shape_cast %60 : vector<1x128xf32> to vector<128xf32>
    %62 = vector.shape_cast %61 : vector<128xf32> to vector<1x128xf32>
    %63 = vector.broadcast %62 : vector<1x128xf32> to vector<32x128xf32>
    %64 = arith.mulf %63, %46 : vector<32x128xf32>
    %65 = arith.addf %59, %64 : vector<32x128xf32>
    %c2 = arith.constant 2 : index
    %c0_24 = arith.constant 0 : index
    %66 = vector.load %arg9[%c2, %c0_24] : memref<3x128xf32, #tpu.memory_space<vmem>>, vector<1x128xf32>
    %67 = vector.shape_cast %66 : vector<1x128xf32> to vector<128xf32>
    %68 = vector.shape_cast %67 : vector<128xf32> to vector<1x128xf32>
    %69 = vector.broadcast %68 : vector<1x128xf32> to vector<32x128xf32>
    %70 = arith.mulf %69, %54 : vector<32x128xf32>
    %71 = arith.addf %65, %70 : vector<32x128xf32>
    %72 = arith.truncf %71 : vector<32x128xf32> to vector<32x128xbf16>
    %c0_25 = arith.constant 0 : index
    %c0_26 = arith.constant 0 : index
    %73 = vector.load %arg10[%c0_25, %c0_26] : memref<128x128xbf16, #tpu.memory_space<vmem>>, vector<128x128xbf16>
    %cst_27 = arith.constant dense<0.000000e+00> : vector<32x128xf32>
    %74 = tpu.matmul %72, %73, %cst_27 {dimension_numbers = #tpu.dot_dimension_numbers<[1], [0], [0], [1], [0, 0, 1, 1], [], []>} : vector<32x128xbf16>, vector<128x128xbf16>, vector<32x128xf32> -> vector<32x128xf32>
    %c0_28 = arith.constant 0 : index
    %c0_29 = arith.constant 0 : index
    %75 = vector.load %arg11[%c0_28, %c0_29] : memref<1x128xf32, #tpu.memory_space<vmem>>, vector<1x128xf32>
    %76 = vector.shape_cast %75 : vector<1x128xf32> to vector<128xf32>
    %77 = vector.shape_cast %76 : vector<128xf32> to vector<1x128xf32>
    %78 = vector.broadcast %77 : vector<1x128xf32> to vector<32x128xf32>
    %79 = arith.addf %74, %78 : vector<32x128xf32>
    %80 = arith.addf %0, %79 : vector<32x128xf32>
    %c0_30 = arith.constant 0 : index
    %c0_31 = arith.constant 0 : index
    %81 = vector.load %arg12[%c0_30, %c0_31] : memref<1x128xf32, #tpu.memory_space<vmem>>, vector<1x128xf32>
    %82 = vector.shape_cast %81 : vector<1x128xf32> to vector<128xf32>
    %c0_32 = arith.constant 0 : index
    %c0_33 = arith.constant 0 : index
    %83 = vector.load %arg13[%c0_32, %c0_33] : memref<1x128xf32, #tpu.memory_space<vmem>>, vector<1x128xf32>
    %84 = vector.shape_cast %83 : vector<1x128xf32> to vector<128xf32>
    %cst_34 = arith.constant dense<0.000000e+00> : vector<32xf32>
    %85 = vector.multi_reduction <add>, %80, %cst_34 [1] : vector<32x128xf32> to vector<32xf32>
    %86 = vector.shape_cast %85 : vector<32xf32> to vector<32x1xf32>
    %cst_35 = arith.constant 1.280000e+02 : f32
    %87 = vector.broadcast %cst_35 : f32 to vector<32x1xf32>
    %88 = arith.divf %86, %87 : vector<32x1xf32>
    %89 = vector.broadcast %88 : vector<32x1xf32> to vector<32x128xf32>
    %90 = arith.subf %80, %89 : vector<32x128xf32>
    %91 = arith.mulf %90, %90 : vector<32x128xf32>
    %cst_36 = arith.constant dense<0.000000e+00> : vector<32xf32>
    %92 = vector.multi_reduction <add>, %91, %cst_36 [1] : vector<32x128xf32> to vector<32xf32>
    %93 = vector.shape_cast %92 : vector<32xf32> to vector<32x1xf32>
    %cst_37 = arith.constant 0.00787401571 : f32
    %94 = vector.broadcast %cst_37 : f32 to vector<32x1xf32>
    %95 = arith.mulf %93, %94 : vector<32x1xf32>
    %96 = math.sqrt %95 : vector<32x1xf32>
    %cst_38 = arith.constant 9.99999997E-7 : f32
    %97 = vector.broadcast %cst_38 : f32 to vector<32x1xf32>
    %98 = arith.addf %96, %97 : vector<32x1xf32>
    %99 = tpu.reciprocal %98 {approx = true} : vector<32x1xf32> -> vector<32x1xf32>
    %100 = vector.broadcast %99 : vector<32x1xf32> to vector<32x128xf32>
    %101 = arith.mulf %90, %100 : vector<32x128xf32>
    %102 = vector.shape_cast %82 : vector<128xf32> to vector<1x128xf32>
    %103 = vector.broadcast %102 : vector<1x128xf32> to vector<32x128xf32>
    %104 = arith.mulf %103, %101 : vector<32x128xf32>
    %105 = vector.shape_cast %84 : vector<128xf32> to vector<1x128xf32>
    %106 = vector.broadcast %105 : vector<1x128xf32> to vector<32x128xf32>
    %107 = arith.addf %104, %106 : vector<32x128xf32>
    %108 = arith.truncf %107 : vector<32x128xf32> to vector<32x128xbf16>
    %cst_39 = arith.constant 0.000000e+00 : f32
    %109 = vector.broadcast %cst_39 : f32 to vector<32x128xf32>
    %c0_i32 = arith.constant 0 : i32
    %110 = arith.index_cast %c0_i32 : i32 to index
    %c0_40 = arith.constant 0 : index
    %c0_41 = arith.constant 0 : index
    %111 = vector.load %arg14[%110, %c0_40, %c0_41] : memref<2x128x256xbf16, #tpu.memory_space<vmem>>, vector<1x128x256xbf16>
    %112 = vector.shape_cast %111 : vector<1x128x256xbf16> to vector<128x256xbf16>
    %cst_42 = arith.constant dense<0.000000e+00> : vector<32x256xf32>
    %113 = tpu.matmul %108, %112, %cst_42 {dimension_numbers = #tpu.dot_dimension_numbers<[1], [0], [0], [1], [0, 0, 1, 1], [], []>} : vector<32x128xbf16>, vector<128x256xbf16>, vector<32x256xf32> -> vector<32x256xf32>
    %114 = arith.index_cast %c0_i32 : i32 to index
    %c0_43 = arith.constant 0 : index
    %c0_44 = arith.constant 0 : index
    %115 = vector.load %arg15[%114, %c0_43, %c0_44] : memref<2x1x256xf32, #tpu.memory_space<vmem>>, vector<1x1x256xf32>
    %116 = vector.shape_cast %115 : vector<1x1x256xf32> to vector<1x256xf32>
    %117 = vector.broadcast %116 : vector<1x256xf32> to vector<32x256xf32>
    %118 = arith.addf %113, %117 : vector<32x256xf32>
    %cst_45 = arith.constant 0.000000e+00 : f32
    %119 = vector.broadcast %cst_45 : f32 to vector<32x256xf32>
    %120 = arith.maximumf %118, %119 : vector<32x256xf32>
    %121 = arith.truncf %120 : vector<32x256xf32> to vector<32x256xbf16>
    %122 = arith.index_cast %c0_i32 : i32 to index
    %c0_46 = arith.constant 0 : index
    %c0_47 = arith.constant 0 : index
    %123 = vector.load %arg16[%122, %c0_46, %c0_47] : memref<2x256x128xbf16, #tpu.memory_space<vmem>>, vector<1x256x128xbf16>
    %124 = vector.shape_cast %123 : vector<1x256x128xbf16> to vector<256x128xbf16>
    %cst_48 = arith.constant dense<0.000000e+00> : vector<32x128xf32>
    %125 = tpu.matmul %121, %124, %cst_48 {dimension_numbers = #tpu.dot_dimension_numbers<[1], [0], [0], [1], [0, 0, 1, 1], [], []>} : vector<32x256xbf16>, vector<256x128xbf16>, vector<32x128xf32> -> vector<32x128xf32>
    %126 = arith.addf %109, %125 : vector<32x128xf32>
    %c1_i32_49 = arith.constant 1 : i32
    %127 = arith.index_cast %c1_i32_49 : i32 to index
    %c0_50 = arith.constant 0 : index
    %c0_51 = arith.constant 0 : index
    %128 = vector.load %arg14[%127, %c0_50, %c0_51] : memref<2x128x256xbf16, #tpu.memory_space<vmem>>, vector<1x128x256xbf16>
    %129 = vector.shape_cast %128 : vector<1x128x256xbf16> to vector<128x256xbf16>
    %cst_52 = arith.constant dense<0.000000e+00> : vector<32x256xf32>
    %130 = tpu.matmul %108, %129, %cst_52 {dimension_numbers = #tpu.dot_dimension_numbers<[1], [0], [0], [1], [0, 0, 1, 1], [], []>} : vector<32x128xbf16>, vector<128x256xbf16>, vector<32x256xf32> -> vector<32x256xf32>
    %131 = arith.index_cast %c1_i32_49 : i32 to index
    %c0_53 = arith.constant 0 : index
    %c0_54 = arith.constant 0 : index
    %132 = vector.load %arg15[%131, %c0_53, %c0_54] : memref<2x1x256xf32, #tpu.memory_space<vmem>>, vector<1x1x256xf32>
    %133 = vector.shape_cast %132 : vector<1x1x256xf32> to vector<1x256xf32>
    %134 = vector.broadcast %133 : vector<1x256xf32> to vector<32x256xf32>
    %135 = arith.addf %130, %134 : vector<32x256xf32>
    %cst_55 = arith.constant 0.000000e+00 : f32
    %136 = vector.broadcast %cst_55 : f32 to vector<32x256xf32>
    %137 = arith.maximumf %135, %136 : vector<32x256xf32>
    %138 = arith.truncf %137 : vector<32x256xf32> to vector<32x256xbf16>
    %139 = arith.index_cast %c1_i32_49 : i32 to index
    %c0_56 = arith.constant 0 : index
    %c0_57 = arith.constant 0 : index
    %140 = vector.load %arg16[%139, %c0_56, %c0_57] : memref<2x256x128xbf16, #tpu.memory_space<vmem>>, vector<1x256x128xbf16>
    %141 = vector.shape_cast %140 : vector<1x256x128xbf16> to vector<256x128xbf16>
    %cst_58 = arith.constant dense<0.000000e+00> : vector<32x128xf32>
    %142 = tpu.matmul %138, %141, %cst_58 {dimension_numbers = #tpu.dot_dimension_numbers<[1], [0], [0], [1], [0, 0, 1, 1], [], []>} : vector<32x256xbf16>, vector<256x128xbf16>, vector<32x128xf32> -> vector<32x128xf32>
    %143 = arith.addf %126, %142 : vector<32x128xf32>
    %c2_i32 = arith.constant 2 : i32
    %144 = arith.addf %80, %143 : vector<32x128xf32>
    %c0_59 = arith.constant 0 : index
    %c0_60 = arith.constant 0 : index
    %145 = vector.load %arg17[%c0_59, %c0_60] : memref<1x128xf32, #tpu.memory_space<vmem>>, vector<1x128xf32>
    %146 = vector.shape_cast %145 : vector<1x128xf32> to vector<128xf32>
    %147 = vector.shape_cast %146 : vector<128xf32> to vector<1x128xf32>
    %148 = vector.broadcast %147 : vector<1x128xf32> to vector<32x128xf32>
    %149 = arith.addf %144, %148 : vector<32x128xf32>
    %c0_61 = arith.constant 0 : index
    %c0_62 = arith.constant 0 : index
    %150 = vector.load %arg18[%c0_61, %c0_62] : memref<32x128xf32, #tpu.memory_space<vmem>>, vector<32x128xf32>
    tpu.vector_store %arg18[%c0_61, %c0_62], %149 {strides = array<i32>} : memref<32x128xf32, #tpu.memory_space<vmem>>, vector<32x128xf32>,
    return
  }
  func.func @transform_0(%arg0: i32) -> (i32, i32) {
    %c0_i32 = arith.constant 0 : i32
    %c0_i32_0 = arith.constant 0 : i32
    return %arg0, %c0_i32 : i32, i32
  }
  func.func @transform_1(%arg0: i32) -> (i32, i32) {
    %c0_i32 = arith.constant 0 : i32
    %c0_i32_0 = arith.constant 0 : i32
    return %arg0, %c0_i32 : i32, i32
  }
  func.func @transform_2(%arg0: i32) -> (i32, i32) {
    %c0_i32 = arith.constant 0 : i32
    %c0_i32_0 = arith.constant 0 : i32
    %c0_i32_1 = arith.constant 0 : i32
    return %c0_i32, %c0_i32_0 : i32, i32
  }
  func.func @transform_3(%arg0: i32) -> (i32, i32) {
    %c0_i32 = arith.constant 0 : i32
    %c0_i32_0 = arith.constant 0 : i32
    %c0_i32_1 = arith.constant 0 : i32
    return %c0_i32, %c0_i32_0 : i32, i32
  }
  func.func @transform_4(%arg0: i32) -> (i32, i32) {
    %c0_i32 = arith.constant 0 : i32
    %c0_i32_0 = arith.constant 0 : i32
    %c0_i32_1 = arith.constant 0 : i32
    return %c0_i32, %c0_i32_0 : i32, i32
  }
  func.func @transform_5(%arg0: i32) -> (i32, i32) {
    %c0_i32 = arith.constant 0 : i32
    %c0_i32_0 = arith.constant 0 : i32
    %c0_i32_1 = arith.constant 0 : i32
    return %c0_i32, %c0_i32_0 : i32, i32
  }
  func.func @transform_6(%arg0: i32) -> (i32, i32) {
    %c0_i32 = arith.constant 0 : i32
    %c0_i32_0 = arith.constant 0 : i32
    %c0_i32_1 = arith.constant 0 : i32
    return %c0_i32, %c0_i32_0 : i32, i32
  }
  func.func @transform_7(%arg0: i32) -> (i32, i32) {
    %c0_i32 = arith.constant 0 : i32
    %c0_i32_0 = arith.constant 0 : i32
    %c0_i32_1 = arith.constant 0 : i32
    return %c0_i32, %c0_i32_0 : i32, i32
  }
  func.func @transform_8(%arg0: i32) -> (i32, i32) {
    %c0_i32 = arith.constant 0 : i32
    %c0_i32_0 = arith.constant 0 : i32
    %c0_i32_1 = arith.constant 0 : i32
    return %c0_i32, %c0_i32_0 : i32, i32
  }
  func.func @transform_9(%arg0: i32) -> (i32, i32) {
    %c0_i32 = arith.constant 0 : i32
    %c0_i32_0 = arith.constant 0 : i32
    %c0_i32_1 = arith.constant 0 : i32
    return %c0_i32, %c0_i32_0 : i32, i32
  }
  func.func @transform_10(%arg0: i32) -> (i32, i32) {
    %c0_i32 = arith.constant 0 : i32
    %c0_i32_0 = arith.constant 0 : i32
    %c0_i32_1 = arith.constant 0 : i32
    return %c0_i32, %c0_i32_0 : i32, i32
  }
  func.func @transform_11(%arg0: i32) -> (i32, i32) {
    %c0_i32 = arith.constant 0 : i32
    %c0_i32_0 = arith.constant 0 : i32
    %c0_i32_1 = arith.constant 0 : i32
    return %c0_i32, %c0_i32_0 : i32, i32
  }
  func.func @transform_12(%arg0: i32) -> (i32, i32) {
    %c0_i32 = arith.constant 0 : i32
    %c0_i32_0 = arith.constant 0 : i32
    %c0_i32_1 = arith.constant 0 : i32
    return %c0_i32, %c0_i32_0 : i32, i32
  }
  func.func @transform_13(%arg0: i32) -> (i32, i32, i32) {
    %c0_i32 = arith.constant 0 : i32
    %c0_i32_0 = arith.constant 0 : i32
    %c0_i32_1 = arith.constant 0 : i32
    %c0_i32_2 = arith.constant 0 : i32
    return %c0_i32, %c0_i32_0, %c0_i32_1 : i32, i32, i32
  }
  func.func @transform_14(%arg0: i32) -> (i32, i32, i32) {
    %c0_i32 = arith.constant 0 : i32
    %c0_i32_0 = arith.constant 0 : i32
    %c0_i32_1 = arith.constant 0 : i32
    %c0_i32_2 = arith.constant 0 : i32
    return %c0_i32, %c0_i32_0, %c0_i32_1 : i32, i32, i32
  }
  func.func @transform_15(%arg0: i32) -> (i32, i32, i32) {
    %c0_i32 = arith.constant 0 : i32
    %c0_i32_0 = arith.constant 0 : i32
    %c0_i32_1 = arith.constant 0 : i32
    %c0_i32_2 = arith.constant 0 : i32
    return %c0_i32, %c0_i32_0, %c0_i32_1 : i32, i32, i32
  }
  func.func @transform_16(%arg0: i32) -> (i32, i32) {
    %c0_i32 = arith.constant 0 : i32
    %c0_i32_0 = arith.constant 0 : i32
    %c0_i32_1 = arith.constant 0 : i32
    return %c0_i32, %c0_i32_0 : i32, i32
  }
  func.func @transform_17(%arg0: i32) -> (i32, i32) {
    %c0_i32 = arith.constant 0 : i32
    %c0_i32_0 = arith.constant 0 : i32
    return %arg0, %c0_i32 : i32, i32
  }
}

module attributes {stable_mosaic.version = 11 : i64} {
  func.func @encoder_layer_kernel(%arg0: i32, %arg1: memref<32x128xf32, #tpu.memory_space<vmem>>, %arg2: memref<32x1xf32, #tpu.memory_space<vmem>>, %arg3: memref<32x1xf32, #tpu.memory_space<vmem>>, %arg4: memref<32x1xf32, #tpu.memory_space<vmem>>, %arg5: memref<1x128xf32, #tpu.memory_space<vmem>>, %arg6: memref<1x128xf32, #tpu.memory_space<vmem>>, %arg7: memref<128x256xbf16, #tpu.memory_space<vmem>>, %arg8: memref<1x256xf32, #tpu.memory_space<vmem>>, %arg9: memref<3x128xf32, #tpu.memory_space<vmem>>, %arg10: memref<128x128xbf16, #tpu.memory_space<vmem>>, %arg11: memref<1x128xf32, #tpu.memory_space<vmem>>, %arg12: memref<1x128xf32, #tpu.memory_space<vmem>>, %arg13: memref<1x128xf32, #tpu.memory_space<vmem>>, %arg14: memref<2x128x256xbf16, #tpu.memory_space<vmem>>, %arg15: memref<2x1x256xf32, #tpu.memory_space<vmem>>, %arg16: memref<2x256x128xbf16, #tpu.memory_space<vmem>>, %arg17: memref<1x128xf32, #tpu.memory_space<vmem>>, %arg18: memref<32x128xf32, #tpu.memory_space<vmem>>) attributes {dimension_semantics = [#tpu.dimension_semantics<parallel>], iteration_bounds = array<i64: 2>, scalar_prefetch = 0 : i64, scratch_operands = 0 : i64, tpu.core_type = #tpu.core_type<tc>, window_params = [{transform_indices = @transform_0, window_bounds = array<i64: 32, 128>}, {transform_indices = @transform_1, window_bounds = array<i64: 32, 1>}, {pipeline_mode = #tpu.pipeline_mode<synchronous>, transform_indices = @transform_2, window_bounds = array<i64: 32, 1>}, {pipeline_mode = #tpu.pipeline_mode<synchronous>, transform_indices = @transform_3, window_bounds = array<i64: 32, 1>}, {pipeline_mode = #tpu.pipeline_mode<synchronous>, transform_indices = @transform_4, window_bounds = array<i64: 1, 128>}, {pipeline_mode = #tpu.pipeline_mode<synchronous>, transform_indices = @transform_5, window_bounds = array<i64: 1, 128>}, {pipeline_mode = #tpu.pipeline_mode<synchronous>, transform_indices = @transform_6, window_bounds = array<i64: 128, 256>}, {pipeline_mode = #tpu.pipeline_mode<synchronous>, transform_indices = @transform_7, window_bounds = array<i64: 1, 256>}, {pipeline_mode = #tpu.pipeline_mode<synchronous>, transform_indices = @transform_8, window_bounds = array<i64: 3, 128>}, {pipeline_mode = #tpu.pipeline_mode<synchronous>, transform_indices = @transform_9, window_bounds = array<i64: 128, 128>}, {pipeline_mode = #tpu.pipeline_mode<synchronous>, transform_indices = @transform_10, window_bounds = array<i64: 1, 128>}, {pipeline_mode = #tpu.pipeline_mode<synchronous>, transform_indices = @transform_11, window_bounds = array<i64: 1, 128>}, {pipeline_mode = #tpu.pipeline_mode<synchronous>, transform_indices = @transform_12, window_bounds = array<i64: 1, 128>}, {pipeline_mode = #tpu.pipeline_mode<synchronous>, transform_indices = @transform_13, window_bounds = array<i64: 2, 128, 256>}, {pipeline_mode = #tpu.pipeline_mode<synchronous>, transform_indices = @transform_14, window_bounds = array<i64: 2, 1, 256>}, {pipeline_mode = #tpu.pipeline_mode<synchronous>, transform_indices = @transform_15, window_bounds = array<i64: 2, 256, 128>}, {pipeline_mode = #tpu.pipeline_mode<synchronous>, transform_indices = @transform_16, window_bounds = array<i64: 1, 128>}, {transform_indices = @transform_17, window_bounds = array<i64: 32, 128>}]} {
    %c0 = arith.constant 0 : index
    %c0_0 = arith.constant 0 : index
    %0 = vector.load %arg1[%c0, %c0_0] : memref<32x128xf32, #tpu.memory_space<vmem>>, vector<32x128xf32>
    %c0_1 = arith.constant 0 : index
    %c0_2 = arith.constant 0 : index
    %1 = vector.load %arg2[%c0_1, %c0_2] : memref<32x1xf32, #tpu.memory_space<vmem>>, vector<32x1xf32>
    %c0_3 = arith.constant 0 : index
    %c0_4 = arith.constant 0 : index
    %2 = vector.load %arg5[%c0_3, %c0_4] : memref<1x128xf32, #tpu.memory_space<vmem>>, vector<1x128xf32>
    %3 = vector.shape_cast %2 : vector<1x128xf32> to vector<128xf32>
    %c0_5 = arith.constant 0 : index
    %c0_6 = arith.constant 0 : index
    %4 = vector.load %arg6[%c0_5, %c0_6] : memref<1x128xf32, #tpu.memory_space<vmem>>, vector<1x128xf32>
    %5 = vector.shape_cast %4 : vector<1x128xf32> to vector<128xf32>
    %cst = arith.constant dense<0.000000e+00> : vector<32xf32>
    %6 = vector.multi_reduction <add>, %0, %cst [1] : vector<32x128xf32> to vector<32xf32>
    %7 = vector.shape_cast %6 : vector<32xf32> to vector<32x1xf32>
    %cst_7 = arith.constant 1.280000e+02 : f32
    %8 = vector.broadcast %cst_7 : f32 to vector<32x1xf32>
    %9 = arith.divf %7, %8 : vector<32x1xf32>
    %10 = vector.broadcast %9 : vector<32x1xf32> to vector<32x128xf32>
    %11 = arith.subf %0, %10 : vector<32x128xf32>
    %12 = arith.mulf %11, %11 : vector<32x128xf32>
    %cst_8 = arith.constant dense<0.000000e+00> : vector<32xf32>
    %13 = vector.multi_reduction <add>, %12, %cst_8 [1] : vector<32x128xf32> to vector<32xf32>
    %14 = vector.shape_cast %13 : vector<32xf32> to vector<32x1xf32>
    %cst_9 = arith.constant 0.00787401571 : f32
    %15 = vector.broadcast %cst_9 : f32 to vector<32x1xf32>
    %16 = arith.mulf %14, %15 : vector<32x1xf32>
    %17 = math.sqrt %16 : vector<32x1xf32>
    %cst_10 = arith.constant 9.99999997E-7 : f32
    %18 = vector.broadcast %cst_10 : f32 to vector<32x1xf32>
    %19 = arith.addf %17, %18 : vector<32x1xf32>
    %20 = tpu.reciprocal %19 {approx = true} : vector<32x1xf32> -> vector<32x1xf32>
    %21 = vector.broadcast %20 : vector<32x1xf32> to vector<32x128xf32>
    %22 = arith.mulf %11, %21 : vector<32x128xf32>
    %23 = vector.shape_cast %3 : vector<128xf32> to vector<1x128xf32>
    %24 = vector.broadcast %23 : vector<1x128xf32> to vector<32x128xf32>
    %25 = arith.mulf %24, %22 : vector<32x128xf32>
    %26 = vector.shape_cast %5 : vector<128xf32> to vector<1x128xf32>
    %27 = vector.broadcast %26 : vector<1x128xf32> to vector<32x128xf32>
    %28 = arith.addf %25, %27 : vector<32x128xf32>
    %29 = arith.truncf %28 : vector<32x128xf32> to vector<32x128xbf16>
    %c0_11 = arith.constant 0 : index
    %c0_12 = arith.constant 0 : index
    %30 = vector.load %arg7[%c0_11, %c0_12] : memref<128x256xbf16, #tpu.memory_space<vmem>>, vector<128x256xbf16>
    %cst_13 = arith.constant dense<0.000000e+00> : vector<32x256xf32>
    %31 = tpu.matmul %29, %30, %cst_13 {dimension_numbers = #tpu.dot_dimension_numbers<[1], [0], [0], [1], [0, 0, 1, 1], [], []>} : vector<32x128xbf16>, vector<128x256xbf16>, vector<32x256xf32> -> vector<32x256xf32>
    %c0_14 = arith.constant 0 : index
    %c0_15 = arith.constant 0 : index
    %32 = vector.load %arg8[%c0_14, %c0_15] : memref<1x256xf32, #tpu.memory_space<vmem>>, vector<1x256xf32>
    %33 = vector.shape_cast %32 : vector<1x256xf32> to vector<256xf32>
    %34 = vector.shape_cast %33 : vector<256xf32> to vector<1x256xf32>
    %35 = vector.broadcast %34 : vector<1x256xf32> to vector<32x256xf32>
    %36 = arith.addf %31, %35 : vector<32x256xf32>
    %37 = vector.extract_strided_slice %36 {offsets = [0, 0], sizes = [32, 128], strides = [1, 1]} : vector<32x256xf32> to vector<32x128xf32>
    %38 = vector.extract_strided_slice %36 {offsets = [0, 128], sizes = [32, 128], strides = [1, 1]} : vector<32x256xf32> to vector<32x128xf32>
    %39 = arith.negf %38 : vector<32x128xf32>
    %40 = math.exp %39 : vector<32x128xf32>
    %cst_16 = arith.constant 1.000000e+00 : f32
    %41 = vector.broadcast %cst_16 : f32 to vector<32x128xf32>
    %42 = arith.addf %41, %40 : vector<32x128xf32>
    %43 = arith.divf %41, %42 : vector<32x128xf32>
    %44 = arith.mulf %37, %43 : vector<32x128xf32>
    %45 = vector.broadcast %1 : vector<32x1xf32> to vector<32x128xf32>
    %46 = arith.mulf %44, %45 : vector<32x128xf32>
    %c1_i32 = arith.constant 1 : i32
    %47 = tpu.dynamic_rotate %46 by %c1_i32 dim 0 : vector<32x128xf32>, i32 -> vector<32x128xf32>
    %c0_17 = arith.constant 0 : index
    %c0_18 = arith.constant 0 : index
    %48 = vector.load %arg3[%c0_17, %c0_18] : memref<32x1xf32, #tpu.memory_space<vmem>>, vector<32x1xf32>
    %49 = vector.broadcast %48 : vector<32x1xf32> to vector<32x128xf32>
    %50 = arith.mulf %47, %49 : vector<32x128xf32>
    %c31_i32 = arith.constant 31 : i32
    %51 = tpu.dynamic_rotate %46 by %c31_i32 dim 0 : vector<32x128xf32>, i32 -> vector<32x128xf32>
    %c0_19 = arith.constant 0 : index
    %c0_20 = arith.constant 0 : index
    %52 = vector.load %arg4[%c0_19, %c0_20] : memref<32x1xf32, #tpu.memory_space<vmem>>, vector<32x1xf32>
    %53 = vector.broadcast %52 : vector<32x1xf32> to vector<32x128xf32>
    %54 = arith.mulf %51, %53 : vector<32x128xf32>
    %c0_21 = arith.constant 0 : index
    %c0_22 = arith.constant 0 : index
    %55 = vector.load %arg9[%c0_21, %c0_22] : memref<3x128xf32, #tpu.memory_space<vmem>>, vector<1x128xf32>
    %56 = vector.shape_cast %55 : vector<1x128xf32> to vector<128xf32>
    %57 = vector.shape_cast %56 : vector<128xf32> to vector<1x128xf32>
    %58 = vector.broadcast %57 : vector<1x128xf32> to vector<32x128xf32>
    %59 = arith.mulf %58, %50 : vector<32x128xf32>
    %c1 = arith.constant 1 : index
    %c0_23 = arith.constant 0 : index
    %60 = vector.load %arg9[%c1, %c0_23] : memref<3x128xf32, #tpu.memory_space<vmem>>, vector<1x128xf32>
    %61 = vector.shape_cast %60 : vector<1x128xf32> to vector<128xf32>
    %62 = vector.shape_cast %61 : vector<128xf32> to vector<1x128xf32>
    %63 = vector.broadcast %62 : vector<1x128xf32> to vector<32x128xf32>
    %64 = arith.mulf %63, %46 : vector<32x128xf32>
    %65 = arith.addf %59, %64 : vector<32x128xf32>
    %c2 = arith.constant 2 : index
    %c0_24 = arith.constant 0 : index
    %66 = vector.load %arg9[%c2, %c0_24] : memref<3x128xf32, #tpu.memory_space<vmem>>, vector<1x128xf32>
    %67 = vector.shape_cast %66 : vector<1x128xf32> to vector<128xf32>
    %68 = vector.shape_cast %67 : vector<128xf32> to vector<1x128xf32>
    %69 = vector.broadcast %68 : vector<1x128xf32> to vector<32x128xf32>
    %70 = arith.mulf %69, %54 : vector<32x128xf32>
    %71 = arith.addf %65, %70 : vector<32x128xf32>
    %72 = arith.truncf %71 : vector<32x128xf32> to vector<32x128xbf16>
    %c0_25 = arith.constant 0 : index
    %c0_26 = arith.constant 0 : index
    %73 = vector.load %arg10[%c0_25, %c0_26] : memref<128x128xbf16, #tpu.memory_space<vmem>>, vector<128x128xbf16>
    %cst_27 = arith.constant dense<0.000000e+00> : vector<32x128xf32>
    %74 = tpu.matmul %72, %73, %cst_27 {dimension_numbers = #tpu.dot_dimension_numbers<[1], [0], [0], [1], [0, 0, 1, 1], [], []>} : vector<32x128xbf16>, vector<128x128xbf16>, vector<32x128xf32> -> vector<32x128xf32>
    %c0_28 = arith.constant 0 : index
    %c0_29 = arith.constant 0 : index
    %75 = vector.load %arg11[%c0_28, %c0_29] : memref<1x128xf32, #tpu.memory_space<vmem>>, vector<1x128xf32>
    %76 = vector.shape_cast %75 : vector<1x128xf32> to vector<128xf32>
    %77 = vector.shape_cast %76 : vector<128xf32> to vector<1x128xf32>
    %78 = vector.broadcast %77 : vector<1x128xf32> to vector<32x128xf32>
    %79 = arith.addf %74, %78 : vector<32x128xf32>
    %80 = arith.addf %0, %79 : vector<32x128xf32>
    %c0_30 = arith.constant 0 : index
    %c0_31 = arith.constant 0 : index
    %81 = vector.load %arg12[%c0_30, %c0_31] : memref<1x128xf32, #tpu.memory_space<vmem>>, vector<1x128xf32>
    %82 = vector.shape_cast %81 : vector<1x128xf32> to vector<128xf32>
    %c0_32 = arith.constant 0 : index
    %c0_33 = arith.constant 0 : index
    %83 = vector.load %arg13[%c0_32, %c0_33] : memref<1x128xf32, #tpu.memory_space<vmem>>, vector<1x128xf32>
    %84 = vector.shape_cast %83 : vector<1x128xf32> to vector<128xf32>
    %cst_34 = arith.constant dense<0.000000e+00> : vector<32xf32>
    %85 = vector.multi_reduction <add>, %80, %cst_34 [1] : vector<32x128xf32> to vector<32xf32>
    %86 = vector.shape_cast %85 : vector<32xf32> to vector<32x1xf32>
    %cst_35 = arith.constant 1.280000e+02 : f32
    %87 = vector.broadcast %cst_35 : f32 to vector<32x1xf32>
    %88 = arith.divf %86, %87 : vector<32x1xf32>
    %89 = vector.broadcast %88 : vector<32x1xf32> to vector<32x128xf32>
    %90 = arith.subf %80, %89 : vector<32x128xf32>
    %91 = arith.mulf %90, %90 : vector<32x128xf32>
    %cst_36 = arith.constant dense<0.000000e+00> : vector<32xf32>
    %92 = vector.multi_reduction <add>, %91, %cst_36 [1] : vector<32x128xf32> to vector<32xf32>
    %93 = vector.shape_cast %92 : vector<32xf32> to vector<32x1xf32>
    %cst_37 = arith.constant 0.00787401571 : f32
    %94 = vector.broadcast %cst_37 : f32 to vector<32x1xf32>
    %95 = arith.mulf %93, %94 : vector<32x1xf32>
    %96 = math.sqrt %95 : vector<32x1xf32>
    %cst_38 = arith.constant 9.99999997E-7 : f32
    %97 = vector.broadcast %cst_38 : f32 to vector<32x1xf32>
    %98 = arith.addf %96, %97 : vector<32x1xf32>
    %99 = tpu.reciprocal %98 {approx = true} : vector<32x1xf32> -> vector<32x1xf32>
    %100 = vector.broadcast %99 : vector<32x1xf32> to vector<32x128xf32>
    %101 = arith.mulf %90, %100 : vector<32x128xf32>
    %102 = vector.shape_cast %82 : vector<128xf32> to vector<1x128xf32>
    %103 = vector.broadcast %102 : vector<1x128xf32> to vector<32x128xf32>
    %104 = arith.mulf %103, %101 : vector<32x128xf32>
    %105 = vector.shape_cast %84 : vector<128xf32> to vector<1x128xf32>
    %106 = vector.broadcast %105 : vector<1x128xf32> to vector<32x128xf32>
    %107 = arith.addf %104, %106 : vector<32x128xf32>
    %108 = arith.truncf %107 : vector<32x128xf32> to vector<32x128xbf16>
    %cst_39 = arith.constant 0.000000e+00 : f32
    %109 = vector.broadcast %cst_39 : f32 to vector<32x128xf32>
    %c0_i32 = arith.constant 0 : i32
    %110 = arith.index_cast %c0_i32 : i32 to index
    %c0_40 = arith.constant 0 : index
    %c0_41 = arith.constant 0 : index
    %111 = vector.load %arg14[%110, %c0_40, %c0_41] : memref<2x128x256xbf16, #tpu.memory_space<vmem>>, vector<1x128x256xbf16>
    %112 = vector.shape_cast %111 : vector<1x128x256xbf16> to vector<128x256xbf16>
    %cst_42 = arith.constant dense<0.000000e+00> : vector<32x256xf32>
    %113 = tpu.matmul %108, %112, %cst_42 {dimension_numbers = #tpu.dot_dimension_numbers<[1], [0], [0], [1], [0, 0, 1, 1], [], []>} : vector<32x128xbf16>, vector<128x256xbf16>, vector<32x256xf32> -> vector<32x256xf32>
    %114 = arith.index_cast %c0_i32 : i32 to index
    %c0_43 = arith.constant 0 : index
    %c0_44 = arith.constant 0 : index
    %115 = vector.load %arg15[%114, %c0_43, %c0_44] : memref<2x1x256xf32, #tpu.memory_space<vmem>>, vector<1x1x256xf32>
    %116 = vector.shape_cast %115 : vector<1x1x256xf32> to vector<1x256xf32>
    %117 = vector.broadcast %116 : vector<1x256xf32> to vector<32x256xf32>
    %118 = arith.addf %113, %117 : vector<32x256xf32>
    %cst_45 = arith.constant 0.000000e+00 : f32
    %119 = vector.broadcast %cst_45 : f32 to vector<32x256xf32>
    %120 = arith.maximumf %118, %119 : vector<32x256xf32>
    %121 = arith.truncf %120 : vector<32x256xf32> to vector<32x256xbf16>
    %122 = arith.index_cast %c0_i32 : i32 to index
    %c0_46 = arith.constant 0 : index
    %c0_47 = arith.constant 0 : index
    %123 = vector.load %arg16[%122, %c0_46, %c0_47] : memref<2x256x128xbf16, #tpu.memory_space<vmem>>, vector<1x256x128xbf16>
    %124 = vector.shape_cast %123 : vector<1x256x128xbf16> to vector<256x128xbf16>
    %cst_48 = arith.constant dense<0.000000e+00> : vector<32x128xf32>
    %125 = tpu.matmul %121, %124, %cst_48 {dimension_numbers = #tpu.dot_dimension_numbers<[1], [0], [0], [1], [0, 0, 1, 1], [], []>} : vector<32x256xbf16>, vector<256x128xbf16>, vector<32x128xf32> -> vector<32x128xf32>
    %126 = arith.addf %109, %125 : vector<32x128xf32>
    %c1_i32_49 = arith.constant 1 : i32
    %127 = arith.index_cast %c1_i32_49 : i32 to index
    %c0_50 = arith.constant 0 : index
    %c0_51 = arith.constant 0 : index
    %128 = vector.load %arg14[%127, %c0_50, %c0_51] : memref<2x128x256xbf16, #tpu.memory_space<vmem>>, vector<1x128x256xbf16>
    %129 = vector.shape_cast %128 : vector<1x128x256xbf16> to vector<128x256xbf16>
    %cst_52 = arith.constant dense<0.000000e+00> : vector<32x256xf32>
    %130 = tpu.matmul %108, %129, %cst_52 {dimension_numbers = #tpu.dot_dimension_numbers<[1], [0], [0], [1], [0, 0, 1, 1], [], []>} : vector<32x128xbf16>, vector<128x256xbf16>, vector<32x256xf32> -> vector<32x256xf32>
    %131 = arith.index_cast %c1_i32_49 : i32 to index
    %c0_53 = arith.constant 0 : index
    %c0_54 = arith.constant 0 : index
    %132 = vector.load %arg15[%131, %c0_53, %c0_54] : memref<2x1x256xf32, #tpu.memory_space<vmem>>, vector<1x1x256xf32>
    %133 = vector.shape_cast %132 : vector<1x1x256xf32> to vector<1x256xf32>
    %134 = vector.broadcast %133 : vector<1x256xf32> to vector<32x256xf32>
    %135 = arith.addf %130, %134 : vector<32x256xf32>
    %cst_55 = arith.constant 0.000000e+00 : f32
    %136 = vector.broadcast %cst_55 : f32 to vector<32x256xf32>
    %137 = arith.maximumf %135, %136 : vector<32x256xf32>
    %138 = arith.truncf %137 : vector<32x256xf32> to vector<32x256xbf16>
    %139 = arith.index_cast %c1_i32_49 : i32 to index
    %c0_56 = arith.constant 0 : index
    %c0_57 = arith.constant 0 : index
    %140 = vector.load %arg16[%139, %c0_56, %c0_57] : memref<2x256x128xbf16, #tpu.memory_space<vmem>>, vector<1x256x128xbf16>
    %141 = vector.shape_cast %140 : vector<1x256x128xbf16> to vector<256x128xbf16>
    %cst_58 = arith.constant dense<0.000000e+00> : vector<32x128xf32>
    %142 = tpu.matmul %138, %141, %cst_58 {dimension_numbers = #tpu.dot_dimension_numbers<[1], [0], [0], [1], [0, 0, 1, 1], [], []>} : vector<32x256xbf16>, vector<256x128xbf16>, vector<32x128xf32> -> vector<32x128xf32>
    %143 = arith.addf %126, %142 : vector<32x128xf32>
    %c2_i32 = arith.constant 2 : i32
    %144 = arith.addf %80, %143 : vector<32x128xf32>
    %c0_59 = arith.constant 0 : index
    %c0_60 = arith.constant 0 : index
    %145 = vector.load %arg17[%c0_59, %c0_60] : memref<1x128xf32, #tpu.memory_space<vmem>>, vector<1x128xf32>
    %146 = vector.shape_cast %145 : vector<1x128xf32> to vector<128xf32>
    %147 = vector.shape_cast %146 : vector<128xf32> to vector<1x128xf32>
    %148 = vector.broadcast %147 : vector<1x128xf32> to vector<32x128xf32>
    %149 = arith.addf %144, %148 : vector<32x128xf32>
    %c0_61 = arith.constant 0 : index
    %c0_62 = arith.constant 0 : index
    %150 = vector.load %arg18[%c0_61, %c0_62] : memref<32x128xf32, #tpu.memory_space<vmem>>, vector<32x128xf32>
    tpu.vector_store %arg18[%c0_61, %c0_62], %149 {strides = array<i32>} : memref<32x128xf32, #tpu.memory_space<vmem>>, vector<32x128xf32>,
    return
  }
  func.func @transform_0(%arg0: i32) -> (i32, i32) {
    %c0_i32 = arith.constant 0 : i32
    %c0_i32_0 = arith.constant 0 : i32
    return %arg0, %c0_i32 : i32, i32
  }
  func.func @transform_1(%arg0: i32) -> (i32, i32) {
    %c0_i32 = arith.constant 0 : i32
    %c0_i32_0 = arith.constant 0 : i32
    return %arg0, %c0_i32 : i32, i32
  }
  func.func @transform_2(%arg0: i32) -> (i32, i32) {
    %c0_i32 = arith.constant 0 : i32
    %c0_i32_0 = arith.constant 0 : i32
    %c0_i32_1 = arith.constant 0 : i32
    return %c0_i32, %c0_i32_0 : i32, i32
  }
  func.func @transform_3(%arg0: i32) -> (i32, i32) {
    %c0_i32 = arith.constant 0 : i32
    %c0_i32_0 = arith.constant 0 : i32
    %c0_i32_1 = arith.constant 0 : i32
    return %c0_i32, %c0_i32_0 : i32, i32
  }
  func.func @transform_4(%arg0: i32) -> (i32, i32) {
    %c0_i32 = arith.constant 0 : i32
    %c0_i32_0 = arith.constant 0 : i32
    %c0_i32_1 = arith.constant 0 : i32
    return %c0_i32, %c0_i32_0 : i32, i32
  }
  func.func @transform_5(%arg0: i32) -> (i32, i32) {
    %c0_i32 = arith.constant 0 : i32
    %c0_i32_0 = arith.constant 0 : i32
    %c0_i32_1 = arith.constant 0 : i32
    return %c0_i32, %c0_i32_0 : i32, i32
  }
  func.func @transform_6(%arg0: i32) -> (i32, i32) {
    %c0_i32 = arith.constant 0 : i32
    %c0_i32_0 = arith.constant 0 : i32
    %c0_i32_1 = arith.constant 0 : i32
    return %c0_i32, %c0_i32_0 : i32, i32
  }
  func.func @transform_7(%arg0: i32) -> (i32, i32) {
    %c0_i32 = arith.constant 0 : i32
    %c0_i32_0 = arith.constant 0 : i32
    %c0_i32_1 = arith.constant 0 : i32
    return %c0_i32, %c0_i32_0 : i32, i32
  }
  func.func @transform_8(%arg0: i32) -> (i32, i32) {
    %c0_i32 = arith.constant 0 : i32
    %c0_i32_0 = arith.constant 0 : i32
    %c0_i32_1 = arith.constant 0 : i32
    return %c0_i32, %c0_i32_0 : i32, i32
  }
  func.func @transform_9(%arg0: i32) -> (i32, i32) {
    %c0_i32 = arith.constant 0 : i32
    %c0_i32_0 = arith.constant 0 : i32
    %c0_i32_1 = arith.constant 0 : i32
    return %c0_i32, %c0_i32_0 : i32, i32
  }
  func.func @transform_10(%arg0: i32) -> (i32, i32) {
    %c0_i32 = arith.constant 0 : i32
    %c0_i32_0 = arith.constant 0 : i32
    %c0_i32_1 = arith.constant 0 : i32
    return %c0_i32, %c0_i32_0 : i32, i32
  }
  func.func @transform_11(%arg0: i32) -> (i32, i32) {
    %c0_i32 = arith.constant 0 : i32
    %c0_i32_0 = arith.constant 0 : i32
    %c0_i32_1 = arith.constant 0 : i32
    return %c0_i32, %c0_i32_0 : i32, i32
  }
  func.func @transform_12(%arg0: i32) -> (i32, i32) {
    %c0_i32 = arith.constant 0 : i32
    %c0_i32_0 = arith.constant 0 : i32
    %c0_i32_1 = arith.constant 0 : i32
    return %c0_i32, %c0_i32_0 : i32, i32
  }
  func.func @transform_13(%arg0: i32) -> (i32, i32, i32) {
    %c0_i32 = arith.constant 0 : i32
    %c0_i32_0 = arith.constant 0 : i32
    %c0_i32_1 = arith.constant 0 : i32
    %c0_i32_2 = arith.constant 0 : i32
    return %c0_i32, %c0_i32_0, %c0_i32_1 : i32, i32, i32
  }
  func.func @transform_14(%arg0: i32) -> (i32, i32, i32) {
    %c0_i32 = arith.constant 0 : i32
    %c0_i32_0 = arith.constant 0 : i32
    %c0_i32_1 = arith.constant 0 : i32
    %c0_i32_2 = arith.constant 0 : i32
    return %c0_i32, %c0_i32_0, %c0_i32_1 : i32, i32, i32
  }
  func.func @transform_15(%arg0: i32) -> (i32, i32, i32) {
    %c0_i32 = arith.constant 0 : i32
    %c0_i32_0 = arith.constant 0 : i32
    %c0_i32_1 = arith.constant 0 : i32
    %c0_i32_2 = arith.constant 0 : i32
    return %c0_i32, %c0_i32_0, %c0_i32_1 : i32, i32, i32
  }
  func.func @transform_16(%arg0: i32) -> (i32, i32) {
    %c0_i32 = arith.constant 0 : i32
    %c0_i32_0 = arith.constant 0 : i32
    %c0_i32_1 = arith.constant 0 : i32
    return %c0_i32, %c0_i32_0 : i32, i32
  }
  func.func @transform_17(%arg0: i32) -> (i32, i32) {
    %c0_i32 = arith.constant 0 : i32
    %c0_i32_0 = arith.constant 0 : i32
    return %arg0, %c0_i32 : i32, i32
  }
}

</mosaic_0001>

<llo_original>
// kernel: tpu_custom_call.1
$region0: #{tpu_custom_call.1}
  #allocation0 [shape = 'u32[]', space=smem, size = 0x4, offset = 0x4, fixed_abs, tag = 'smem constant byte address 0x4 - core index']
  #allocation1 [shape = 'u32[144,128]{1,0:T(1,128)}', space=vmem, size = 0x12000, scoped, tag = 'internal scratch']
  %s0 = inlined_call_operand.hbm [shape: f32[64,128], index: 0, kind: input, shape index: {}]
  %s1 = inlined_call_operand.vmem [shape: f32[64,1], index: 1, kind: input, shape index: {}]
  %s2 = inlined_call_operand.vmem [shape: f32[32,1], index: 2, kind: input, shape index: {}]
  %s3 = inlined_call_operand.vmem [shape: f32[32,1], index: 3, kind: input, shape index: {}]
  %s4 = inlined_call_operand.vmem [shape: f32[1,128], index: 4, kind: input, shape index: {}]
  %s5 = inlined_call_operand.vmem [shape: f32[1,128], index: 5, kind: input, shape index: {}]
  %s6 = inlined_call_operand.vmem [shape: bf16[128,256], index: 6, kind: input, shape index: {}]
  %s7 = inlined_call_operand.vmem [shape: f32[1,256], index: 7, kind: input, shape index: {}]
  %s8 = inlined_call_operand.vmem [shape: f32[3,128], index: 8, kind: input, shape index: {}]
  %s9 = inlined_call_operand.hbm [shape: bf16[128,128], index: 9, kind: input, shape index: {}]
  %s10 = inlined_call_operand.vmem [shape: f32[1,128], index: 10, kind: input, shape index: {}]
  %s11 = inlined_call_operand.vmem [shape: f32[1,128], index: 11, kind: input, shape index: {}]
  %s12 = inlined_call_operand.vmem [shape: f32[1,128], index: 12, kind: input, shape index: {}]
  %s13 = inlined_call_operand.hbm [shape: bf16[2,128,256], index: 13, kind: input, shape index: {}]
  %s14 = inlined_call_operand.vmem [shape: f32[2,1,256], index: 14, kind: input, shape index: {}]
  %s15 = inlined_call_operand.hbm [shape: bf16[2,256,128], index: 15, kind: input, shape index: {}]
  %s16 = inlined_call_operand.vmem [shape: f32[1,128], index: 16, kind: input, shape index: {}]
  %s17 = inlined_call_operand.hbm [shape: f32[64,128], index: 17, kind: output, shape index: {}]
  %s18 = sld [smem:[#allocation0]]
  $region117: #{tpu_custom_call.1} parent=0
    _
  %s20 = ssub.s32 1, %s18
  %s21 = scalar_select 0, %s20, %s18
  $region1: #{tpu_custom_call.1} parent=0
    #allocation2 [shape = 'u8[32768]{0}', space=vmem, size = 0x8000, scoped, tag = 'input window, operand 0']
    #allocation3 [shape = 's32[2]{0}', space=sflag, size = 0x8, scoped, tag = 'scoped memory for tpu_custom_call.1']
    #allocation4 [shape = 's32[2]{0}', space=sflag, size = 0x8, scoped, tag = 'scoped memory for tpu_custom_call.1']
    #allocation5 [shape = 'u8[32768]{0}', space=vmem, size = 0x8000, scoped, tag = 'input window, operand 9, single buffered']
    #allocation6 [shape = 's32[1]{0}', space=sflag, size = 0x4, scoped, tag = 'scoped memory for tpu_custom_call.1']
    #allocation7 [shape = 'u8[131072]{0}', space=vmem, size = 0x20000, scoped, tag = 'input window, operand 13, single buffered']
    #allocation8 [shape = 'u8[131072]{0}', space=vmem, size = 0x20000, scoped, tag = 'input window, operand 15, single buffered']
    #allocation9 [shape = 's32[1]{0}', space=sflag, size = 0x4, scoped, tag = 'scoped memory for tpu_custom_call.1']
    #allocation10 [shape = 'u8[32768]{0}', space=vmem, size = 0x8000, scoped, tag = 'output window, operand 0']
    %22 = vsyncpa [#allocation3], 0
    %s23 = scalar_lea.sflag [#allocation3], 1
    %24 = vsyncpa %s23, 0
    %25 = vsyncpa [#allocation6], 0
    %26 = vsyncpa [#allocation9], 0
    %27 = vsyncpa [#allocation4], 0
    %s28 = scalar_lea.sflag [#allocation4], 1
    %29 = vsyncpa %s28, 0
    loop: start=0, step=1, limit=4
    $region2: #{tpu_custom_call.1} parent=1 // loop_pre_header
      _
    $region3: #{tpu_custom_call.1} parent=1 // loop_header
      %s31 = sphi 0, %s35
      %p32 = scmp.ge.s32.totalorder %s31, 4
      %s41 = sphi 0, %s43
      %s44 = sphi 0, %s41
      %s45 = sphi 0, %s44
      %s61 = sphi 0, %s45
      %s67 = sphi 0, %s69
      %s70 = sphi 0, %s67
      %s71 = sphi 0, %s70
      %s87 = sphi 0, %s71
      %s91 = sphi 0, %s91
      %s93 = sphi 0, %s91
      %s94 = sphi 0, %s93
      %s108 = sphi 0, %s94
      %s112 = sphi 0, %s112
      %s114 = sphi 0, %s112
      %s115 = sphi 0, %s114
      %s129 = sphi 0, %s115
      %s133 = sphi 0, %s133
      %s135 = sphi 0, %s133
      %s136 = sphi 0, %s135
      %s150 = sphi 0, %s136
      %s154 = sphi 0, %s154
      %s156 = sphi 0, %s154
      %s157 = sphi 0, %s156
      %s171 = sphi 0, %s157
      %s175 = sphi 0, %s175
      %s177 = sphi 0, %s175
      %s178 = sphi 0, %s177
      %s192 = sphi 0, %s178
      %s196 = sphi 0, %s196
      %s198 = sphi 0, %s196
      %s199 = sphi 0, %s198
      %s213 = sphi 0, %s199
      %s217 = sphi 0, %s217
      %s219 = sphi 0, %s217
      %s220 = sphi 0, %s219
      %s234 = sphi 0, %s220
      %s238 = sphi 0, %s238
      %s240 = sphi 0, %s238
      %s241 = sphi 0, %s240
      %s255 = sphi 0, %s241
      %s259 = sphi 0, %s259
      %s261 = sphi 0, %s259
      %s262 = sphi 0, %s261
      %s276 = sphi 0, %s262
      %s280 = sphi 0, %s280
      %s282 = sphi 0, %s280
      %s283 = sphi 0, %s282
      %s297 = sphi 0, %s283
      %s301 = sphi 0, %s301
      %s303 = sphi 0, %s301
      %s304 = sphi 0, %s303
      %s318 = sphi 0, %s304
      %s322 = sphi 0, %s322
      %s324 = sphi 0, %s322
      %s325 = sphi 0, %s324
      %s339 = sphi 0, %s325
      %s343 = sphi 0, %s343
      %s345 = sphi 0, %s343
      %s346 = sphi 0, %s345
      %s360 = sphi 0, %s346
      %s364 = sphi 0, %s364
      %s366 = sphi 0, %s364
      %s367 = sphi 0, %s366
      %s381 = sphi 0, %s367
      %s385 = sphi 0, %s385
      %s387 = sphi 0, %s385
      %s388 = sphi 0, %s387
      %s402 = sphi 0, %s388
      %s408 = sphi 0, %s410
      %s411 = sphi 0, %s408
      %s412 = sphi 0, %s411
      %s428 = sphi 0, %s412
    $region4: #{tpu_custom_call.1} parent=1 // loop_header_branch
      %34 = sbr.rel (%p32) target = $region8
    $region5: #{tpu_custom_call.1} parent=1 // loop_body
      %s36 = ssub.s32 %s31, 1
      %s37 = ssub.s32 %s31, 2
      %s38 = sadd.s32 %s31, 1
      %s39 = ssub.s32 %s31, %s38
      %p40 = scmp.eq.s32.totalorder %s39, 0
      %s42 = sadd.s32 %s41, 1
      %s43 = scalar_select %p40, %s41, %s42
      %p46 = pneg %p40
      %p47 = scmp.eq.s32.totalorder %s31, 1
      %p48 = por %p46, %p47
      %p49 = scmp.ne.s32.totalorder %s41, %s44
      %p50 = scmp.eq.s32.totalorder %s31, 0
      %p51 = por %p49, %p50
      %p52 = scmp.ne.s32.totalorder %s41, %s44
      %p53 = scmp.eq.s32.totalorder %s36, 1
      %p54 = por %p52, %p53
      %p55 = scmp.ne.s32.totalorder %s44, %s45
      %p56 = scmp.eq.s32.totalorder %s36, 0
      %p57 = por %p55, %p56
      %p58 = scmp.ne.s32.totalorder %s44, %s45
      %p59 = scmp.eq.s32.totalorder %s37, 1
      %p60 = por %p58, %p59
      %p62 = scmp.ne.s32.totalorder %s45, %s61
      %p63 = scmp.eq.s32.totalorder %s37, 0
      %p64 = por %p62, %p63
      %s65 = ssub.s32 %s31, %s38
      %p66 = scmp.eq.s32.totalorder %s65, 0
      %s68 = sadd.s32 %s67, 1
      %s69 = scalar_select %p66, %s67, %s68
      %p72 = pneg %p66
      %p73 = scmp.eq.s32.totalorder %s31, 1
      %p74 = por %p72, %p73
      %p75 = scmp.ne.s32.totalorder %s67, %s70
      %p76 = scmp.eq.s32.totalorder %s31, 0
      %p77 = por %p75, %p76
      %p78 = scmp.ne.s32.totalorder %s67, %s70
      %p79 = scmp.eq.s32.totalorder %s36, 1
      %p80 = por %p78, %p79
      %p81 = scmp.ne.s32.totalorder %s70, %s71
      %p82 = scmp.eq.s32.totalorder %s36, 0
      %p83 = por %p81, %p82
      %p84 = scmp.ne.s32.totalorder %s70, %s71
      %p85 = scmp.eq.s32.totalorder %s37, 1
      %p86 = por %p84, %p85
      %p88 = scmp.ne.s32.totalorder %s71, %s87
      %p89 = scmp.eq.s32.totalorder %s37, 0
      %p90 = por %p88, %p89
      %s92 = sadd.s32 %s91, 1
      %p95 = scmp.eq.s32.totalorder %s31, 1
      %p96 = scmp.ne.s32.totalorder %s91, %s93
      %p97 = scmp.eq.s32.totalorder %s31, 0
      %p98 = por %p96, %p97
      %p99 = scmp.ne.s32.totalorder %s91, %s93
      %p100 = scmp.eq.s32.totalorder %s36, 1
      %p101 = por %p99, %p100
      %p102 = scmp.ne.s32.totalorder %s93, %s94
      %p103 = scmp.eq.s32.totalorder %s36, 0
      %p104 = por %p102, %p103
      %p105 = scmp.ne.s32.totalorder %s93, %s94
      %p106 = scmp.eq.s32.totalorder %s37, 1
      %p107 = por %p105, %p106
      %p109 = scmp.ne.s32.totalorder %s94, %s108
      %p110 = scmp.eq.s32.totalorder %s37, 0
      %p111 = por %p109, %p110
      %s113 = sadd.s32 %s112, 1
      %p116 = scmp.eq.s32.totalorder %s31, 1
      %p117 = scmp.ne.s32.totalorder %s112, %s114
      %p118 = scmp.eq.s32.totalorder %s31, 0
      %p119 = por %p117, %p118
      %p120 = scmp.ne.s32.totalorder %s112, %s114
      %p121 = scmp.eq.s32.totalorder %s36, 1
      %p122 = por %p120, %p121
      %p123 = scmp.ne.s32.totalorder %s114, %s115
      %p124 = scmp.eq.s32.totalorder %s36, 0
      %p125 = por %p123, %p124
      %p126 = scmp.ne.s32.totalorder %s114, %s115
      %p127 = scmp.eq.s32.totalorder %s37, 1
      %p128 = por %p126, %p127
      %p130 = scmp.ne.s32.totalorder %s115, %s129
      %p131 = scmp.eq.s32.totalorder %s37, 0
      %p132 = por %p130, %p131
      %s134 = sadd.s32 %s133, 1
      %p137 = scmp.eq.s32.totalorder %s31, 1
      %p138 = scmp.ne.s32.totalorder %s133, %s135
      %p139 = scmp.eq.s32.totalorder %s31, 0
      %p140 = por %p138, %p139
      %p141 = scmp.ne.s32.totalorder %s133, %s135
      %p142 = scmp.eq.s32.totalorder %s36, 1
      %p143 = por %p141, %p142
      %p144 = scmp.ne.s32.totalorder %s135, %s136
      %p145 = scmp.eq.s32.totalorder %s36, 0
      %p146 = por %p144, %p145
      %p147 = scmp.ne.s32.totalorder %s135, %s136
      %p148 = scmp.eq.s32.totalorder %s37, 1
      %p149 = por %p147, %p148
      %p151 = scmp.ne.s32.totalorder %s136, %s150
      %p152 = scmp.eq.s32.totalorder %s37, 0
      %p153 = por %p151, %p152
      %s155 = sadd.s32 %s154, 1
      %p158 = scmp.eq.s32.totalorder %s31, 1
      %p159 = scmp.ne.s32.totalorder %s154, %s156
      %p160 = scmp.eq.s32.totalorder %s31, 0
      %p161 = por %p159, %p160
      %p162 = scmp.ne.s32.totalorder %s154, %s156
      %p163 = scmp.eq.s32.totalorder %s36, 1
      %p164 = por %p162, %p163
      %p165 = scmp.ne.s32.totalorder %s156, %s157
      %p166 = scmp.eq.s32.totalorder %s36, 0
      %p167 = por %p165, %p166
      %p168 = scmp.ne.s32.totalorder %s156, %s157
      %p169 = scmp.eq.s32.totalorder %s37, 1
      %p170 = por %p168, %p169
      %p172 = scmp.ne.s32.totalorder %s157, %s171
      %p173 = scmp.eq.s32.totalorder %s37, 0
      %p174 = por %p172, %p173
      %s176 = sadd.s32 %s175, 1
      %p179 = scmp.eq.s32.totalorder %s31, 1
      %p180 = scmp.ne.s32.totalorder %s175, %s177
      %p181 = scmp.eq.s32.totalorder %s31, 0
      %p182 = por %p180, %p181
      %p183 = scmp.ne.s32.totalorder %s175, %s177
      %p184 = scmp.eq.s32.totalorder %s36, 1
      %p185 = por %p183, %p184
      %p186 = scmp.ne.s32.totalorder %s177, %s178
      %p187 = scmp.eq.s32.totalorder %s36, 0
      %p188 = por %p186, %p187
      %p189 = scmp.ne.s32.totalorder %s177, %s178
      %p190 = scmp.eq.s32.totalorder %s37, 1
      %p191 = por %p189, %p190
      %p193 = scmp.ne.s32.totalorder %s178, %s192
      %p194 = scmp.eq.s32.totalorder %s37, 0
      %p195 = por %p193, %p194
      %s197 = sadd.s32 %s196, 1
      %p200 = scmp.eq.s32.totalorder %s31, 1
      %p201 = scmp.ne.s32.totalorder %s196, %s198
      %p202 = scmp.eq.s32.totalorder %s31, 0
      %p203 = por %p201, %p202
      %p204 = scmp.ne.s32.totalorder %s196, %s198
      %p205 = scmp.eq.s32.totalorder %s36, 1
      %p206 = por %p204, %p205
      %p207 = scmp.ne.s32.totalorder %s198, %s199
      %p208 = scmp.eq.s32.totalorder %s36, 0
      %p209 = por %p207, %p208
      %p210 = scmp.ne.s32.totalorder %s198, %s199
      %p211 = scmp.eq.s32.totalorder %s37, 1
      %p212 = por %p210, %p211
      %p214 = scmp.ne.s32.totalorder %s199, %s213
      %p215 = scmp.eq.s32.totalorder %s37, 0
      %p216 = por %p214, %p215
      %s218 = sadd.s32 %s217, 1
      %p221 = scmp.eq.s32.totalorder %s31, 1
      %p222 = scmp.ne.s32.totalorder %s217, %s219
      %p223 = scmp.eq.s32.totalorder %s31, 0
      %p224 = por %p222, %p223
      %p225 = scmp.ne.s32.totalorder %s217, %s219
      %p226 = scmp.eq.s32.totalorder %s36, 1
      %p227 = por %p225, %p226
      %p228 = scmp.ne.s32.totalorder %s219, %s220
      %p229 = scmp.eq.s32.totalorder %s36, 0
      %p230 = por %p228, %p229
      %p231 = scmp.ne.s32.totalorder %s219, %s220
      %p232 = scmp.eq.s32.totalorder %s37, 1
      %p233 = por %p231, %p232
      %p235 = scmp.ne.s32.totalorder %s220, %s234
      %p236 = scmp.eq.s32.totalorder %s37, 0
      %p237 = por %p235, %p236
      %s239 = sadd.s32 %s238, 1
      %p242 = scmp.eq.s32.totalorder %s31, 1
      %p243 = scmp.ne.s32.totalorder %s238, %s240
      %p244 = scmp.eq.s32.totalorder %s31, 0
      %p245 = por %p243, %p244
      %p246 = scmp.ne.s32.totalorder %s238, %s240
      %p247 = scmp.eq.s32.totalorder %s36, 1
      %p248 = por %p246, %p247
      %p249 = scmp.ne.s32.totalorder %s240, %s241
      %p250 = scmp.eq.s32.totalorder %s36, 0
      %p251 = por %p249, %p250
      %p252 = scmp.ne.s32.totalorder %s240, %s241
      %p253 = scmp.eq.s32.totalorder %s37, 1
      %p254 = por %p252, %p253
      %p256 = scmp.ne.s32.totalorder %s241, %s255
      %p257 = scmp.eq.s32.totalorder %s37, 0
      %p258 = por %p256, %p257
      %s260 = sadd.s32 %s259, 1
      %p263 = scmp.eq.s32.totalorder %s31, 1
      %p264 = scmp.ne.s32.totalorder %s259, %s261
      %p265 = scmp.eq.s32.totalorder %s31, 0
      %p266 = por %p264, %p265
      %p267 = scmp.ne.s32.totalorder %s259, %s261
      %p268 = scmp.eq.s32.totalorder %s36, 1
      %p269 = por %p267, %p268
      %p270 = scmp.ne.s32.totalorder %s261, %s262
      %p271 = scmp.eq.s32.totalorder %s36, 0
      %p272 = por %p270, %p271
      %p273 = scmp.ne.s32.totalorder %s261, %s262
      %p274 = scmp.eq.s32.totalorder %s37, 1
      %p275 = por %p273, %p274
      %p277 = scmp.ne.s32.totalorder %s262, %s276
      %p278 = scmp.eq.s32.totalorder %s37, 0
      %p279 = por %p277, %p278
      %s281 = sadd.s32 %s280, 1
      %p284 = scmp.eq.s32.totalorder %s31, 1
      %p285 = scmp.ne.s32.totalorder %s280, %s282
      %p286 = scmp.eq.s32.totalorder %s31, 0
      %p287 = por %p285, %p286
      %p288 = scmp.ne.s32.totalorder %s280, %s282
      %p289 = scmp.eq.s32.totalorder %s36, 1
      %p290 = por %p288, %p289
      %p291 = scmp.ne.s32.totalorder %s282, %s283
      %p292 = scmp.eq.s32.totalorder %s36, 0
      %p293 = por %p291, %p292
      %p294 = scmp.ne.s32.totalorder %s282, %s283
      %p295 = scmp.eq.s32.totalorder %s37, 1
      %p296 = por %p294, %p295
      %p298 = scmp.ne.s32.totalorder %s283, %s297
      %p299 = scmp.eq.s32.totalorder %s37, 0
      %p300 = por %p298, %p299
      %s302 = sadd.s32 %s301, 1
      %p305 = scmp.eq.s32.totalorder %s31, 1
      %p306 = scmp.ne.s32.totalorder %s301, %s303
      %p307 = scmp.eq.s32.totalorder %s31, 0
      %p308 = por %p306, %p307
      %p309 = scmp.ne.s32.totalorder %s301, %s303
      %p310 = scmp.eq.s32.totalorder %s36, 1
      %p311 = por %p309, %p310
      %p312 = scmp.ne.s32.totalorder %s303, %s304
      %p313 = scmp.eq.s32.totalorder %s36, 0
      %p314 = por %p312, %p313
      %p315 = scmp.ne.s32.totalorder %s303, %s304
      %p316 = scmp.eq.s32.totalorder %s37, 1
      %p317 = por %p315, %p316
      %p319 = scmp.ne.s32.totalorder %s304, %s318
      %p320 = scmp.eq.s32.totalorder %s37, 0
      %p321 = por %p319, %p320
      %s323 = sadd.s32 %s322, 1
      %p326 = scmp.eq.s32.totalorder %s31, 1
      %p327 = scmp.ne.s32.totalorder %s322, %s324
      %p328 = scmp.eq.s32.totalorder %s31, 0
      %p329 = por %p327, %p328
      %p330 = scmp.ne.s32.totalorder %s322, %s324
      %p331 = scmp.eq.s32.totalorder %s36, 1
      %p332 = por %p330, %p331
      %p333 = scmp.ne.s32.totalorder %s324, %s325
      %p334 = scmp.eq.s32.totalorder %s36, 0
      %p335 = por %p333, %p334
      %p336 = scmp.ne.s32.totalorder %s324, %s325
      %p337 = scmp.eq.s32.totalorder %s37, 1
      %p338 = por %p336, %p337
      %p340 = scmp.ne.s32.totalorder %s325, %s339
      %p341 = scmp.eq.s32.totalorder %s37, 0
      %p342 = por %p340, %p341
      %s344 = sadd.s32 %s343, 1
      %p347 = scmp.eq.s32.totalorder %s31, 1
      %p348 = scmp.ne.s32.totalorder %s343, %s345
      %p349 = scmp.eq.s32.totalorder %s31, 0
      %p350 = por %p348, %p349
      %p351 = scmp.ne.s32.totalorder %s343, %s345
      %p352 = scmp.eq.s32.totalorder %s36, 1
      %p353 = por %p351, %p352
      %p354 = scmp.ne.s32.totalorder %s345, %s346
      %p355 = scmp.eq.s32.totalorder %s36, 0
      %p356 = por %p354, %p355
      %p357 = scmp.ne.s32.totalorder %s345, %s346
      %p358 = scmp.eq.s32.totalorder %s37, 1
      %p359 = por %p357, %p358
      %p361 = scmp.ne.s32.totalorder %s346, %s360
      %p362 = scmp.eq.s32.totalorder %s37, 0
      %p363 = por %p361, %p362
      %s365 = sadd.s32 %s364, 1
      %p368 = scmp.eq.s32.totalorder %s31, 1
      %p369 = scmp.ne.s32.totalorder %s364, %s366
      %p370 = scmp.eq.s32.totalorder %s31, 0
      %p371 = por %p369, %p370
      %p372 = scmp.ne.s32.totalorder %s364, %s366
      %p373 = scmp.eq.s32.totalorder %s36, 1
      %p374 = por %p372, %p373
      %p375 = scmp.ne.s32.totalorder %s366, %s367
      %p376 = scmp.eq.s32.totalorder %s36, 0
      %p377 = por %p375, %p376
      %p378 = scmp.ne.s32.totalorder %s366, %s367
      %p379 = scmp.eq.s32.totalorder %s37, 1
      %p380 = por %p378, %p379
      %p382 = scmp.ne.s32.totalorder %s367, %s381
      %p383 = scmp.eq.s32.totalorder %s37, 0
      %p384 = por %p382, %p383
      %s386 = sadd.s32 %s385, 1
      %p389 = scmp.eq.s32.totalorder %s31, 1
      %p390 = scmp.ne.s32.totalorder %s385, %s387
      %p391 = scmp.eq.s32.totalorder %s31, 0
      %p392 = por %p390, %p391
      %p393 = scmp.ne.s32.totalorder %s385, %s387
      %p394 = scmp.eq.s32.totalorder %s36, 1
      %p395 = por %p393, %p394
      %p396 = scmp.ne.s32.totalorder %s387, %s388
      %p397 = scmp.eq.s32.totalorder %s36, 0
      %p398 = por %p396, %p397
      %p399 = scmp.ne.s32.totalorder %s387, %s388
      %p400 = scmp.eq.s32.totalorder %s37, 1
      %p401 = por %p399, %p400
      %p403 = scmp.ne.s32.totalorder %s388, %s402
      %p404 = scmp.eq.s32.totalorder %s37, 0
      %p405 = por %p403, %p404
      %s406 = ssub.s32 %s31, %s38
      %p407 = scmp.eq.s32.totalorder %s406, 0
      %s409 = sadd.s32 %s408, 1
      %s410 = scalar_select %p407, %s408, %s409
      %p413 = pneg %p407
      %p414 = scmp.eq.s32.totalorder %s31, 1
      %p415 = por %p413, %p414
      %p416 = scmp.ne.s32.totalorder %s408, %s411
      %p417 = scmp.eq.s32.totalorder %s31, 0
      %p418 = por %p416, %p417
      %p419 = scmp.ne.s32.totalorder %s408, %s411
      %p420 = scmp.eq.s32.totalorder %s36, 1
      %p421 = por %p419, %p420
      %p422 = scmp.ne.s32.totalorder %s411, %s412
      %p423 = scmp.eq.s32.totalorder %s36, 0
      %p424 = por %p422, %p423
      %p425 = scmp.ne.s32.totalorder %s411, %s412
      %p426 = scmp.eq.s32.totalorder %s37, 1
      %p427 = por %p425, %p426
      %p429 = scmp.ne.s32.totalorder %s412, %s428
      %p430 = scmp.eq.s32.totalorder %s37, 0
      %p431 = por %p429, %p430
      %p432 = scmp.le.s32.totalorder 1, %s31
      %p433 = scmp.lt.s32.totalorder %s31, 3
      %p434 = pnand %p432, %p433
      %p435 = pneg %p434
      // Predicated region
      $region9: #{tpu_custom_call.1} parent=5 // pred_check
        _
      $region10: #{tpu_custom_call.1} parent=5 // pred_check_branch
        %437 = sbr.rel (%p434) target = $region12
      $region11: #{tpu_custom_call.1} parent=5 // pred_region
        %s438 = ssub.s32 %s31, 1
        // Predicated region
        $region13: #{tpu_custom_call.1} parent=11 // pred_check
          %p439 = pneg %p104
        $region14: #{tpu_custom_call.1} parent=11 // pred_check_branch
          %441 = sbr.rel (%p439) target = $region16
        $region15: #{tpu_custom_call.1} parent=11 // pred_region
          _
        $region16: #{tpu_custom_call.1} parent=11 // pred_fallthru
          _
        // Predicated region
        $region17: #{tpu_custom_call.1} parent=11 // pred_check
          %p442 = pneg %p125
        $region18: #{tpu_custom_call.1} parent=11 // pred_check_branch
          %444 = sbr.rel (%p442) target = $region20
        $region19: #{tpu_custom_call.1} parent=11 // pred_region
          _
        $region20: #{tpu_custom_call.1} parent=11 // pred_fallthru
          _
        // Predicated region
        $region21: #{tpu_custom_call.1} parent=11 // pred_check
          %p445 = pneg %p146
        $region22: #{tpu_custom_call.1} parent=11 // pred_check_branch
          %447 = sbr.rel (%p445) target = $region24
        $region23: #{tpu_custom_call.1} parent=11 // pred_region
          _
        $region24: #{tpu_custom_call.1} parent=11 // pred_fallthru
          _
        // Predicated region
        $region25: #{tpu_custom_call.1} parent=11 // pred_check
          %p448 = pneg %p167
        $region26: #{tpu_custom_call.1} parent=11 // pred_check_branch
          %450 = sbr.rel (%p448) target = $region28
        $region27: #{tpu_custom_call.1} parent=11 // pred_region
          _
        $region28: #{tpu_custom_call.1} parent=11 // pred_fallthru
          _
        // Predicated region
        $region29: #{tpu_custom_call.1} parent=11 // pred_check
          %p451 = pneg %p188
        $region30: #{tpu_custom_call.1} parent=11 // pred_check_branch
          %453 = sbr.rel (%p451) target = $region32
        $region31: #{tpu_custom_call.1} parent=11 // pred_region
          _
        $region32: #{tpu_custom_call.1} parent=11 // pred_fallthru
          _
        // Predicated region
        $region33: #{tpu_custom_call.1} parent=11 // pred_check
          %p454 = pneg %p209
        $region34: #{tpu_custom_call.1} parent=11 // pred_check_branch
          %456 = sbr.rel (%p454) target = $region36
        $region35: #{tpu_custom_call.1} parent=11 // pred_region
          _
        $region36: #{tpu_custom_call.1} parent=11 // pred_fallthru
          _
        // Predicated region
        $region37: #{tpu_custom_call.1} parent=11 // pred_check
          %p457 = pneg %p230
        $region38: #{tpu_custom_call.1} parent=11 // pred_check_branch
          %459 = sbr.rel (%p457) target = $region40
        $region39: #{tpu_custom_call.1} parent=11 // pred_region
          _
        $region40: #{tpu_custom_call.1} parent=11 // pred_fallthru
          _
        // Predicated region
        $region41: #{tpu_custom_call.1} parent=11 // pred_check
          %p460 = pneg %p251
        $region42: #{tpu_custom_call.1} parent=11 // pred_check_branch
          %462 = sbr.rel (%p460) target = $region44
        $region43: #{tpu_custom_call.1} parent=11 // pred_region
          %s464 = ssub.s32 1024, 1024
          %465 = vsyncadd [#allocation6], %s464
          %s466 = sshll.u32 [#allocation5], 4
          %s467 = int_to_ptr.vmem [resolvable:$true] %s466
          %472 = dma.hbm_to_vmem [thread:$0]  %s9, 1024, %s467, [#allocation6], 64, 64, 4
        $region44: #{tpu_custom_call.1} parent=11 // pred_fallthru
          _
        // Predicated region
        $region45: #{tpu_custom_call.1} parent=11 // pred_check
          %p473 = pneg %p272
        $region46: #{tpu_custom_call.1} parent=11 // pred_check_branch
          %475 = sbr.rel (%p473) target = $region48
        $region47: #{tpu_custom_call.1} parent=11 // pred_region
          _
        $region48: #{tpu_custom_call.1} parent=11 // pred_fallthru
          _
        // Predicated region
        $region49: #{tpu_custom_call.1} parent=11 // pred_check
          %p476 = pneg %p293
        $region50: #{tpu_custom_call.1} parent=11 // pred_check_branch
          %478 = sbr.rel (%p476) target = $region52
        $region51: #{tpu_custom_call.1} parent=11 // pred_region
          _
        $region52: #{tpu_custom_call.1} parent=11 // pred_fallthru
          _
        // Predicated region
        $region53: #{tpu_custom_call.1} parent=11 // pred_check
          %p479 = pneg %p314
        $region54: #{tpu_custom_call.1} parent=11 // pred_check_branch
          %481 = sbr.rel (%p479) target = $region56
        $region55: #{tpu_custom_call.1} parent=11 // pred_region
          _
        $region56: #{tpu_custom_call.1} parent=11 // pred_fallthru
          _
        // Predicated region
        $region57: #{tpu_custom_call.1} parent=11 // pred_check
          %p482 = pneg %p335
        $region58: #{tpu_custom_call.1} parent=11 // pred_check_branch
          %484 = sbr.rel (%p482) target = $region60
        $region59: #{tpu_custom_call.1} parent=11 // pred_region
          %s486 = ssub.s32 4096, 4096
          %487 = vsyncadd [#allocation6], %s486
          %s488 = sshll.u32 [#allocation7], 4
          %s489 = int_to_ptr.vmem [resolvable:$true] %s488
          %494 = dma.hbm_to_vmem [thread:$0]  %s13, 4096, %s489, [#allocation6], 128, 128, 8
        $region60: #{tpu_custom_call.1} parent=11 // pred_fallthru
          _
        // Predicated region
        $region61: #{tpu_custom_call.1} parent=11 // pred_check
          %p495 = pneg %p356
        $region62: #{tpu_custom_call.1} parent=11 // pred_check_branch
          %497 = sbr.rel (%p495) target = $region64
        $region63: #{tpu_custom_call.1} parent=11 // pred_region
          _
        $region64: #{tpu_custom_call.1} parent=11 // pred_fallthru
          _
        // Predicated region
        $region65: #{tpu_custom_call.1} parent=11 // pred_check
          %p498 = pneg %p377
        $region66: #{tpu_custom_call.1} parent=11 // pred_check_branch
          %500 = sbr.rel (%p498) target = $region68
        $region67: #{tpu_custom_call.1} parent=11 // pred_region
          %s502 = ssub.s32 4096, 4096
          %503 = vsyncadd [#allocation9], %s502
          %s504 = sshll.u32 [#allocation8], 4
          %s505 = int_to_ptr.vmem [resolvable:$true] %s504
          %510 = dma.hbm_to_vmem [thread:$0]  %s15, 4096, %s505, [#allocation9], 64, 64, 4
        $region68: #{tpu_custom_call.1} parent=11 // pred_fallthru
          _
        // Predicated region
        $region69: #{tpu_custom_call.1} parent=11 // pred_check
          %p511 = pneg %p398
        $region70: #{tpu_custom_call.1} parent=11 // pred_check_branch
          %513 = sbr.rel (%p511) target = $region72
        $region71: #{tpu_custom_call.1} parent=11 // pred_region
          _
        $region72: #{tpu_custom_call.1} parent=11 // pred_fallthru
          _
      $region12: #{tpu_custom_call.1} parent=5 // pred_fallthru
        _
      %p514 = scmp.lt.s32.totalorder %s31, 2
      // Predicated region
      $region73: #{tpu_custom_call.1} parent=5 // pred_check
        %p515 = pneg %p514
      $region74: #{tpu_custom_call.1} parent=5 // pred_check_branch
        %517 = sbr.rel (%p515) target = $region76
      $region75: #{tpu_custom_call.1} parent=5 // pred_region
        // Predicated region
        $region77: #{tpu_custom_call.1} parent=75 // pred_check
          %p518 = pneg %p51
        $region78: #{tpu_custom_call.1} parent=75 // pred_check_branch
          %520 = sbr.rel (%p518) target = $region80
        $region79: #{tpu_custom_call.1} parent=75 // pred_region
          %s521 = sand.u32 %s41, 1
          %s522 = scalar_lea.sflag [#allocation3], %s521
          %s523 = sand.u32 %s41, 1
          %s524 = smul.addr %s523, 32
          %s525 = scalar_lea.vmem [#allocation2], %s524
          %s526 = smul.u32 4, %s31
          %s528 = ssub.s32 512, 512
          %529 = vsyncadd %s522, %s528
          %s530 = smul.addr %s526, 128
          %s531 = scalar_lea.hbm %s0, %s530
          %s532 = sshll.u32 %s525, 4
          %s533 = int_to_ptr.vmem [resolvable:$true] %s532
          %538 = dma.hbm_to_vmem [thread:$0]  %s531, 512, %s533, %s522, 128, 128, 8
        $region80: #{tpu_custom_call.1} parent=75 // pred_fallthru
          _
        // Predicated region
        $region81: #{tpu_custom_call.1} parent=75 // pred_check
          %p539 = pneg %p77
        $region82: #{tpu_custom_call.1} parent=75 // pred_check_branch
          %541 = sbr.rel (%p539) target = $region84
        $region83: #{tpu_custom_call.1} parent=75 // pred_region
          %s542 = smul.u32 4, %s31
          %p543 = scmp.lt.s32.totalorder %s542, 7
          %s544 = scalar_select %p543, %s542, 7
          %s545 = smul.addr %s544, 8
          %s546 = scalar_lea.vmem %s1, %s545
          %s547 = smul.u32 4, %s31
        $region84: #{tpu_custom_call.1} parent=75 // pred_fallthru
          _
      $region76: #{tpu_custom_call.1} parent=5 // pred_fallthru
        _
      %p548 = scmp.le.s32.totalorder 1, %s31
      %p549 = scmp.lt.s32.totalorder %s31, 3
      %p550 = pnand %p548, %p549
      %p551 = pneg %p550
      // Predicated region
      $region85: #{tpu_custom_call.1} parent=5 // pred_check
        _
      $region86: #{tpu_custom_call.1} parent=5 // pred_check_branch
        %553 = sbr.rel (%p550) target = $region88
      $region87: #{tpu_custom_call.1} parent=5 // pred_region
        %s554 = ssub.s32 %s31, 1
        %s555 = sand.u32 %s44, 1
        %s556 = scalar_lea.sflag [#allocation3], %s555
        %s557 = sand.u32 %s44, 1
        %s558 = smul.addr %s557, 32
        %s559 = scalar_lea.vmem [#allocation2], %s558
        // Predicated region
        $region89: #{tpu_custom_call.1} parent=87 // pred_check
          %p560 = pneg %p57
        $region90: #{tpu_custom_call.1} parent=87 // pred_check_branch
          %562 = sbr.rel (%p560) target = $region92
        $region91: #{tpu_custom_call.1} parent=87 // pred_region
          %563 = dma.done %s556, 512
        $region92: #{tpu_custom_call.1} parent=87 // pred_fallthru
          _
        // Predicated region
        $region93: #{tpu_custom_call.1} parent=87 // pred_check
          %p564 = pneg %p251
        $region94: #{tpu_custom_call.1} parent=87 // pred_check_branch
          %566 = sbr.rel (%p564) target = $region96
        $region95: #{tpu_custom_call.1} parent=87 // pred_region
          %567 = dma.done [#allocation6], 1024
        $region96: #{tpu_custom_call.1} parent=87 // pred_fallthru
          _
        // Predicated region
        $region97: #{tpu_custom_call.1} parent=87 // pred_check
          %p568 = pneg %p335
        $region98: #{tpu_custom_call.1} parent=87 // pred_check_branch
          %570 = sbr.rel (%p568) target = $region100
        $region99: #{tpu_custom_call.1} parent=87 // pred_region
          %571 = dma.done [#allocation6], 4096
        $region100: #{tpu_custom_call.1} parent=87 // pred_fallthru
          _
        // Predicated region
        $region101: #{tpu_custom_call.1} parent=87 // pred_check
          %p572 = pneg %p377
        $region102: #{tpu_custom_call.1} parent=87 // pred_check_branch
          %574 = sbr.rel (%p572) target = $region104
        $region103: #{tpu_custom_call.1} parent=87 // pred_region
          %575 = dma.done [#allocation9], 4096
        $region104: #{tpu_custom_call.1} parent=87 // pred_fallthru
          _
        %s576 = sand.u32 %s44, 1
        %s577 = scalar_lea.sflag [#allocation3], %s576
        %s578 = sand.u32 %s44, 1
        %s579 = smul.addr %s578, 32
        %s580 = scalar_lea.vmem [#allocation2], %s579
        %p581 = pneg %p57
        %p582 = pneg %p54
        %s583 = smul.u32 4, %s36
        %p584 = scmp.lt.s32.totalorder %s583, 7
        %s585 = scalar_select %p584, %s583, 7
        %s586 = smul.addr %s585, 8
        %s587 = scalar_lea.vmem %s1, %s586
        %p588 = pneg %p83
        %p589 = pneg %p80
        %p590 = pneg %p104
        %p591 = pneg %p101
        %p592 = pneg %p125
        %p593 = pneg %p122
        %p594 = pneg %p146
        %p595 = pneg %p143
        %p596 = pneg %p167
        %p597 = pneg %p164
        %p598 = pneg %p188
        %p599 = pneg %p185
        %p600 = pneg %p209
        %p601 = pneg %p206
        %p602 = pneg %p230
        %p603 = pneg %p227
        %p604 = pneg %p251
        %p605 = pneg %p248
        %p606 = pneg %p272
        %p607 = pneg %p269
        %p608 = pneg %p293
        %p609 = pneg %p290
        %p610 = pneg %p314
        %p611 = pneg %p311
        %p612 = pneg %p335
        %p613 = pneg %p332
        %p614 = pneg %p356
        %p615 = pneg %p353
        %p616 = pneg %p377
        %p617 = pneg %p374
        %p618 = pneg %p398
        %p619 = pneg %p395
        %p620 = pneg %p424
        %p621 = pneg %p421
        %s622 = sand.u32 %s411, 1
        %s623 = scalar_lea.sflag [#allocation4], %s622
        %s624 = sand.u32 %s411, 1
        %s625 = smul.addr %s624, 32
        %s626 = scalar_lea.vmem [#allocation10], %s625
        %s627 = smul.u32 4, %s36
        %s628 = smul.u32 4, %s36
        %p629 = scmp.lt.s32.totalorder %s628, 7
        %s630 = scalar_select %p629, %s628, 7
        %s631 = smul.addr %s630, 8
        %s632 = scalar_lea.vmem %s1, %s631
        %s633 = smul.u32 4, %s36
        %s634 = smul.u32 4, %s36
        %v636 = vld [vmem:[%s559] sm:$0xff]
        %v637 = vld [vmem:[%s559 + $0x8] sm:$0xff]
        %v638 = vld [vmem:[%s559 + $0x10] sm:$0xff]
        %v639 = vld [vmem:[%s559 + $0x18] sm:$0xff]
        %v640 = vld [vmem:[%s632] sm:$0xff]
        %v641 = vld [vmem:[%s632 + $0x8] sm:$0xff]
        %v642 = vld [vmem:[%s632 + $0x10] sm:$0xff]
        %v643 = vld [vmem:[%s632 + $0x18] sm:$0xff]
        %v644 = vld [vmem:[%s4] sm:$0x1]
        %v645 = vld [vmem:[%s5] sm:$0x1]
        %646 = vadd.xlane.f32.xlu0 %v636
        %v647 = vpop.xlane.xlu0 %646
        %648 = vadd.xlane.f32.xlu0 %v637
        %v649 = vpop.xlane.xlu0 %648
        %650 = vadd.xlane.f32.xlu0 %v638
        %v651 = vpop.xlane.xlu0 %650
        %652 = vadd.xlane.f32.xlu0 %v639
        %v653 = vpop.xlane.xlu0 %652
        %v654 = vrcp.pop 128.0
        %v655 = vmul.f32 %v647, %v654
        %v656 = vmul.f32 %v649, %v654
        %v657 = vmul.f32 %v651, %v654
        %v658 = vmul.f32 %v653, %v654
        %v659 = vsub.f32 %v636, %v655
        %v660 = vsub.f32 %v637, %v656
        %v661 = vsub.f32 %v638, %v657
        %v662 = vsub.f32 %v639, %v658
        %v663 = vmul.f32 %v659, %v659
        %v664 = vmul.f32 %v660, %v660
        %v665 = vmul.f32 %v661, %v661
        %v666 = vmul.f32 %v662, %v662
        %667 = vadd.xlane.f32.xlu0 %v663
        %v668 = vpop.xlane.xlu0 %667
        %669 = vadd.xlane.f32.xlu0 %v664
        %v670 = vpop.xlane.xlu0 %669
        %671 = vadd.xlane.f32.xlu0 %v665
        %v672 = vpop.xlane.xlu0 %671
        %673 = vadd.xlane.f32.xlu0 %v666
        %v674 = vpop.xlane.xlu0 %673
        %v675 = vmul.f32 %v668, 0.007874016
        %v676 = vmul.f32 %v670, 0.007874016
        %v677 = vmul.f32 %v672, 0.007874016
        %v678 = vmul.f32 %v674, 0.007874016
        %v679 = vrsqrt.pop %v675
        %v680 = vmul.f32 %v675, %v679
        %vm681 = vcmp.eq.f32.partialorder %v675, inf
        %v682 = vsel %vm681, %v675, %v680
        %vm683 = vcmp.eq.f32.partialorder %v675, 0.0
        %v684 = vand.u32 %v675, 2147483648
        %v685 = vsel %vm683, %v684, %v682
        %v686 = vrsqrt.pop %v676
        %v687 = vmul.f32 %v676, %v686
        %vm688 = vcmp.eq.f32.partialorder %v676, inf
        %v689 = vsel %vm688, %v676, %v687
        %vm690 = vcmp.eq.f32.partialorder %v676, 0.0
        %v691 = vand.u32 %v676, 2147483648
        %v692 = vsel %vm690, %v691, %v689
        %v693 = vrsqrt.pop %v677
        %v694 = vmul.f32 %v677, %v693
        %vm695 = vcmp.eq.f32.partialorder %v677, inf
        %v696 = vsel %vm695, %v677, %v694
        %vm697 = vcmp.eq.f32.partialorder %v677, 0.0
        %v698 = vand.u32 %v677, 2147483648
        %v699 = vsel %vm697, %v698, %v696
        %v700 = vrsqrt.pop %v678
        %v701 = vmul.f32 %v678, %v700
        %vm702 = vcmp.eq.f32.partialorder %v678, inf
        %v703 = vsel %vm702, %v678, %v701
        %vm704 = vcmp.eq.f32.partialorder %v678, 0.0
        %v705 = vand.u32 %v678, 2147483648
        %v706 = vsel %vm704, %v705, %v703
        %v707 = vadd.f32 %v685, 1e-06
        %v708 = vadd.f32 %v692, 1e-06
        %v709 = vadd.f32 %v699, 1e-06
        %v710 = vadd.f32 %v706, 1e-06
        %v711 = vrcp.pop %v707
        %v712 = vrcp.pop %v708
        %v713 = vrcp.pop %v709
        %v714 = vrcp.pop %v710
        %v715 = vmul.f32 %v659, %v711
        %v716 = vmul.f32 %v660, %v712
        %v717 = vmul.f32 %v661, %v713
        %v718 = vmul.f32 %v662, %v714
        %v720 = vlaneseq
        %v721 = vshrl.u32 %v720, 7
        %v722 = vsub.s32 0, %v721
        %v723 = vrot.slane %v644, %v722
        %v725 = vmul.f32 %v723, %v715
        %v726 = vmul.f32 %v723, %v716
        %v727 = vmul.f32 %v723, %v717
        %v728 = vmul.f32 %v723, %v718
        %v730 = vlaneseq
        %v731 = vshrl.u32 %v730, 7
        %v732 = vsub.s32 0, %v731
        %v733 = vrot.slane %v645, %v732
        %v735 = vadd.f32 %v725, %v733
        %v736 = vadd.f32 %v726, %v733
        %v737 = vadd.f32 %v727, %v733
        %v738 = vadd.f32 %v728, %v733
        %v739 = vpack.c.bf16 %v736, %v735
        %v740 = vpack.c.bf16 %v738, %v737
        %v741 = vld [vmem:[%s6] sm:$0xff]
        %v742 = vld [vmem:[%s6 + $0x8] sm:$0xff]
        %v743 = vld [vmem:[%s6 + $0x10] sm:$0xff]
        %v744 = vld [vmem:[%s6 + $0x18] sm:$0xff]
        %v745 = vld [vmem:[%s6 + $0x20] sm:$0xff]
        %v746 = vld [vmem:[%s6 + $0x28] sm:$0xff]
        %v747 = vld [vmem:[%s6 + $0x30] sm:$0xff]
        %v748 = vld [vmem:[%s6 + $0x38] sm:$0xff]
        %v749 = vld [vmem:[%s6 + $0x40] sm:$0xff]
        %v750 = vld [vmem:[%s6 + $0x48] sm:$0xff]
        %v751 = vld [vmem:[%s6 + $0x50] sm:$0xff]
        %v752 = vld [vmem:[%s6 + $0x58] sm:$0xff]
        %v753 = vld [vmem:[%s6 + $0x60] sm:$0xff]
        %v754 = vld [vmem:[%s6 + $0x68] sm:$0xff]
        %v755 = vld [vmem:[%s6 + $0x70] sm:$0xff]
        %v756 = vld [vmem:[%s6 + $0x78] sm:$0xff]
        %v757 = vld [vmem:[%s7] sm:$0x3]
        %v759 = vlaneseq
        %v760 = vshrl.u32 %v759, 7
        %v761 = vsub.s32 0, %v760
        %v762 = vrot.slane %v757, %v761
        %v763 = vlaneseq
        %v764 = vshrl.u32 %v763, 7
        %v765 = vsub.s32 1, %v764
        %v766 = vrot.slane %v757, %v765
        %v785 = vunpack.c.l.b16 %v741
        %v786 = vunpack.c.h.b16 %v741
        %v787 = vunpack.c.l.b16 %v742
        %v788 = vunpack.c.h.b16 %v742
        %v789 = vunpack.c.l.b16 %v743
        %v790 = vunpack.c.h.b16 %v743
        %v791 = vunpack.c.l.b16 %v744
        %v792 = vunpack.c.h.b16 %v744
        %v793 = vunpack.c.l.b16 %v745
        %v794 = vunpack.c.h.b16 %v745
        %v795 = vunpack.c.l.b16 %v746
        %v796 = vunpack.c.h.b16 %v746
        %v797 = vunpack.c.l.b16 %v747
        %v798 = vunpack.c.h.b16 %v747
        %v799 = vunpack.c.l.b16 %v748
        %v800 = vunpack.c.h.b16 %v748
        %v801 = vunpack.c.l.b16 %v749
        %v802 = vunpack.c.h.b16 %v749
        %v803 = vunpack.c.l.b16 %v750
        %v804 = vunpack.c.h.b16 %v750
        %v805 = vunpack.c.l.b16 %v751
        %v806 = vunpack.c.h.b16 %v751
        %v807 = vunpack.c.l.b16 %v752
        %v808 = vunpack.c.h.b16 %v752
        %v809 = vunpack.c.l.b16 %v753
        %v810 = vunpack.c.h.b16 %v753
        %v811 = vunpack.c.l.b16 %v754
        %v812 = vunpack.c.h.b16 %v754
        %v813 = vunpack.c.l.b16 %v755
        %v814 = vunpack.c.h.b16 %v755
        %v815 = vunpack.c.l.b16 %v756
        %v816 = vunpack.c.h.b16 %v756
        %v817 = vpack.c.b16 %v787, %v785
        %v818 = vpack.c.b16 %v788, %v786
        %v819 = vpack.c.b16 %v791, %v789
        %v820 = vpack.c.b16 %v792, %v790
        %v821 = vpack.c.b16 %v795, %v793
        %v822 = vpack.c.b16 %v796, %v794
        %v823 = vpack.c.b16 %v799, %v797
        %v824 = vpack.c.b16 %v800, %v798
        %v825 = vpack.c.b16 %v803, %v801
        %v826 = vpack.c.b16 %v804, %v802
        %v827 = vpack.c.b16 %v807, %v805
        %v828 = vpack.c.b16 %v808, %v806
        %v829 = vpack.c.b16 %v811, %v809
        %v830 = vpack.c.b16 %v812, %v810
        %v831 = vpack.c.b16 %v815, %v813
        %v832 = vpack.c.b16 %v816, %v814
        %849 = vmatprep.subr.bf16.mxu0 %v832
        %850 = vmatpush1.bf16.msra.mxu0 %v831
        %851 = vmatprep.subr.bf16.mxu0 %v830
        %852 = vmatpush1.bf16.msra.mxu0 %v829
        %853 = vmatprep.subr.bf16.mxu0 %v828
        %854 = vmatpush1.bf16.msra.mxu0 %v827
        %855 = vmatprep.subr.bf16.mxu0 %v826
        %856 = vmatpush1.bf16.msra.mxu0 %v825
        %857 = vmatprep.subr.bf16.mxu0 %v824
        %858 = vmatpush1.bf16.msra.mxu0 %v823
        %859 = vmatprep.subr.bf16.mxu0 %v822
        %860 = vmatpush1.bf16.msra.mxu0 %v821
        %861 = vmatprep.subr.bf16.mxu0 %v820
        %862 = vmatpush1.bf16.msra.mxu0 %v819
        %863 = vmatprep.subr.bf16.mxu0 %v818
        %864 = vmatpush1.bf16.msra.mxu0 %v817
        %865 = vmatprep.subr.bf16.mxu0 0
        %866 = vmatpush2.bf16.msra.mxu0 0
        %867 = vmatprep.subr.bf16.mxu0 0
        %868 = vmatpush2.bf16.msra.mxu0 0
        %869 = vmatprep.subr.bf16.mxu0 0
        %870 = vmatpush2.bf16.msra.mxu0 0
        %871 = vmatprep.subr.bf16.mxu0 0
        %872 = vmatpush2.bf16.msra.mxu0 0
        %873 = vmatprep.subr.bf16.mxu0 0
        %874 = vmatpush2.bf16.msra.mxu0 0
        %875 = vmatprep.subr.bf16.mxu0 0
        %876 = vmatpush2.bf16.msra.mxu0 0
        %877 = vmatprep.subr.bf16.mxu0 0
        %878 = vmatpush2.bf16.msra.mxu0 0
        %879 = vmatprep.subr.bf16.mxu0 0
        %880 = vmatpush2.bf16.msra.mxu0 0
        %881 = vmatprep.mubr.bf16.mxu0 0
        %882 = vmatmul.mubr.bf16.gmra.mxu0 %v739
        %v883 = vpop.f32.mrf.mxu0
        %v884 = vadd.f32 %v762, %v883
        %v885 = vpop.f32.mrf.mxu0
        %v886 = vadd.f32 %v766, %v885
        %v887 = vpop.f32.mrf.mxu0
        %v888 = vadd.f32 %v762, %v887
        %v889 = vpop.f32.mrf.mxu0
        %v890 = vadd.f32 %v766, %v889
        %891 = vmatprep.mubr.bf16.mxu0 0
        %892 = vmatmul.mubr.bf16.gmra.mxu0 %v740
        %v893 = vpop.f32.mrf.mxu0
        %v894 = vadd.f32 %v762, %v893
        %v895 = vpop.f32.mrf.mxu0
        %v896 = vadd.f32 %v766, %v895
        %v897 = vpop.f32.mrf.mxu0
        %v898 = vadd.f32 %v762, %v897
        %v899 = vpop.f32.mrf.mxu0
        %v900 = vadd.f32 %v766, %v899
        %901 = vdwg.mxu0
        %v902 = vxor.u32 %v886, 2147483648
        %v903 = vxor.u32 %v890, 2147483648
        %v904 = vxor.u32 %v896, 2147483648
        %v905 = vxor.u32 %v900, 2147483648
        %v906 = vmul.f32 %v902, 1.442695
        %v907 = vpow.pop %v906
        %v908 = vmul.f32 %v903, 1.442695
        %v909 = vpow.pop %v908
        %v910 = vmul.f32 %v904, 1.442695
        %v911 = vpow.pop %v910
        %v912 = vmul.f32 %v905, 1.442695
        %v913 = vpow.pop %v912
        %v914 = vadd.f32 %v907, 1.0
        %v915 = vadd.f32 %v909, 1.0
        %v916 = vadd.f32 %v911, 1.0
        %v917 = vadd.f32 %v913, 1.0
        %v918 = vrcp.pop %v914
        %v919 = vmul.f32 1.0, %v918
        %v920 = vrcp.pop %v915
        %v921 = vmul.f32 1.0, %v920
        %v922 = vrcp.pop %v916
        %v923 = vmul.f32 1.0, %v922
        %v924 = vrcp.pop %v917
        %v925 = vmul.f32 1.0, %v924
        %v926 = vmul.f32 %v884, %v919
        %v927 = vmul.f32 %v888, %v921
        %v928 = vmul.f32 %v894, %v923
        %v929 = vmul.f32 %v898, %v925
        %931 = vset.pattern.permute.xlu0 0
        %932 = vperm.xlu0 %931, %v640
        %v933 = vpop.permute.xlu0 %932
        %936 = vset.pattern.permute.xlu0 0
        %937 = vperm.xlu0 %936, %v641
        %v938 = vpop.permute.xlu0 %937
        %941 = vset.pattern.permute.xlu0 0
        %942 = vperm.xlu0 %941, %v642
        %v943 = vpop.permute.xlu0 %942
        %946 = vset.pattern.permute.xlu0 0
        %947 = vperm.xlu0 %946, %v643
        %v948 = vpop.permute.xlu0 %947
        %v950 = vmul.f32 %v926, %v933
        %v951 = vmul.f32 %v927, %v938
        %v952 = vmul.f32 %v928, %v943
        %v953 = vmul.f32 %v929, %v948
        %v954 = vrot.slane %v950, 7
        %v955 = vrot.slane %v951, 7
        %v956 = vrot.slane %v952, 7
        %v957 = vrot.slane %v953, 7
        %v958 = vlaneseq
        %v959 = vshrl.u32 %v958, 7
        %vm960 = vcmp.lt.s32.totalorder %v959, 1
        %v961 = vsel %vm960, %v956, %v957
        %v962 = vsel %vm960, %v955, %v956
        %v963 = vsel %vm960, %v954, %v955
        %v964 = vsel %vm960, %v957, %v954
        %v965 = vld [vmem:[%s2] sm:$0xff]
        %v966 = vld [vmem:[%s2 + $0x8] sm:$0xff]
        %v967 = vld [vmem:[%s2 + $0x10] sm:$0xff]
        %v968 = vld [vmem:[%s2 + $0x18] sm:$0xff]
        %970 = vset.pattern.permute.xlu0 0
        %971 = vperm.xlu0 %970, %v965
        %v972 = vpop.permute.xlu0 %971
        %975 = vset.pattern.permute.xlu0 0
        %976 = vperm.xlu0 %975, %v966
        %v977 = vpop.permute.xlu0 %976
        %980 = vset.pattern.permute.xlu0 0
        %981 = vperm.xlu0 %980, %v967
        %v982 = vpop.permute.xlu0 %981
        %985 = vset.pattern.permute.xlu0 0
        %986 = vperm.xlu0 %985, %v968
        %v987 = vpop.permute.xlu0 %986
        %v989 = vmul.f32 %v964, %v972
        %v990 = vmul.f32 %v963, %v977
        %v991 = vmul.f32 %v962, %v982
        %v992 = vmul.f32 %v961, %v987
        %v993 = vrot.slane %v950, 1
        %v994 = vrot.slane %v951, 1
        %v995 = vrot.slane %v952, 1
        %v996 = vrot.slane %v953, 1
        %vm997 = vcmp.lt.s32.totalorder %v959, 7
        %v998 = vsel %vm997, %v995, %v996
        %v999 = vsel %vm997, %v994, %v995
        %v1000 = vsel %vm997, %v993, %v994
        %v1001 = vsel %vm997, %v996, %v993
        %v1002 = vld [vmem:[%s3] sm:$0xff]
        %v1003 = vld [vmem:[%s3 + $0x8] sm:$0xff]
        %v1004 = vld [vmem:[%s3 + $0x10] sm:$0xff]
        %v1005 = vld [vmem:[%s3 + $0x18] sm:$0xff]
        %1007 = vset.pattern.permute.xlu0 0
        %1008 = vperm.xlu0 %1007, %v1002
        %v1009 = vpop.permute.xlu0 %1008
        %1012 = vset.pattern.permute.xlu0 0
        %1013 = vperm.xlu0 %1012, %v1003
        %v1014 = vpop.permute.xlu0 %1013
        %1017 = vset.pattern.permute.xlu0 0
        %1018 = vperm.xlu0 %1017, %v1004
        %v1019 = vpop.permute.xlu0 %1018
        %1022 = vset.pattern.permute.xlu0 0
        %1023 = vperm.xlu0 %1022, %v1005
        %v1024 = vpop.permute.xlu0 %1023
        %v1026 = vmul.f32 %v1000, %v1009
        %v1027 = vmul.f32 %v999, %v1014
        %v1028 = vmul.f32 %v998, %v1019
        %v1029 = vmul.f32 %v1001, %v1024
        %v1030 = vld [vmem:[%s8] sm:$0x1]
        %v1031 = vlaneseq
        %v1032 = vshrl.u32 %v1031, 7
        %v1033 = vsub.s32 0, %v1032
        %v1034 = vrot.slane %v1030, %v1033
        %v1035 = vmul.f32 %v1034, %v989
        %v1036 = vmul.f32 %v1034, %v990
        %v1037 = vmul.f32 %v1034, %v991
        %v1038 = vmul.f32 %v1034, %v992
        %v1039 = vld [vmem:[%s8 + $0x1] sm:$0x1]
        %v1040 = vlaneseq
        %v1041 = vshrl.u32 %v1040, 7
        %v1042 = vsub.s32 0, %v1041
        %v1043 = vrot.slane %v1039, %v1042
        %v1044 = vmul.f32 %v1043, %v950
        %v1045 = vmul.f32 %v1043, %v951
        %v1046 = vmul.f32 %v1043, %v952
        %v1047 = vmul.f32 %v1043, %v953
        %v1048 = vadd.f32 %v1035, %v1044
        %v1049 = vadd.f32 %v1036, %v1045
        %v1050 = vadd.f32 %v1037, %v1046
        %v1051 = vadd.f32 %v1038, %v1047
        %v1052 = vld [vmem:[%s8 + $0x2] sm:$0x1]
        %v1053 = vlaneseq
        %v1054 = vshrl.u32 %v1053, 7
        %v1055 = vsub.s32 0, %v1054
        %v1056 = vrot.slane %v1052, %v1055
        %v1057 = vmul.f32 %v1056, %v1026
        %v1058 = vmul.f32 %v1056, %v1027
        %v1059 = vmul.f32 %v1056, %v1028
        %v1060 = vmul.f32 %v1056, %v1029
        %v1061 = vadd.f32 %v1048, %v1057
        %v1062 = vadd.f32 %v1049, %v1058
        %v1063 = vadd.f32 %v1050, %v1059
        %v1064 = vadd.f32 %v1051, %v1060
        %v1065 = vpack.c.bf16 %v1062, %v1061
        %v1066 = vpack.c.bf16 %v1064, %v1063
        %v1067 = vld [vmem:[#allocation5] sm:$0xf]
        %v1068 = vld [vmem:[#allocation5 + $0x4] sm:$0xf]
        %v1069 = vld [vmem:[#allocation5 + $0x8] sm:$0xf]
        %v1070 = vld [vmem:[#allocation5 + $0xc] sm:$0xf]
        %v1071 = vld [vmem:[#allocation5 + $0x10] sm:$0xf]
        %v1072 = vld [vmem:[#allocation5 + $0x14] sm:$0xf]
        %v1073 = vld [vmem:[#allocation5 + $0x18] sm:$0xf]
        %v1074 = vld [vmem:[#allocation5 + $0x1c] sm:$0xf]
        %v1075 = vld [vmem:[#allocation5 + $0x20] sm:$0xf]
        %v1076 = vld [vmem:[#allocation5 + $0x24] sm:$0xf]
        %v1077 = vld [vmem:[#allocation5 + $0x28] sm:$0xf]
        %v1078 = vld [vmem:[#allocation5 + $0x2c] sm:$0xf]
        %v1079 = vld [vmem:[#allocation5 + $0x30] sm:$0xf]
        %v1080 = vld [vmem:[#allocation5 + $0x34] sm:$0xf]
        %v1081 = vld [vmem:[#allocation5 + $0x38] sm:$0xf]
        %v1082 = vld [vmem:[#allocation5 + $0x3c] sm:$0xf]
        %v1083 = vld [vmem:[%s10] sm:$0x1]
        %v1085 = vlaneseq
        %v1086 = vshrl.u32 %v1085, 7
        %v1087 = vsub.s32 0, %v1086
        %v1088 = vrot.slane %v1083, %v1087
        %v1106 = vunpack.c.l.b16 %v1067
        %v1107 = vunpack.c.l.b16 %v1068
        %v1108 = vunpack.c.l.b16 %v1069
        %v1109 = vunpack.c.l.b16 %v1070
        %v1110 = vunpack.c.l.b16 %v1071
        %v1111 = vunpack.c.l.b16 %v1072
        %v1112 = vunpack.c.l.b16 %v1073
        %v1113 = vunpack.c.l.b16 %v1074
        %v1114 = vunpack.c.l.b16 %v1075
        %v1115 = vunpack.c.l.b16 %v1076
        %v1116 = vunpack.c.l.b16 %v1077
        %v1117 = vunpack.c.l.b16 %v1078
        %v1118 = vunpack.c.l.b16 %v1079
        %v1119 = vunpack.c.l.b16 %v1080
        %v1120 = vunpack.c.l.b16 %v1081
        %v1121 = vunpack.c.l.b16 %v1082
        %v1122 = vpack.c.b16 %v1107, %v1106
        %v1123 = vpack.c.b16 %v1109, %v1108
        %v1124 = vpack.c.b16 %v1111, %v1110
        %v1125 = vpack.c.b16 %v1113, %v1112
        %v1126 = vpack.c.b16 %v1115, %v1114
        %v1127 = vpack.c.b16 %v1117, %v1116
        %v1128 = vpack.c.b16 %v1119, %v1118
        %v1129 = vpack.c.b16 %v1121, %v1120
        %1138 = vmatprep.subr.bf16.mxu0 0
        %1139 = vmatpush1.bf16.msra.mxu0 %v1129
        %1140 = vmatprep.subr.bf16.mxu0 0
        %1141 = vmatpush1.bf16.msra.mxu0 %v1128
        %1142 = vmatprep.subr.bf16.mxu0 0
        %1143 = vmatpush1.bf16.msra.mxu0 %v1127
        %1144 = vmatprep.subr.bf16.mxu0 0
        %1145 = vmatpush1.bf16.msra.mxu0 %v1126
        %1146 = vmatprep.subr.bf16.mxu0 0
        %1147 = vmatpush1.bf16.msra.mxu0 %v1125
        %1148 = vmatprep.subr.bf16.mxu0 0
        %1149 = vmatpush1.bf16.msra.mxu0 %v1124
        %1150 = vmatprep.subr.bf16.mxu0 0
        %1151 = vmatpush1.bf16.msra.mxu0 %v1123
        %1152 = vmatprep.subr.bf16.mxu0 0
        %1153 = vmatpush1.bf16.msra.mxu0 %v1122
        %1154 = vmatprep.subr.bf16.mxu0 0
        %1155 = vmatpush2.bf16.msra.mxu0 0
        %1156 = vmatprep.subr.bf16.mxu0 0
        %1157 = vmatpush2.bf16.msra.mxu0 0
        %1158 = vmatprep.subr.bf16.mxu0 0
        %1159 = vmatpush2.bf16.msra.mxu0 0
        %1160 = vmatprep.subr.bf16.mxu0 0
        %1161 = vmatpush2.bf16.msra.mxu0 0
        %1162 = vmatprep.subr.bf16.mxu0 0
        %1163 = vmatpush2.bf16.msra.mxu0 0
        %1164 = vmatprep.subr.bf16.mxu0 0
        %1165 = vmatpush2.bf16.msra.mxu0 0
        %1166 = vmatprep.subr.bf16.mxu0 0
        %1167 = vmatpush2.bf16.msra.mxu0 0
        %1168 = vmatprep.subr.bf16.mxu0 0
        %1169 = vmatpush2.bf16.msra.mxu0 0
        %1170 = vmatprep.mubr.bf16.mxu0 0
        %1171 = vmatmul.mubr.bf16.gmra.mxu0 %v1065
        %v1172 = vpop.f32.mrf.mxu0
        %v1173 = vadd.f32 %v1088, %v1172
        %v1174 = vpop.f32.mrf.mxu0
        %v1175 = vpop.f32.mrf.mxu0
        %v1176 = vadd.f32 %v1088, %v1175
        %v1177 = vpop.f32.mrf.mxu0
        %1178 = vmatprep.mubr.bf16.mxu0 0
        %1179 = vmatmul.mubr.bf16.gmra.mxu0 %v1066
        %v1180 = vpop.f32.mrf.mxu0
        %v1181 = vadd.f32 %v1088, %v1180
        %v1182 = vpop.f32.mrf.mxu0
        %v1183 = vpop.f32.mrf.mxu0
        %v1184 = vadd.f32 %v1088, %v1183
        %v1185 = vpop.f32.mrf.mxu0
        %1186 = vdwg.mxu0
        %v1187 = vadd.f32 %v636, %v1173
        %v1188 = vadd.f32 %v637, %v1176
        %v1189 = vadd.f32 %v638, %v1181
        %v1190 = vadd.f32 %v639, %v1184
        %v1191 = vld [vmem:[%s11] sm:$0x1]
        %v1192 = vld [vmem:[%s12] sm:$0x1]
        %1193 = vadd.xlane.f32.xlu0 %v1187
        %v1194 = vpop.xlane.xlu0 %1193
        %1195 = vadd.xlane.f32.xlu0 %v1188
        %v1196 = vpop.xlane.xlu0 %1195
        %1197 = vadd.xlane.f32.xlu0 %v1189
        %v1198 = vpop.xlane.xlu0 %1197
        %1199 = vadd.xlane.f32.xlu0 %v1190
        %v1200 = vpop.xlane.xlu0 %1199
        %v1201 = vmul.f32 %v1194, %v654
        %v1202 = vmul.f32 %v1196, %v654
        %v1203 = vmul.f32 %v1198, %v654
        %v1204 = vmul.f32 %v1200, %v654
        %v1205 = vsub.f32 %v1187, %v1201
        %v1206 = vsub.f32 %v1188, %v1202
        %v1207 = vsub.f32 %v1189, %v1203
        %v1208 = vsub.f32 %v1190, %v1204
        %v1209 = vmul.f32 %v1205, %v1205
        %v1210 = vmul.f32 %v1206, %v1206
        %v1211 = vmul.f32 %v1207, %v1207
        %v1212 = vmul.f32 %v1208, %v1208
        %1213 = vadd.xlane.f32.xlu0 %v1209
        %v1214 = vpop.xlane.xlu0 %1213
        %1215 = vadd.xlane.f32.xlu0 %v1210
        %v1216 = vpop.xlane.xlu0 %1215
        %1217 = vadd.xlane.f32.xlu0 %v1211
        %v1218 = vpop.xlane.xlu0 %1217
        %1219 = vadd.xlane.f32.xlu0 %v1212
        %v1220 = vpop.xlane.xlu0 %1219
        %v1221 = vmul.f32 %v1214, 0.007874016
        %v1222 = vmul.f32 %v1216, 0.007874016
        %v1223 = vmul.f32 %v1218, 0.007874016
        %v1224 = vmul.f32 %v1220, 0.007874016
        %v1225 = vrsqrt.pop %v1221
        %v1226 = vmul.f32 %v1221, %v1225
        %vm1227 = vcmp.eq.f32.partialorder %v1221, inf
        %v1228 = vsel %vm1227, %v1221, %v1226
        %vm1229 = vcmp.eq.f32.partialorder %v1221, 0.0
        %v1230 = vand.u32 %v1221, 2147483648
        %v1231 = vsel %vm1229, %v1230, %v1228
        %v1232 = vrsqrt.pop %v1222
        %v1233 = vmul.f32 %v1222, %v1232
        %vm1234 = vcmp.eq.f32.partialorder %v1222, inf
        %v1235 = vsel %vm1234, %v1222, %v1233
        %vm1236 = vcmp.eq.f32.partialorder %v1222, 0.0
        %v1237 = vand.u32 %v1222, 2147483648
        %v1238 = vsel %vm1236, %v1237, %v1235
        %v1239 = vrsqrt.pop %v1223
        %v1240 = vmul.f32 %v1223, %v1239
        %vm1241 = vcmp.eq.f32.partialorder %v1223, inf
        %v1242 = vsel %vm1241, %v1223, %v1240
        %vm1243 = vcmp.eq.f32.partialorder %v1223, 0.0
        %v1244 = vand.u32 %v1223, 2147483648
        %v1245 = vsel %vm1243, %v1244, %v1242
        %v1246 = vrsqrt.pop %v1224
        %v1247 = vmul.f32 %v1224, %v1246
        %vm1248 = vcmp.eq.f32.partialorder %v1224, inf
        %v1249 = vsel %vm1248, %v1224, %v1247
        %vm1250 = vcmp.eq.f32.partialorder %v1224, 0.0
        %v1251 = vand.u32 %v1224, 2147483648
        %v1252 = vsel %vm1250, %v1251, %v1249
        %v1253 = vadd.f32 %v1231, 1e-06
        %v1254 = vadd.f32 %v1238, 1e-06
        %v1255 = vadd.f32 %v1245, 1e-06
        %v1256 = vadd.f32 %v1252, 1e-06
        %v1257 = vrcp.pop %v1253
        %v1258 = vrcp.pop %v1254
        %v1259 = vrcp.pop %v1255
        %v1260 = vrcp.pop %v1256
        %v1261 = vmul.f32 %v1205, %v1257
        %v1262 = vmul.f32 %v1206, %v1258
        %v1263 = vmul.f32 %v1207, %v1259
        %v1264 = vmul.f32 %v1208, %v1260
        %v1266 = vlaneseq
        %v1267 = vshrl.u32 %v1266, 7
        %v1268 = vsub.s32 0, %v1267
        %v1269 = vrot.slane %v1191, %v1268
        %v1271 = vmul.f32 %v1269, %v1261
        %v1272 = vmul.f32 %v1269, %v1262
        %v1273 = vmul.f32 %v1269, %v1263
        %v1274 = vmul.f32 %v1269, %v1264
        %v1276 = vlaneseq
        %v1277 = vshrl.u32 %v1276, 7
        %v1278 = vsub.s32 0, %v1277
        %v1279 = vrot.slane %v1192, %v1278
        %v1281 = vadd.f32 %v1271, %v1279
        %v1282 = vadd.f32 %v1272, %v1279
        %v1283 = vadd.f32 %v1273, %v1279
        %v1284 = vadd.f32 %v1274, %v1279
        %v1285 = vpack.c.bf16 %v1282, %v1281
        %v1286 = vpack.c.bf16 %v1284, %v1283
        %v1287 = vld [vmem:[#allocation7] sm:$0xff]
        %v1288 = vld [vmem:[#allocation7 + $0x8] sm:$0xff]
        %v1289 = vld [vmem:[#allocation7 + $0x10] sm:$0xff]
        %v1290 = vld [vmem:[#allocation7 + $0x18] sm:$0xff]
        %v1291 = vld [vmem:[#allocation7 + $0x20] sm:$0xff]
        %v1292 = vld [vmem:[#allocation7 + $0x28] sm:$0xff]
        %v1293 = vld [vmem:[#allocation7 + $0x30] sm:$0xff]
        %v1294 = vld [vmem:[#allocation7 + $0x38] sm:$0xff]
        %v1295 = vld [vmem:[#allocation7 + $0x40] sm:$0xff]
        %v1296 = vld [vmem:[#allocation7 + $0x48] sm:$0xff]
        %v1297 = vld [vmem:[#allocation7 + $0x50] sm:$0xff]
        %v1298 = vld [vmem:[#allocation7 + $0x58] sm:$0xff]
        %v1299 = vld [vmem:[#allocation7 + $0x60] sm:$0xff]
        %v1300 = vld [vmem:[#allocation7 + $0x68] sm:$0xff]
        %v1301 = vld [vmem:[#allocation7 + $0x70] sm:$0xff]
        %v1302 = vld [vmem:[#allocation7 + $0x78] sm:$0xff]
        %v1303 = vld [vmem:[%s14] sm:$0x3]
        %v1305 = vlaneseq
        %v1306 = vshrl.u32 %v1305, 7
        %v1307 = vsub.s32 0, %v1306
        %v1308 = vrot.slane %v1303, %v1307
        %v1309 = vlaneseq
        %v1310 = vshrl.u32 %v1309, 7
        %v1311 = vsub.s32 1, %v1310
        %v1312 = vrot.slane %v1303, %v1311
        %v1331 = vunpack.c.l.b16 %v1287
        %v1332 = vunpack.c.h.b16 %v1287
        %v1333 = vunpack.c.l.b16 %v1288
        %v1334 = vunpack.c.h.b16 %v1288
        %v1335 = vunpack.c.l.b16 %v1289
        %v1336 = vunpack.c.h.b16 %v1289
        %v1337 = vunpack.c.l.b16 %v1290
        %v1338 = vunpack.c.h.b16 %v1290
        %v1339 = vunpack.c.l.b16 %v1291
        %v1340 = vunpack.c.h.b16 %v1291
        %v1341 = vunpack.c.l.b16 %v1292
        %v1342 = vunpack.c.h.b16 %v1292
        %v1343 = vunpack.c.l.b16 %v1293
        %v1344 = vunpack.c.h.b16 %v1293
        %v1345 = vunpack.c.l.b16 %v1294
        %v1346 = vunpack.c.h.b16 %v1294
        %v1347 = vunpack.c.l.b16 %v1295
        %v1348 = vunpack.c.h.b16 %v1295
        %v1349 = vunpack.c.l.b16 %v1296
        %v1350 = vunpack.c.h.b16 %v1296
        %v1351 = vunpack.c.l.b16 %v1297
        %v1352 = vunpack.c.h.b16 %v1297
        %v1353 = vunpack.c.l.b16 %v1298
        %v1354 = vunpack.c.h.b16 %v1298
        %v1355 = vunpack.c.l.b16 %v1299
        %v1356 = vunpack.c.h.b16 %v1299
        %v1357 = vunpack.c.l.b16 %v1300
        %v1358 = vunpack.c.h.b16 %v1300
        %v1359 = vunpack.c.l.b16 %v1301
        %v1360 = vunpack.c.h.b16 %v1301
        %v1361 = vunpack.c.l.b16 %v1302
        %v1362 = vunpack.c.h.b16 %v1302
        %v1363 = vpack.c.b16 %v1333, %v1331
        %v1364 = vpack.c.b16 %v1334, %v1332
        %v1365 = vpack.c.b16 %v1337, %v1335
        %v1366 = vpack.c.b16 %v1338, %v1336
        %v1367 = vpack.c.b16 %v1341, %v1339
        %v1368 = vpack.c.b16 %v1342, %v1340
        %v1369 = vpack.c.b16 %v1345, %v1343
        %v1370 = vpack.c.b16 %v1346, %v1344
        %v1371 = vpack.c.b16 %v1349, %v1347
        %v1372 = vpack.c.b16 %v1350, %v1348
        %v1373 = vpack.c.b16 %v1353, %v1351
        %v1374 = vpack.c.b16 %v1354, %v1352
        %v1375 = vpack.c.b16 %v1357, %v1355
        %v1376 = vpack.c.b16 %v1358, %v1356
        %v1377 = vpack.c.b16 %v1361, %v1359
        %v1378 = vpack.c.b16 %v1362, %v1360
        %1395 = vmatprep.subr.bf16.mxu0 %v1378
        %1396 = vmatpush1.bf16.msra.mxu0 %v1377
        %1397 = vmatprep.subr.bf16.mxu0 %v1376
        %1398 = vmatpush1.bf16.msra.mxu0 %v1375
        %1399 = vmatprep.subr.bf16.mxu0 %v1374
        %1400 = vmatpush1.bf16.msra.mxu0 %v1373
        %1401 = vmatprep.subr.bf16.mxu0 %v1372
        %1402 = vmatpush1.bf16.msra.mxu0 %v1371
        %1403 = vmatprep.subr.bf16.mxu0 %v1370
        %1404 = vmatpush1.bf16.msra.mxu0 %v1369
        %1405 = vmatprep.subr.bf16.mxu0 %v1368
        %1406 = vmatpush1.bf16.msra.mxu0 %v1367
        %1407 = vmatprep.subr.bf16.mxu0 %v1366
        %1408 = vmatpush1.bf16.msra.mxu0 %v1365
        %1409 = vmatprep.subr.bf16.mxu0 %v1364
        %1410 = vmatpush1.bf16.msra.mxu0 %v1363
        %1411 = vmatprep.subr.bf16.mxu0 0
        %1412 = vmatpush2.bf16.msra.mxu0 0
        %1413 = vmatprep.subr.bf16.mxu0 0
        %1414 = vmatpush2.bf16.msra.mxu0 0
        %1415 = vmatprep.subr.bf16.mxu0 0
        %1416 = vmatpush2.bf16.msra.mxu0 0
        %1417 = vmatprep.subr.bf16.mxu0 0
        %1418 = vmatpush2.bf16.msra.mxu0 0
        %1419 = vmatprep.subr.bf16.mxu0 0
        %1420 = vmatpush2.bf16.msra.mxu0 0
        %1421 = vmatprep.subr.bf16.mxu0 0
        %1422 = vmatpush2.bf16.msra.mxu0 0
        %1423 = vmatprep.subr.bf16.mxu0 0
        %1424 = vmatpush2.bf16.msra.mxu0 0
        %1425 = vmatprep.subr.bf16.mxu0 0
        %1426 = vmatpush2.bf16.msra.mxu0 0
        %1427 = vmatprep.mubr.bf16.mxu0 0
        %1428 = vmatmul.mubr.bf16.gmra.mxu0 %v1285
        %v1429 = vpop.f32.mrf.mxu0
        %v1430 = vadd.f32 %v1308, %v1429
        %v1431 = vpop.f32.mrf.mxu0
        %v1432 = vadd.f32 %v1312, %v1431
        %v1433 = vpop.f32.mrf.mxu0
        %v1434 = vadd.f32 %v1308, %v1433
        %v1435 = vpop.f32.mrf.mxu0
        %v1436 = vadd.f32 %v1312, %v1435
        %1437 = vmatprep.mubr.bf16.mxu0 0
        %1438 = vmatmul.mubr.bf16.gmra.mxu0 %v1286
        %v1439 = vpop.f32.mrf.mxu0
        %v1440 = vadd.f32 %v1308, %v1439
        %v1441 = vpop.f32.mrf.mxu0
        %v1442 = vadd.f32 %v1312, %v1441
        %v1443 = vpop.f32.mrf.mxu0
        %v1444 = vadd.f32 %v1308, %v1443
        %v1445 = vpop.f32.mrf.mxu0
        %v1446 = vadd.f32 %v1312, %v1445
        %1447 = vdwg.mxu0
        %v1448 = vmax.f32 %v1430, 0.0
        %v1449 = vmax.f32 %v1432, 0.0
        %v1450 = vmax.f32 %v1434, 0.0
        %v1451 = vmax.f32 %v1436, 0.0
        %v1452 = vmax.f32 %v1440, 0.0
        %v1453 = vmax.f32 %v1442, 0.0
        %v1454 = vmax.f32 %v1444, 0.0
        %v1455 = vmax.f32 %v1446, 0.0
        %v1456 = vpack.c.bf16 %v1450, %v1448
        %v1457 = vpack.c.bf16 %v1451, %v1449
        %v1458 = vpack.c.bf16 %v1454, %v1452
        %v1459 = vpack.c.bf16 %v1455, %v1453
        %v1460 = vld [vmem:[#allocation8] sm:$0xf]
        %v1461 = vld [vmem:[#allocation8 + $0x4] sm:$0xf]
        %v1462 = vld [vmem:[#allocation8 + $0x8] sm:$0xf]
        %v1463 = vld [vmem:[#allocation8 + $0xc] sm:$0xf]
        %v1464 = vld [vmem:[#allocation8 + $0x10] sm:$0xf]
        %v1465 = vld [vmem:[#allocation8 + $0x14] sm:$0xf]
        %v1466 = vld [vmem:[#allocation8 + $0x18] sm:$0xf]
        %v1467 = vld [vmem:[#allocation8 + $0x1c] sm:$0xf]
        %v1468 = vld [vmem:[#allocation8 + $0x20] sm:$0xf]
        %v1469 = vld [vmem:[#allocation8 + $0x24] sm:$0xf]
        %v1470 = vld [vmem:[#allocation8 + $0x28] sm:$0xf]
        %v1471 = vld [vmem:[#allocation8 + $0x2c] sm:$0xf]
        %v1472 = vld [vmem:[#allocation8 + $0x30] sm:$0xf]
        %v1473 = vld [vmem:[#allocation8 + $0x34] sm:$0xf]
        %v1474 = vld [vmem:[#allocation8 + $0x38] sm:$0xf]
        %v1475 = vld [vmem:[#allocation8 + $0x3c] sm:$0xf]
        %v1476 = vld [vmem:[#allocation8 + $0x40] sm:$0xf]
        %v1477 = vld [vmem:[#allocation8 + $0x44] sm:$0xf]
        %v1478 = vld [vmem:[#allocation8 + $0x48] sm:$0xf]
        %v1479 = vld [vmem:[#allocation8 + $0x4c] sm:$0xf]
        %v1480 = vld [vmem:[#allocation8 + $0x50] sm:$0xf]
        %v1481 = vld [vmem:[#allocation8 + $0x54] sm:$0xf]
        %v1482 = vld [vmem:[#allocation8 + $0x58] sm:$0xf]
        %v1483 = vld [vmem:[#allocation8 + $0x5c] sm:$0xf]
        %v1484 = vld [vmem:[#allocation8 + $0x60] sm:$0xf]
        %v1485 = vld [vmem:[#allocation8 + $0x64] sm:$0xf]
        %v1486 = vld [vmem:[#allocation8 + $0x68] sm:$0xf]
        %v1487 = vld [vmem:[#allocation8 + $0x6c] sm:$0xf]
        %v1488 = vld [vmem:[#allocation8 + $0x70] sm:$0xf]
        %v1489 = vld [vmem:[#allocation8 + $0x74] sm:$0xf]
        %v1490 = vld [vmem:[#allocation8 + $0x78] sm:$0xf]
        %v1491 = vld [vmem:[#allocation8 + $0x7c] sm:$0xf]
        %s1492 = scalar_lea.vmem [#allocation7], 128
        %v1493 = vld [vmem:[%s1492] sm:$0xff]
        %v1494 = vld [vmem:[%s1492 + $0x8] sm:$0xff]
        %v1495 = vld [vmem:[%s1492 + $0x10] sm:$0xff]
        %v1496 = vld [vmem:[%s1492 + $0x18] sm:$0xff]
        %v1497 = vld [vmem:[%s1492 + $0x20] sm:$0xff]
        %v1498 = vld [vmem:[%s1492 + $0x28] sm:$0xff]
        %v1499 = vld [vmem:[%s1492 + $0x30] sm:$0xff]
        %v1500 = vld [vmem:[%s1492 + $0x38] sm:$0xff]
        %v1501 = vld [vmem:[%s1492 + $0x40] sm:$0xff]
        %v1502 = vld [vmem:[%s1492 + $0x48] sm:$0xff]
        %v1503 = vld [vmem:[%s1492 + $0x50] sm:$0xff]
        %v1504 = vld [vmem:[%s1492 + $0x58] sm:$0xff]
        %v1505 = vld [vmem:[%s1492 + $0x60] sm:$0xff]
        %v1506 = vld [vmem:[%s1492 + $0x68] sm:$0xff]
        %v1507 = vld [vmem:[%s1492 + $0x70] sm:$0xff]
        %v1508 = vld [vmem:[%s1492 + $0x78] sm:$0xff]
        %s1509 = scalar_lea.vmem %s14, 2
        %v1510 = vld [vmem:[%s1509] sm:$0x3]
        %v1512 = vlaneseq
        %v1513 = vshrl.u32 %v1512, 7
        %v1514 = vsub.s32 0, %v1513
        %v1515 = vrot.slane %v1510, %v1514
        %v1516 = vlaneseq
        %v1517 = vshrl.u32 %v1516, 7
        %v1518 = vsub.s32 1, %v1517
        %v1519 = vrot.slane %v1510, %v1518
        %v1538 = vunpack.c.l.b16 %v1493
        %v1539 = vunpack.c.h.b16 %v1493
        %v1540 = vunpack.c.l.b16 %v1494
        %v1541 = vunpack.c.h.b16 %v1494
        %v1542 = vunpack.c.l.b16 %v1495
        %v1543 = vunpack.c.h.b16 %v1495
        %v1544 = vunpack.c.l.b16 %v1496
        %v1545 = vunpack.c.h.b16 %v1496
        %v1546 = vunpack.c.l.b16 %v1497
        %v1547 = vunpack.c.h.b16 %v1497
        %v1548 = vunpack.c.l.b16 %v1498
        %v1549 = vunpack.c.h.b16 %v1498
        %v1550 = vunpack.c.l.b16 %v1499
        %v1551 = vunpack.c.h.b16 %v1499
        %v1552 = vunpack.c.l.b16 %v1500
        %v1553 = vunpack.c.h.b16 %v1500
        %v1554 = vunpack.c.l.b16 %v1501
        %v1555 = vunpack.c.h.b16 %v1501
        %v1556 = vunpack.c.l.b16 %v1502
        %v1557 = vunpack.c.h.b16 %v1502
        %v1558 = vunpack.c.l.b16 %v1503
        %v1559 = vunpack.c.h.b16 %v1503
        %v1560 = vunpack.c.l.b16 %v1504
        %v1561 = vunpack.c.h.b16 %v1504
        %v1562 = vunpack.c.l.b16 %v1505
        %v1563 = vunpack.c.h.b16 %v1505
        %v1564 = vunpack.c.l.b16 %v1506
        %v1565 = vunpack.c.h.b16 %v1506
        %v1566 = vunpack.c.l.b16 %v1507
        %v1567 = vunpack.c.h.b16 %v1507
        %v1568 = vunpack.c.l.b16 %v1508
        %v1569 = vunpack.c.h.b16 %v1508
        %v1570 = vpack.c.b16 %v1540, %v1538
        %v1571 = vpack.c.b16 %v1541, %v1539
        %v1572 = vpack.c.b16 %v1544, %v1542
        %v1573 = vpack.c.b16 %v1545, %v1543
        %v1574 = vpack.c.b16 %v1548, %v1546
        %v1575 = vpack.c.b16 %v1549, %v1547
        %v1576 = vpack.c.b16 %v1552, %v1550
        %v1577 = vpack.c.b16 %v1553, %v1551
        %v1578 = vpack.c.b16 %v1556, %v1554
        %v1579 = vpack.c.b16 %v1557, %v1555
        %v1580 = vpack.c.b16 %v1560, %v1558
        %v1581 = vpack.c.b16 %v1561, %v1559
        %v1582 = vpack.c.b16 %v1564, %v1562
        %v1583 = vpack.c.b16 %v1565, %v1563
        %v1584 = vpack.c.b16 %v1568, %v1566
        %v1585 = vpack.c.b16 %v1569, %v1567
        %1602 = vmatprep.subr.bf16.mxu0 %v1585
        %1603 = vmatpush1.bf16.msra.mxu0 %v1584
        %1604 = vmatprep.subr.bf16.mxu0 %v1583
        %1605 = vmatpush1.bf16.msra.mxu0 %v1582
        %1606 = vmatprep.subr.bf16.mxu0 %v1581
        %1607 = vmatpush1.bf16.msra.mxu0 %v1580
        %1608 = vmatprep.subr.bf16.mxu0 %v1579
        %1609 = vmatpush1.bf16.msra.mxu0 %v1578
        %1610 = vmatprep.subr.bf16.mxu0 %v1577
        %1611 = vmatpush1.bf16.msra.mxu0 %v1576
        %1612 = vmatprep.subr.bf16.mxu0 %v1575
        %1613 = vmatpush1.bf16.msra.mxu0 %v1574
        %1614 = vmatprep.subr.bf16.mxu0 %v1573
        %1615 = vmatpush1.bf16.msra.mxu0 %v1572
        %1616 = vmatprep.subr.bf16.mxu0 %v1571
        %1617 = vmatpush1.bf16.msra.mxu0 %v1570
        %1618 = vmatprep.subr.bf16.mxu0 0
        %1619 = vmatpush2.bf16.msra.mxu0 0
        %1620 = vmatprep.subr.bf16.mxu0 0
        %1621 = vmatpush2.bf16.msra.mxu0 0
        %1622 = vmatprep.subr.bf16.mxu0 0
        %1623 = vmatpush2.bf16.msra.mxu0 0
        %1624 = vmatprep.subr.bf16.mxu0 0
        %1625 = vmatpush2.bf16.msra.mxu0 0
        %1626 = vmatprep.subr.bf16.mxu0 0
        %1627 = vmatpush2.bf16.msra.mxu0 0
        %1628 = vmatprep.subr.bf16.mxu0 0
        %1629 = vmatpush2.bf16.msra.mxu0 0
        %1630 = vmatprep.subr.bf16.mxu0 0
        %1631 = vmatpush2.bf16.msra.mxu0 0
        %1632 = vmatprep.subr.bf16.mxu0 0
        %1633 = vmatpush2.bf16.msra.mxu0 0
        %1634 = vmatprep.mubr.bf16.mxu0 0
        %1635 = vmatmul.mubr.bf16.gmra.mxu0 %v1285
        %v1636 = vpop.f32.mrf.mxu0
        %v1637 = vadd.f32 %v1515, %v1636
        %v1638 = vpop.f32.mrf.mxu0
        %v1639 = vadd.f32 %v1519, %v1638
        %v1640 = vpop.f32.mrf.mxu0
        %v1641 = vadd.f32 %v1515, %v1640
        %v1642 = vpop.f32.mrf.mxu0
        %v1643 = vadd.f32 %v1519, %v1642
        %1644 = vmatprep.mubr.bf16.mxu0 0
        %1645 = vmatmul.mubr.bf16.gmra.mxu0 %v1286
        %v1646 = vpop.f32.mrf.mxu0
        %v1647 = vadd.f32 %v1515, %v1646
        %v1648 = vpop.f32.mrf.mxu0
        %v1649 = vadd.f32 %v1519, %v1648
        %v1650 = vpop.f32.mrf.mxu0
        %v1651 = vadd.f32 %v1515, %v1650
        %v1652 = vpop.f32.mrf.mxu0
        %v1653 = vadd.f32 %v1519, %v1652
        %1654 = vdwg.mxu0
        %v1655 = vmax.f32 %v1637, 0.0
        %v1656 = vmax.f32 %v1639, 0.0
        %v1657 = vmax.f32 %v1641, 0.0
        %v1658 = vmax.f32 %v1643, 0.0
        %v1659 = vmax.f32 %v1647, 0.0
        %v1660 = vmax.f32 %v1649, 0.0
        %v1661 = vmax.f32 %v1651, 0.0
        %v1662 = vmax.f32 %v1653, 0.0
        %v1663 = vpack.c.bf16 %v1657, %v1655
        %v1664 = vpack.c.bf16 %v1658, %v1656
        %v1665 = vpack.c.bf16 %v1661, %v1659
        %v1666 = vpack.c.bf16 %v1662, %v1660
        %s1667 = scalar_lea.vmem [#allocation8], 128
        %v1668 = vld [vmem:[%s1667] sm:$0xf]
        %v1669 = vld [vmem:[%s1667 + $0x4] sm:$0xf]
        %v1670 = vld [vmem:[%s1667 + $0x8] sm:$0xf]
        %v1671 = vld [vmem:[%s1667 + $0xc] sm:$0xf]
        %v1672 = vld [vmem:[%s1667 + $0x10] sm:$0xf]
        %v1673 = vld [vmem:[%s1667 + $0x14] sm:$0xf]
        %v1674 = vld [vmem:[%s1667 + $0x18] sm:$0xf]
        %v1675 = vld [vmem:[%s1667 + $0x1c] sm:$0xf]
        %v1676 = vld [vmem:[%s1667 + $0x20] sm:$0xf]
        %v1677 = vld [vmem:[%s1667 + $0x24] sm:$0xf]
        %v1678 = vld [vmem:[%s1667 + $0x28] sm:$0xf]
        %v1679 = vld [vmem:[%s1667 + $0x2c] sm:$0xf]
        %v1680 = vld [vmem:[%s1667 + $0x30] sm:$0xf]
        %v1681 = vld [vmem:[%s1667 + $0x34] sm:$0xf]
        %v1682 = vld [vmem:[%s1667 + $0x38] sm:$0xf]
        %v1683 = vld [vmem:[%s1667 + $0x3c] sm:$0xf]
        %v1684 = vld [vmem:[%s1667 + $0x40] sm:$0xf]
        %v1685 = vld [vmem:[%s1667 + $0x44] sm:$0xf]
        %v1686 = vld [vmem:[%s1667 + $0x48] sm:$0xf]
        %v1687 = vld [vmem:[%s1667 + $0x4c] sm:$0xf]
        %v1688 = vld [vmem:[%s1667 + $0x50] sm:$0xf]
        %v1689 = vld [vmem:[%s1667 + $0x54] sm:$0xf]
        %v1690 = vld [vmem:[%s1667 + $0x58] sm:$0xf]
        %v1691 = vld [vmem:[%s1667 + $0x5c] sm:$0xf]
        %v1692 = vld [vmem:[%s1667 + $0x60] sm:$0xf]
        %v1693 = vld [vmem:[%s1667 + $0x64] sm:$0xf]
        %v1694 = vld [vmem:[%s1667 + $0x68] sm:$0xf]
        %v1695 = vld [vmem:[%s1667 + $0x6c] sm:$0xf]
        %v1696 = vld [vmem:[%s1667 + $0x70] sm:$0xf]
        %v1697 = vld [vmem:[%s1667 + $0x74] sm:$0xf]
        %v1698 = vld [vmem:[%s1667 + $0x78] sm:$0xf]
        %v1699 = vld [vmem:[%s1667 + $0x7c] sm:$0xf]
        %v1732 = vunpack.c.l.b16 %v1668
        %v1733 = vunpack.c.l.b16 %v1669
        %v1734 = vunpack.c.l.b16 %v1670
        %v1735 = vunpack.c.l.b16 %v1671
        %v1736 = vunpack.c.l.b16 %v1672
        %v1737 = vunpack.c.l.b16 %v1673
        %v1738 = vunpack.c.l.b16 %v1674
        %v1739 = vunpack.c.l.b16 %v1675
        %v1740 = vunpack.c.l.b16 %v1676
        %v1741 = vunpack.c.l.b16 %v1677
        %v1742 = vunpack.c.l.b16 %v1678
        %v1743 = vunpack.c.l.b16 %v1679
        %v1744 = vunpack.c.l.b16 %v1680
        %v1745 = vunpack.c.l.b16 %v1681
        %v1746 = vunpack.c.l.b16 %v1682
        %v1747 = vunpack.c.l.b16 %v1683
        %v1748 = vunpack.c.l.b16 %v1684
        %v1749 = vunpack.c.l.b16 %v1685
        %v1750 = vunpack.c.l.b16 %v1686
        %v1751 = vunpack.c.l.b16 %v1687
        %v1752 = vunpack.c.l.b16 %v1688
        %v1753 = vunpack.c.l.b16 %v1689
        %v1754 = vunpack.c.l.b16 %v1690
        %v1755 = vunpack.c.l.b16 %v1691
        %v1756 = vunpack.c.l.b16 %v1692
        %v1757 = vunpack.c.l.b16 %v1693
        %v1758 = vunpack.c.l.b16 %v1694
        %v1759 = vunpack.c.l.b16 %v1695
        %v1760 = vunpack.c.l.b16 %v1696
        %v1761 = vunpack.c.l.b16 %v1697
        %v1762 = vunpack.c.l.b16 %v1698
        %v1763 = vunpack.c.l.b16 %v1699
        %v1764 = vpack.c.b16 %v1733, %v1732
        %v1765 = vpack.c.b16 %v1735, %v1734
        %v1766 = vpack.c.b16 %v1737, %v1736
        %v1767 = vpack.c.b16 %v1739, %v1738
        %v1768 = vpack.c.b16 %v1741, %v1740
        %v1769 = vpack.c.b16 %v1743, %v1742
        %v1770 = vpack.c.b16 %v1745, %v1744
        %v1771 = vpack.c.b16 %v1747, %v1746
        %v1772 = vpack.c.b16 %v1749, %v1748
        %v1773 = vpack.c.b16 %v1751, %v1750
        %v1774 = vpack.c.b16 %v1753, %v1752
        %v1775 = vpack.c.b16 %v1755, %v1754
        %v1776 = vpack.c.b16 %v1757, %v1756
        %v1777 = vpack.c.b16 %v1759, %v1758
        %v1778 = vpack.c.b16 %v1761, %v1760
        %v1779 = vpack.c.b16 %v1763, %v1762
        %1796 = vmatprep.subr.bf16.mxu0 0
        %1797 = vmatpush1.bf16.msra.mxu0 %v1771
        %1798 = vmatprep.subr.bf16.mxu0 0
        %1799 = vmatpush1.bf16.msra.mxu0 %v1770
        %1800 = vmatprep.subr.bf16.mxu0 0
        %1801 = vmatpush1.bf16.msra.mxu0 %v1769
        %1802 = vmatprep.subr.bf16.mxu0 0
        %1803 = vmatpush1.bf16.msra.mxu0 %v1768
        %1804 = vmatprep.subr.bf16.mxu0 0
        %1805 = vmatpush1.bf16.msra.mxu0 %v1767
        %1806 = vmatprep.subr.bf16.mxu0 0
        %1807 = vmatpush1.bf16.msra.mxu0 %v1766
        %1808 = vmatprep.subr.bf16.mxu0 0
        %1809 = vmatpush1.bf16.msra.mxu0 %v1765
        %1810 = vmatprep.subr.bf16.mxu0 0
        %1811 = vmatpush1.bf16.msra.mxu0 %v1764
        %1812 = vmatprep.subr.bf16.mxu0 0
        %1813 = vmatpush2.bf16.msra.mxu0 %v1779
        %1814 = vmatprep.subr.bf16.mxu0 0
        %1815 = vmatpush2.bf16.msra.mxu0 %v1778
        %1816 = vmatprep.subr.bf16.mxu0 0
        %1817 = vmatpush2.bf16.msra.mxu0 %v1777
        %1818 = vmatprep.subr.bf16.mxu0 0
        %1819 = vmatpush2.bf16.msra.mxu0 %v1776
        %1820 = vmatprep.subr.bf16.mxu0 0
        %1821 = vmatpush2.bf16.msra.mxu0 %v1775
        %1822 = vmatprep.subr.bf16.mxu0 0
        %1823 = vmatpush2.bf16.msra.mxu0 %v1774
        %1824 = vmatprep.subr.bf16.mxu0 0
        %1825 = vmatpush2.bf16.msra.mxu0 %v1773
        %1826 = vmatprep.subr.bf16.mxu0 0
        %1827 = vmatpush2.bf16.msra.mxu0 %v1772
        %1828 = vmatprep.mubr.bf16.mxu0 %v1664
        %1829 = vmatmul.mubr.bf16.gmra.mxu0 %v1663
        %v1830 = vpop.f32.mrf.mxu0
        %v1831 = vadd.f32 0.0, %v1830
        %v1832 = vpop.f32.mrf.mxu0
        %v1833 = vpop.f32.mrf.mxu0
        %v1834 = vadd.f32 0.0, %v1833
        %v1835 = vpop.f32.mrf.mxu0
        %1836 = vmatprep.mubr.bf16.mxu0 %v1666
        %1837 = vmatmul.mubr.bf16.gmra.mxu0 %v1665
        %v1838 = vpop.f32.mrf.mxu0
        %v1839 = vadd.f32 0.0, %v1838
        %v1840 = vpop.f32.mrf.mxu0
        %v1841 = vpop.f32.mrf.mxu0
        %v1842 = vadd.f32 0.0, %v1841
        %v1843 = vpop.f32.mrf.mxu0
        %1844 = vdwg.mxu0
        %v1877 = vunpack.c.l.b16 %v1460
        %v1878 = vunpack.c.l.b16 %v1461
        %v1879 = vunpack.c.l.b16 %v1462
        %v1880 = vunpack.c.l.b16 %v1463
        %v1881 = vunpack.c.l.b16 %v1464
        %v1882 = vunpack.c.l.b16 %v1465
        %v1883 = vunpack.c.l.b16 %v1466
        %v1884 = vunpack.c.l.b16 %v1467
        %v1885 = vunpack.c.l.b16 %v1468
        %v1886 = vunpack.c.l.b16 %v1469
        %v1887 = vunpack.c.l.b16 %v1470
        %v1888 = vunpack.c.l.b16 %v1471
        %v1889 = vunpack.c.l.b16 %v1472
        %v1890 = vunpack.c.l.b16 %v1473
        %v1891 = vunpack.c.l.b16 %v1474
        %v1892 = vunpack.c.l.b16 %v1475
        %v1893 = vunpack.c.l.b16 %v1476
        %v1894 = vunpack.c.l.b16 %v1477
        %v1895 = vunpack.c.l.b16 %v1478
        %v1896 = vunpack.c.l.b16 %v1479
        %v1897 = vunpack.c.l.b16 %v1480
        %v1898 = vunpack.c.l.b16 %v1481
        %v1899 = vunpack.c.l.b16 %v1482
        %v1900 = vunpack.c.l.b16 %v1483
        %v1901 = vunpack.c.l.b16 %v1484
        %v1902 = vunpack.c.l.b16 %v1485
        %v1903 = vunpack.c.l.b16 %v1486
        %v1904 = vunpack.c.l.b16 %v1487
        %v1905 = vunpack.c.l.b16 %v1488
        %v1906 = vunpack.c.l.b16 %v1489
        %v1907 = vunpack.c.l.b16 %v1490
        %v1908 = vunpack.c.l.b16 %v1491
        %v1909 = vpack.c.b16 %v1878, %v1877
        %v1910 = vpack.c.b16 %v1880, %v1879
        %v1911 = vpack.c.b16 %v1882, %v1881
        %v1912 = vpack.c.b16 %v1884, %v1883
        %v1913 = vpack.c.b16 %v1886, %v1885
        %v1914 = vpack.c.b16 %v1888, %v1887
        %v1915 = vpack.c.b16 %v1890, %v1889
        %v1916 = vpack.c.b16 %v1892, %v1891
        %v1917 = vpack.c.b16 %v1894, %v1893
        %v1918 = vpack.c.b16 %v1896, %v1895
        %v1919 = vpack.c.b16 %v1898, %v1897
        %v1920 = vpack.c.b16 %v1900, %v1899
        %v1921 = vpack.c.b16 %v1902, %v1901
        %v1922 = vpack.c.b16 %v1904, %v1903
        %v1923 = vpack.c.b16 %v1906, %v1905
        %v1924 = vpack.c.b16 %v1908, %v1907
        %1941 = vmatprep.subr.bf16.mxu0 0
        %1942 = vmatpush1.bf16.msra.mxu0 %v1916
        %1943 = vmatprep.subr.bf16.mxu0 0
        %1944 = vmatpush1.bf16.msra.mxu0 %v1915
        %1945 = vmatprep.subr.bf16.mxu0 0
        %1946 = vmatpush1.bf16.msra.mxu0 %v1914
        %1947 = vmatprep.subr.bf16.mxu0 0
        %1948 = vmatpush1.bf16.msra.mxu0 %v1913
        %1949 = vmatprep.subr.bf16.mxu0 0
        %1950 = vmatpush1.bf16.msra.mxu0 %v1912
        %1951 = vmatprep.subr.bf16.mxu0 0
        %1952 = vmatpush1.bf16.msra.mxu0 %v1911
        %1953 = vmatprep.subr.bf16.mxu0 0
        %1954 = vmatpush1.bf16.msra.mxu0 %v1910
        %1955 = vmatprep.subr.bf16.mxu0 0
        %1956 = vmatpush1.bf16.msra.mxu0 %v1909
        %1957 = vmatprep.subr.bf16.mxu0 0
        %1958 = vmatpush2.bf16.msra.mxu0 %v1924
        %1959 = vmatprep.subr.bf16.mxu0 0
        %1960 = vmatpush2.bf16.msra.mxu0 %v1923
        %1961 = vmatprep.subr.bf16.mxu0 0
        %1962 = vmatpush2.bf16.msra.mxu0 %v1922
        %1963 = vmatprep.subr.bf16.mxu0 0
        %1964 = vmatpush2.bf16.msra.mxu0 %v1921
        %1965 = vmatprep.subr.bf16.mxu0 0
        %1966 = vmatpush2.bf16.msra.mxu0 %v1920
        %1967 = vmatprep.subr.bf16.mxu0 0
        %1968 = vmatpush2.bf16.msra.mxu0 %v1919
        %1969 = vmatprep.subr.bf16.mxu0 0
        %1970 = vmatpush2.bf16.msra.mxu0 %v1918
        %1971 = vmatprep.subr.bf16.mxu0 0
        %1972 = vmatpush2.bf16.msra.mxu0 %v1917
        %1973 = vmatprep.mubr.bf16.mxu0 %v1457
        %1974 = vmatmul.mubr.bf16.gmra.mxu0 %v1456
        %v1975 = vpop.f32.mrf.mxu0
        %v1976 = vadd.f32 %v1831, %v1975
        %v1977 = vpop.f32.mrf.mxu0
        %v1978 = vpop.f32.mrf.mxu0
        %v1979 = vadd.f32 %v1834, %v1978
        %v1980 = vpop.f32.mrf.mxu0
        %1981 = vmatprep.mubr.bf16.mxu0 %v1459
        %1982 = vmatmul.mubr.bf16.gmra.mxu0 %v1458
        %v1983 = vpop.f32.mrf.mxu0
        %v1984 = vadd.f32 %v1839, %v1983
        %v1985 = vpop.f32.mrf.mxu0
        %v1986 = vpop.f32.mrf.mxu0
        %v1987 = vadd.f32 %v1842, %v1986
        %v1988 = vpop.f32.mrf.mxu0
        %1989 = vdwg.mxu0
        %v1990 = vadd.f32 %v1187, %v1976
        %v1991 = vadd.f32 %v1188, %v1979
        %v1992 = vadd.f32 %v1189, %v1984
        %v1993 = vadd.f32 %v1190, %v1987
        %v1994 = vld [vmem:[%s16] sm:$0x1]
        %v1996 = vlaneseq
        %v1997 = vshrl.u32 %v1996, 7
        %v1998 = vsub.s32 0, %v1997
        %v1999 = vrot.slane %v1994, %v1998
        %v2001 = vadd.f32 %v1990, %v1999
        %v2002 = vadd.f32 %v1991, %v1999
        %v2003 = vadd.f32 %v1992, %v1999
        %v2004 = vadd.f32 %v1993, %v1999
        %2005 = vst [vmem:[%s626] sm:$0xff] %v2001
        %2006 = vst [vmem:[%s626 + $0x8] sm:$0xff] %v2002
        %2007 = vst [vmem:[%s626 + $0x10] sm:$0xff] %v2003
        %2008 = vst [vmem:[%s626 + $0x18] sm:$0xff] %v2004
        %s2009 = sand.u32 %s411, 1
        %s2010 = scalar_lea.sflag [#allocation4], %s2009
        %s2011 = sand.u32 %s411, 1
        %s2012 = smul.addr %s2011, 32
        %s2013 = scalar_lea.vmem [#allocation10], %s2012
        // Predicated region
        $region105: #{tpu_custom_call.1} parent=87 // pred_check
          %p2014 = pneg %p421
        $region106: #{tpu_custom_call.1} parent=87 // pred_check_branch
          %2016 = sbr.rel (%p2014) target = $region108
        $region107: #{tpu_custom_call.1} parent=87 // pred_region
          %s2017 = smul.u32 4, %s36
          %s2019 = ssub.s32 512, 512
          %2020 = vsyncadd %s2010, %s2019
          %s2021 = smul.addr %s2017, 128
          %s2022 = scalar_lea.hbm %s17, %s2021
          %s2023 = sshll.u32 %s2013, 4
          %s2024 = int_to_ptr.vmem [resolvable:$true] %s2023
          %2029 = dma.vmem_to_hbm [thread:$0]  %s2024, 512, %s2022, %s2010, 128, 128, 8
        $region108: #{tpu_custom_call.1} parent=87 // pred_fallthru
          _
      $region88: #{tpu_custom_call.1} parent=5 // pred_fallthru
        _
      %p2030 = scmp.le.s32.totalorder 2, %s31
      // Predicated region
      $region109: #{tpu_custom_call.1} parent=5 // pred_check
        %p2031 = pneg %p2030
      $region110: #{tpu_custom_call.1} parent=5 // pred_check_branch
        %2033 = sbr.rel (%p2031) target = $region112
      $region111: #{tpu_custom_call.1} parent=5 // pred_region
        %s2034 = ssub.s32 %s31, 2
        // Predicated region
        $region113: #{tpu_custom_call.1} parent=111 // pred_check
          %p2035 = pneg %p427
        $region114: #{tpu_custom_call.1} parent=111 // pred_check_branch
          %2037 = sbr.rel (%p2035) target = $region116
        $region115: #{tpu_custom_call.1} parent=111 // pred_region
          %s2038 = sand.u32 %s412, 1
          %s2039 = scalar_lea.sflag [#allocation4], %s2038
          %s2040 = sand.u32 %s412, 1
          %s2041 = smul.addr %s2040, 32
          %s2042 = scalar_lea.vmem [#allocation10], %s2041
          %2043 = dma.done %s2039, 512
        $region116: #{tpu_custom_call.1} parent=111 // pred_fallthru
          _
      $region112: #{tpu_custom_call.1} parent=5 // pred_fallthru
        _
    $region6: #{tpu_custom_call.1} parent=1 // loop_footer
      %s35 = sadd.s32 1, %s31
    $region7: #{tpu_custom_call.1} parent=1 // loop_footer_branch
      %30 = sbr.rel target = $region3
    $region8: #{tpu_custom_call.1} parent=1 // loop_exit
      _
    %2044 = vsyncpa [#allocation3], 1
    %s2045 = scalar_lea.sflag [#allocation3], 1
    %2046 = vsyncpa %s2045, 1
    %2047 = vsyncpa [#allocation6], 1
    %2048 = vsyncpa [#allocation9], 1
    %2049 = vsyncpa [#allocation4], 1
    %s2050 = scalar_lea.sflag [#allocation4], 1
    %2051 = vsyncpa %s2050, 1

// kernel: tpu_custom_call.1
$region0: #{tpu_custom_call.1}
  #allocation0 [shape = 'u32[]', space=smem, size = 0x4, offset = 0x4, fixed_abs, tag = 'smem constant byte address 0x4 - core index']
  #allocation1 [shape = 'u32[144,128]{1,0:T(1,128)}', space=vmem, size = 0x12000, scoped, tag = 'internal scratch']
  %s0 = inlined_call_operand.hbm [shape: f32[64,128], index: 0, kind: input, shape index: {}]
  %s1 = inlined_call_operand.vmem [shape: f32[64,1], index: 1, kind: input, shape index: {}]
  %s2 = inlined_call_operand.vmem [shape: f32[32,1], index: 2, kind: input, shape index: {}]
  %s3 = inlined_call_operand.vmem [shape: f32[32,1], index: 3, kind: input, shape index: {}]
  %s4 = inlined_call_operand.vmem [shape: f32[1,128], index: 4, kind: input, shape index: {}]
  %s5 = inlined_call_operand.vmem [shape: f32[1,128], index: 5, kind: input, shape index: {}]
  %s6 = inlined_call_operand.vmem [shape: bf16[128,256], index: 6, kind: input, shape index: {}]
  %s7 = inlined_call_operand.vmem [shape: f32[1,256], index: 7, kind: input, shape index: {}]
  %s8 = inlined_call_operand.vmem [shape: f32[3,128], index: 8, kind: input, shape index: {}]
  %s9 = inlined_call_operand.hbm [shape: bf16[128,128], index: 9, kind: input, shape index: {}]
  %s10 = inlined_call_operand.vmem [shape: f32[1,128], index: 10, kind: input, shape index: {}]
  %s11 = inlined_call_operand.vmem [shape: f32[1,128], index: 11, kind: input, shape index: {}]
  %s12 = inlined_call_operand.vmem [shape: f32[1,128], index: 12, kind: input, shape index: {}]
  %s13 = inlined_call_operand.hbm [shape: bf16[2,128,256], index: 13, kind: input, shape index: {}]
  %s14 = inlined_call_operand.vmem [shape: f32[2,1,256], index: 14, kind: input, shape index: {}]
  %s15 = inlined_call_operand.hbm [shape: bf16[2,256,128], index: 15, kind: input, shape index: {}]
  %s16 = inlined_call_operand.vmem [shape: f32[1,128], index: 16, kind: input, shape index: {}]
  %s17 = inlined_call_operand.hbm [shape: f32[64,128], index: 17, kind: output, shape index: {}]
  %s18 = sld [smem:[#allocation0]]
  $region117: #{tpu_custom_call.1} parent=0
    _
  %s20 = ssub.s32 1, %s18
  %s21 = scalar_select 0, %s20, %s18
  $region1: #{tpu_custom_call.1} parent=0
    #allocation2 [shape = 'u8[32768]{0}', space=vmem, size = 0x8000, scoped, tag = 'input window, operand 0']
    #allocation3 [shape = 's32[2]{0}', space=sflag, size = 0x8, scoped, tag = 'scoped memory for tpu_custom_call.1']
    #allocation4 [shape = 's32[2]{0}', space=sflag, size = 0x8, scoped, tag = 'scoped memory for tpu_custom_call.1']
    #allocation5 [shape = 'u8[32768]{0}', space=vmem, size = 0x8000, scoped, tag = 'input window, operand 9, single buffered']
    #allocation6 [shape = 's32[1]{0}', space=sflag, size = 0x4, scoped, tag = 'scoped memory for tpu_custom_call.1']
    #allocation7 [shape = 'u8[131072]{0}', space=vmem, size = 0x20000, scoped, tag = 'input window, operand 13, single buffered']
    #allocation8 [shape = 'u8[131072]{0}', space=vmem, size = 0x20000, scoped, tag = 'input window, operand 15, single buffered']
    #allocation9 [shape = 's32[1]{0}', space=sflag, size = 0x4, scoped, tag = 'scoped memory for tpu_custom_call.1']
    #allocation10 [shape = 'u8[32768]{0}', space=vmem, size = 0x8000, scoped, tag = 'output window, operand 0']
    %22 = vsyncpa [#allocation3], 0
    %s23 = scalar_lea.sflag [#allocation3], 1
    %24 = vsyncpa %s23, 0
    %25 = vsyncpa [#allocation6], 0
    %26 = vsyncpa [#allocation9], 0
    %27 = vsyncpa [#allocation4], 0
    %s28 = scalar_lea.sflag [#allocation4], 1
    %29 = vsyncpa %s28, 0
    loop: start=0, step=1, limit=4
    $region2: #{tpu_custom_call.1} parent=1 // loop_pre_header
      _
    $region3: #{tpu_custom_call.1} parent=1 // loop_header
      %s31 = sphi 0, %s35
      %p32 = scmp.ge.s32.totalorder %s31, 4
      %s41 = sphi 0, %s43
      %s44 = sphi 0, %s41
      %s45 = sphi 0, %s44
      %s61 = sphi 0, %s45
      %s67 = sphi 0, %s69
      %s70 = sphi 0, %s67
      %s71 = sphi 0, %s70
      %s87 = sphi 0, %s71
      %s91 = sphi 0, %s91
      %s93 = sphi 0, %s91
      %s94 = sphi 0, %s93
      %s108 = sphi 0, %s94
      %s112 = sphi 0, %s112
      %s114 = sphi 0, %s112
      %s115 = sphi 0, %s114
      %s129 = sphi 0, %s115
      %s133 = sphi 0, %s133
      %s135 = sphi 0, %s133
      %s136 = sphi 0, %s135
      %s150 = sphi 0, %s136
      %s154 = sphi 0, %s154
      %s156 = sphi 0, %s154
      %s157 = sphi 0, %s156
      %s171 = sphi 0, %s157
      %s175 = sphi 0, %s175
      %s177 = sphi 0, %s175
      %s178 = sphi 0, %s177
      %s192 = sphi 0, %s178
      %s196 = sphi 0, %s196
      %s198 = sphi 0, %s196
      %s199 = sphi 0, %s198
      %s213 = sphi 0, %s199
      %s217 = sphi 0, %s217
      %s219 = sphi 0, %s217
      %s220 = sphi 0, %s219
      %s234 = sphi 0, %s220
      %s238 = sphi 0, %s238
      %s240 = sphi 0, %s238
      %s241 = sphi 0, %s240
      %s255 = sphi 0, %s241
      %s259 = sphi 0, %s259
      %s261 = sphi 0, %s259
      %s262 = sphi 0, %s261
      %s276 = sphi 0, %s262
      %s280 = sphi 0, %s280
      %s282 = sphi 0, %s280
      %s283 = sphi 0, %s282
      %s297 = sphi 0, %s283
      %s301 = sphi 0, %s301
      %s303 = sphi 0, %s301
      %s304 = sphi 0, %s303
      %s318 = sphi 0, %s304
      %s322 = sphi 0, %s322
      %s324 = sphi 0, %s322
      %s325 = sphi 0, %s324
      %s339 = sphi 0, %s325
      %s343 = sphi 0, %s343
      %s345 = sphi 0, %s343
      %s346 = sphi 0, %s345
      %s360 = sphi 0, %s346
      %s364 = sphi 0, %s364
      %s366 = sphi 0, %s364
      %s367 = sphi 0, %s366
      %s381 = sphi 0, %s367
      %s385 = sphi 0, %s385
      %s387 = sphi 0, %s385
      %s388 = sphi 0, %s387
      %s402 = sphi 0, %s388
      %s408 = sphi 0, %s410
      %s411 = sphi 0, %s408
      %s412 = sphi 0, %s411
      %s428 = sphi 0, %s412
    $region4: #{tpu_custom_call.1} parent=1 // loop_header_branch
      %34 = sbr.rel (%p32) target = $region8
    $region5: #{tpu_custom_call.1} parent=1 // loop_body
      %s36 = ssub.s32 %s31, 1
      %s37 = ssub.s32 %s31, 2
      %s38 = sadd.s32 %s31, 1
      %s39 = ssub.s32 %s31, %s38
      %p40 = scmp.eq.s32.totalorder %s39, 0
      %s42 = sadd.s32 %s41, 1
      %s43 = scalar_select %p40, %s41, %s42
      %p46 = pneg %p40
      %p47 = scmp.eq.s32.totalorder %s31, 1
      %p48 = por %p46, %p47
      %p49 = scmp.ne.s32.totalorder %s41, %s44
      %p50 = scmp.eq.s32.totalorder %s31, 0
      %p51 = por %p49, %p50
      %p52 = scmp.ne.s32.totalorder %s41, %s44
      %p53 = scmp.eq.s32.totalorder %s36, 1
      %p54 = por %p52, %p53
      %p55 = scmp.ne.s32.totalorder %s44, %s45
      %p56 = scmp.eq.s32.totalorder %s36, 0
      %p57 = por %p55, %p56
      %p58 = scmp.ne.s32.totalorder %s44, %s45
      %p59 = scmp.eq.s32.totalorder %s37, 1
      %p60 = por %p58, %p59
      %p62 = scmp.ne.s32.totalorder %s45, %s61
      %p63 = scmp.eq.s32.totalorder %s37, 0
      %p64 = por %p62, %p63
      %s65 = ssub.s32 %s31, %s38
      %p66 = scmp.eq.s32.totalorder %s65, 0
      %s68 = sadd.s32 %s67, 1
      %s69 = scalar_select %p66, %s67, %s68
      %p72 = pneg %p66
      %p73 = scmp.eq.s32.totalorder %s31, 1
      %p74 = por %p72, %p73
      %p75 = scmp.ne.s32.totalorder %s67, %s70
      %p76 = scmp.eq.s32.totalorder %s31, 0
      %p77 = por %p75, %p76
      %p78 = scmp.ne.s32.totalorder %s67, %s70
      %p79 = scmp.eq.s32.totalorder %s36, 1
      %p80 = por %p78, %p79
      %p81 = scmp.ne.s32.totalorder %s70, %s71
      %p82 = scmp.eq.s32.totalorder %s36, 0
      %p83 = por %p81, %p82
      %p84 = scmp.ne.s32.totalorder %s70, %s71
      %p85 = scmp.eq.s32.totalorder %s37, 1
      %p86 = por %p84, %p85
      %p88 = scmp.ne.s32.totalorder %s71, %s87
      %p89 = scmp.eq.s32.totalorder %s37, 0
      %p90 = por %p88, %p89
      %s92 = sadd.s32 %s91, 1
      %p95 = scmp.eq.s32.totalorder %s31, 1
      %p96 = scmp.ne.s32.totalorder %s91, %s93
      %p97 = scmp.eq.s32.totalorder %s31, 0
      %p98 = por %p96, %p97
      %p99 = scmp.ne.s32.totalorder %s91, %s93
      %p100 = scmp.eq.s32.totalorder %s36, 1
      %p101 = por %p99, %p100
      %p102 = scmp.ne.s32.totalorder %s93, %s94
      %p103 = scmp.eq.s32.totalorder %s36, 0
      %p104 = por %p102, %p103
      %p105 = scmp.ne.s32.totalorder %s93, %s94
      %p106 = scmp.eq.s32.totalorder %s37, 1
      %p107 = por %p105, %p106
      %p109 = scmp.ne.s32.totalorder %s94, %s108
      %p110 = scmp.eq.s32.totalorder %s37, 0
      %p111 = por %p109, %p110
      %s113 = sadd.s32 %s112, 1
      %p116 = scmp.eq.s32.totalorder %s31, 1
      %p117 = scmp.ne.s32.totalorder %s112, %s114
      %p118 = scmp.eq.s32.totalorder %s31, 0
      %p119 = por %p117, %p118
      %p120 = scmp.ne.s32.totalorder %s112, %s114
      %p121 = scmp.eq.s32.totalorder %s36, 1
      %p122 = por %p120, %p121
      %p123 = scmp.ne.s32.totalorder %s114, %s115
      %p124 = scmp.eq.s32.totalorder %s36, 0
      %p125 = por %p123, %p124
      %p126 = scmp.ne.s32.totalorder %s114, %s115
      %p127 = scmp.eq.s32.totalorder %s37, 1
      %p128 = por %p126, %p127
      %p130 = scmp.ne.s32.totalorder %s115, %s129
      %p131 = scmp.eq.s32.totalorder %s37, 0
      %p132 = por %p130, %p131
      %s134 = sadd.s32 %s133, 1
      %p137 = scmp.eq.s32.totalorder %s31, 1
      %p138 = scmp.ne.s32.totalorder %s133, %s135
      %p139 = scmp.eq.s32.totalorder %s31, 0
      %p140 = por %p138, %p139
      %p141 = scmp.ne.s32.totalorder %s133, %s135
      %p142 = scmp.eq.s32.totalorder %s36, 1
      %p143 = por %p141, %p142
      %p144 = scmp.ne.s32.totalorder %s135, %s136
      %p145 = scmp.eq.s32.totalorder %s36, 0
      %p146 = por %p144, %p145
      %p147 = scmp.ne.s32.totalorder %s135, %s136
      %p148 = scmp.eq.s32.totalorder %s37, 1
      %p149 = por %p147, %p148
      %p151 = scmp.ne.s32.totalorder %s136, %s150
      %p152 = scmp.eq.s32.totalorder %s37, 0
      %p153 = por %p151, %p152
      %s155 = sadd.s32 %s154, 1
      %p158 = scmp.eq.s32.totalorder %s31, 1
      %p159 = scmp.ne.s32.totalorder %s154, %s156
      %p160 = scmp.eq.s32.totalorder %s31, 0
      %p161 = por %p159, %p160
      %p162 = scmp.ne.s32.totalorder %s154, %s156
      %p163 = scmp.eq.s32.totalorder %s36, 1
      %p164 = por %p162, %p163
      %p165 = scmp.ne.s32.totalorder %s156, %s157
      %p166 = scmp.eq.s32.totalorder %s36, 0
      %p167 = por %p165, %p166
      %p168 = scmp.ne.s32.totalorder %s156, %s157
      %p169 = scmp.eq.s32.totalorder %s37, 1
      %p170 = por %p168, %p169
      %p172 = scmp.ne.s32.totalorder %s157, %s171
      %p173 = scmp.eq.s32.totalorder %s37, 0
      %p174 = por %p172, %p173
      %s176 = sadd.s32 %s175, 1
      %p179 = scmp.eq.s32.totalorder %s31, 1
      %p180 = scmp.ne.s32.totalorder %s175, %s177
      %p181 = scmp.eq.s32.totalorder %s31, 0
      %p182 = por %p180, %p181
      %p183 = scmp.ne.s32.totalorder %s175, %s177
      %p184 = scmp.eq.s32.totalorder %s36, 1
      %p185 = por %p183, %p184
      %p186 = scmp.ne.s32.totalorder %s177, %s178
      %p187 = scmp.eq.s32.totalorder %s36, 0
      %p188 = por %p186, %p187
      %p189 = scmp.ne.s32.totalorder %s177, %s178
      %p190 = scmp.eq.s32.totalorder %s37, 1
      %p191 = por %p189, %p190
      %p193 = scmp.ne.s32.totalorder %s178, %s192
      %p194 = scmp.eq.s32.totalorder %s37, 0
      %p195 = por %p193, %p194
      %s197 = sadd.s32 %s196, 1
      %p200 = scmp.eq.s32.totalorder %s31, 1
      %p201 = scmp.ne.s32.totalorder %s196, %s198
      %p202 = scmp.eq.s32.totalorder %s31, 0
      %p203 = por %p201, %p202
      %p204 = scmp.ne.s32.totalorder %s196, %s198
      %p205 = scmp.eq.s32.totalorder %s36, 1
      %p206 = por %p204, %p205
      %p207 = scmp.ne.s32.totalorder %s198, %s199
      %p208 = scmp.eq.s32.totalorder %s36, 0
      %p209 = por %p207, %p208
      %p210 = scmp.ne.s32.totalorder %s198, %s199
      %p211 = scmp.eq.s32.totalorder %s37, 1
      %p212 = por %p210, %p211
      %p214 = scmp.ne.s32.totalorder %s199, %s213
      %p215 = scmp.eq.s32.totalorder %s37, 0
      %p216 = por %p214, %p215
      %s218 = sadd.s32 %s217, 1
      %p221 = scmp.eq.s32.totalorder %s31, 1
      %p222 = scmp.ne.s32.totalorder %s217, %s219
      %p223 = scmp.eq.s32.totalorder %s31, 0
      %p224 = por %p222, %p223
      %p225 = scmp.ne.s32.totalorder %s217, %s219
      %p226 = scmp.eq.s32.totalorder %s36, 1
      %p227 = por %p225, %p226
      %p228 = scmp.ne.s32.totalorder %s219, %s220
      %p229 = scmp.eq.s32.totalorder %s36, 0
      %p230 = por %p228, %p229
      %p231 = scmp.ne.s32.totalorder %s219, %s220
      %p232 = scmp.eq.s32.totalorder %s37, 1
      %p233 = por %p231, %p232
      %p235 = scmp.ne.s32.totalorder %s220, %s234
      %p236 = scmp.eq.s32.totalorder %s37, 0
      %p237 = por %p235, %p236
      %s239 = sadd.s32 %s238, 1
      %p242 = scmp.eq.s32.totalorder %s31, 1
      %p243 = scmp.ne.s32.totalorder %s238, %s240
      %p244 = scmp.eq.s32.totalorder %s31, 0
      %p245 = por %p243, %p244
      %p246 = scmp.ne.s32.totalorder %s238, %s240
      %p247 = scmp.eq.s32.totalorder %s36, 1
      %p248 = por %p246, %p247
      %p249 = scmp.ne.s32.totalorder %s240, %s241
      %p250 = scmp.eq.s32.totalorder %s36, 0
      %p251 = por %p249, %p250
      %p252 = scmp.ne.s32.totalorder %s240, %s241
      %p253 = scmp.eq.s32.totalorder %s37, 1
      %p254 = por %p252, %p253
      %p256 = scmp.ne.s32.totalorder %s241, %s255
      %p257 = scmp.eq.s32.totalorder %s37, 0
      %p258 = por %p256, %p257
      %s260 = sadd.s32 %s259, 1
      %p263 = scmp.eq.s32.totalorder %s31, 1
      %p264 = scmp.ne.s32.totalorder %s259, %s261
      %p265 = scmp.eq.s32.totalorder %s31, 0
      %p266 = por %p264, %p265
      %p267 = scmp.ne.s32.totalorder %s259, %s261
      %p268 = scmp.eq.s32.totalorder %s36, 1
      %p269 = por %p267, %p268
      %p270 = scmp.ne.s32.totalorder %s261, %s262
      %p271 = scmp.eq.s32.totalorder %s36, 0
      %p272 = por %p270, %p271
      %p273 = scmp.ne.s32.totalorder %s261, %s262
      %p274 = scmp.eq.s32.totalorder %s37, 1
      %p275 = por %p273, %p274
      %p277 = scmp.ne.s32.totalorder %s262, %s276
      %p278 = scmp.eq.s32.totalorder %s37, 0
      %p279 = por %p277, %p278
      %s281 = sadd.s32 %s280, 1
      %p284 = scmp.eq.s32.totalorder %s31, 1
      %p285 = scmp.ne.s32.totalorder %s280, %s282
      %p286 = scmp.eq.s32.totalorder %s31, 0
      %p287 = por %p285, %p286
      %p288 = scmp.ne.s32.totalorder %s280, %s282
      %p289 = scmp.eq.s32.totalorder %s36, 1
      %p290 = por %p288, %p289
      %p291 = scmp.ne.s32.totalorder %s282, %s283
      %p292 = scmp.eq.s32.totalorder %s36, 0
      %p293 = por %p291, %p292
      %p294 = scmp.ne.s32.totalorder %s282, %s283
      %p295 = scmp.eq.s32.totalorder %s37, 1
      %p296 = por %p294, %p295
      %p298 = scmp.ne.s32.totalorder %s283, %s297
      %p299 = scmp.eq.s32.totalorder %s37, 0
      %p300 = por %p298, %p299
      %s302 = sadd.s32 %s301, 1
      %p305 = scmp.eq.s32.totalorder %s31, 1
      %p306 = scmp.ne.s32.totalorder %s301, %s303
      %p307 = scmp.eq.s32.totalorder %s31, 0
      %p308 = por %p306, %p307
      %p309 = scmp.ne.s32.totalorder %s301, %s303
      %p310 = scmp.eq.s32.totalorder %s36, 1
      %p311 = por %p309, %p310
      %p312 = scmp.ne.s32.totalorder %s303, %s304
      %p313 = scmp.eq.s32.totalorder %s36, 0
      %p314 = por %p312, %p313
      %p315 = scmp.ne.s32.totalorder %s303, %s304
      %p316 = scmp.eq.s32.totalorder %s37, 1
      %p317 = por %p315, %p316
      %p319 = scmp.ne.s32.totalorder %s304, %s318
      %p320 = scmp.eq.s32.totalorder %s37, 0
      %p321 = por %p319, %p320
      %s323 = sadd.s32 %s322, 1
      %p326 = scmp.eq.s32.totalorder %s31, 1
      %p327 = scmp.ne.s32.totalorder %s322, %s324
      %p328 = scmp.eq.s32.totalorder %s31, 0
      %p329 = por %p327, %p328
      %p330 = scmp.ne.s32.totalorder %s322, %s324
      %p331 = scmp.eq.s32.totalorder %s36, 1
      %p332 = por %p330, %p331
      %p333 = scmp.ne.s32.totalorder %s324, %s325
      %p334 = scmp.eq.s32.totalorder %s36, 0
      %p335 = por %p333, %p334
      %p336 = scmp.ne.s32.totalorder %s324, %s325
      %p337 = scmp.eq.s32.totalorder %s37, 1
      %p338 = por %p336, %p337
      %p340 = scmp.ne.s32.totalorder %s325, %s339
      %p341 = scmp.eq.s32.totalorder %s37, 0
      %p342 = por %p340, %p341
      %s344 = sadd.s32 %s343, 1
      %p347 = scmp.eq.s32.totalorder %s31, 1
      %p348 = scmp.ne.s32.totalorder %s343, %s345
      %p349 = scmp.eq.s32.totalorder %s31, 0
      %p350 = por %p348, %p349
      %p351 = scmp.ne.s32.totalorder %s343, %s345
      %p352 = scmp.eq.s32.totalorder %s36, 1
      %p353 = por %p351, %p352
      %p354 = scmp.ne.s32.totalorder %s345, %s346
      %p355 = scmp.eq.s32.totalorder %s36, 0
      %p356 = por %p354, %p355
      %p357 = scmp.ne.s32.totalorder %s345, %s346
      %p358 = scmp.eq.s32.totalorder %s37, 1
      %p359 = por %p357, %p358
      %p361 = scmp.ne.s32.totalorder %s346, %s360
      %p362 = scmp.eq.s32.totalorder %s37, 0
      %p363 = por %p361, %p362
      %s365 = sadd.s32 %s364, 1
      %p368 = scmp.eq.s32.totalorder %s31, 1
      %p369 = scmp.ne.s32.totalorder %s364, %s366
      %p370 = scmp.eq.s32.totalorder %s31, 0
      %p371 = por %p369, %p370
      %p372 = scmp.ne.s32.totalorder %s364, %s366
      %p373 = scmp.eq.s32.totalorder %s36, 1
      %p374 = por %p372, %p373
      %p375 = scmp.ne.s32.totalorder %s366, %s367
      %p376 = scmp.eq.s32.totalorder %s36, 0
      %p377 = por %p375, %p376
      %p378 = scmp.ne.s32.totalorder %s366, %s367
      %p379 = scmp.eq.s32.totalorder %s37, 1
      %p380 = por %p378, %p379
      %p382 = scmp.ne.s32.totalorder %s367, %s381
      %p383 = scmp.eq.s32.totalorder %s37, 0
      %p384 = por %p382, %p383
      %s386 = sadd.s32 %s385, 1
      %p389 = scmp.eq.s32.totalorder %s31, 1
      %p390 = scmp.ne.s32.totalorder %s385, %s387
      %p391 = scmp.eq.s32.totalorder %s31, 0
      %p392 = por %p390, %p391
      %p393 = scmp.ne.s32.totalorder %s385, %s387
      %p394 = scmp.eq.s32.totalorder %s36, 1
      %p395 = por %p393, %p394
      %p396 = scmp.ne.s32.totalorder %s387, %s388
      %p397 = scmp.eq.s32.totalorder %s36, 0
      %p398 = por %p396, %p397
      %p399 = scmp.ne.s32.totalorder %s387, %s388
      %p400 = scmp.eq.s32.totalorder %s37, 1
      %p401 = por %p399, %p400
      %p403 = scmp.ne.s32.totalorder %s388, %s402
      %p404 = scmp.eq.s32.totalorder %s37, 0
      %p405 = por %p403, %p404
      %s406 = ssub.s32 %s31, %s38
      %p407 = scmp.eq.s32.totalorder %s406, 0
      %s409 = sadd.s32 %s408, 1
      %s410 = scalar_select %p407, %s408, %s409
      %p413 = pneg %p407
      %p414 = scmp.eq.s32.totalorder %s31, 1
      %p415 = por %p413, %p414
      %p416 = scmp.ne.s32.totalorder %s408, %s411
      %p417 = scmp.eq.s32.totalorder %s31, 0
      %p418 = por %p416, %p417
      %p419 = scmp.ne.s32.totalorder %s408, %s411
      %p420 = scmp.eq.s32.totalorder %s36, 1
      %p421 = por %p419, %p420
      %p422 = scmp.ne.s32.totalorder %s411, %s412
      %p423 = scmp.eq.s32.totalorder %s36, 0
      %p424 = por %p422, %p423
      %p425 = scmp.ne.s32.totalorder %s411, %s412
      %p426 = scmp.eq.s32.totalorder %s37, 1
      %p427 = por %p425, %p426
      %p429 = scmp.ne.s32.totalorder %s412, %s428
      %p430 = scmp.eq.s32.totalorder %s37, 0
      %p431 = por %p429, %p430
      %p432 = scmp.le.s32.totalorder 1, %s31
      %p433 = scmp.lt.s32.totalorder %s31, 3
      %p434 = pnand %p432, %p433
      %p435 = pneg %p434
      // Predicated region
      $region9: #{tpu_custom_call.1} parent=5 // pred_check
        _
      $region10: #{tpu_custom_call.1} parent=5 // pred_check_branch
        %437 = sbr.rel (%p434) target = $region12
      $region11: #{tpu_custom_call.1} parent=5 // pred_region
        %s438 = ssub.s32 %s31, 1
        // Predicated region
        $region13: #{tpu_custom_call.1} parent=11 // pred_check
          %p439 = pneg %p104
        $region14: #{tpu_custom_call.1} parent=11 // pred_check_branch
          %441 = sbr.rel (%p439) target = $region16
        $region15: #{tpu_custom_call.1} parent=11 // pred_region
          _
        $region16: #{tpu_custom_call.1} parent=11 // pred_fallthru
          _
        // Predicated region
        $region17: #{tpu_custom_call.1} parent=11 // pred_check
          %p442 = pneg %p125
        $region18: #{tpu_custom_call.1} parent=11 // pred_check_branch
          %444 = sbr.rel (%p442) target = $region20
        $region19: #{tpu_custom_call.1} parent=11 // pred_region
          _
        $region20: #{tpu_custom_call.1} parent=11 // pred_fallthru
          _
        // Predicated region
        $region21: #{tpu_custom_call.1} parent=11 // pred_check
          %p445 = pneg %p146
        $region22: #{tpu_custom_call.1} parent=11 // pred_check_branch
          %447 = sbr.rel (%p445) target = $region24
        $region23: #{tpu_custom_call.1} parent=11 // pred_region
          _
        $region24: #{tpu_custom_call.1} parent=11 // pred_fallthru
          _
        // Predicated region
        $region25: #{tpu_custom_call.1} parent=11 // pred_check
          %p448 = pneg %p167
        $region26: #{tpu_custom_call.1} parent=11 // pred_check_branch
          %450 = sbr.rel (%p448) target = $region28
        $region27: #{tpu_custom_call.1} parent=11 // pred_region
          _
        $region28: #{tpu_custom_call.1} parent=11 // pred_fallthru
          _
        // Predicated region
        $region29: #{tpu_custom_call.1} parent=11 // pred_check
          %p451 = pneg %p188
        $region30: #{tpu_custom_call.1} parent=11 // pred_check_branch
          %453 = sbr.rel (%p451) target = $region32
        $region31: #{tpu_custom_call.1} parent=11 // pred_region
          _
        $region32: #{tpu_custom_call.1} parent=11 // pred_fallthru
          _
        // Predicated region
        $region33: #{tpu_custom_call.1} parent=11 // pred_check
          %p454 = pneg %p209
        $region34: #{tpu_custom_call.1} parent=11 // pred_check_branch
          %456 = sbr.rel (%p454) target = $region36
        $region35: #{tpu_custom_call.1} parent=11 // pred_region
          _
        $region36: #{tpu_custom_call.1} parent=11 // pred_fallthru
          _
        // Predicated region
        $region37: #{tpu_custom_call.1} parent=11 // pred_check
          %p457 = pneg %p230
        $region38: #{tpu_custom_call.1} parent=11 // pred_check_branch
          %459 = sbr.rel (%p457) target = $region40
        $region39: #{tpu_custom_call.1} parent=11 // pred_region
          _
        $region40: #{tpu_custom_call.1} parent=11 // pred_fallthru
          _
        // Predicated region
        $region41: #{tpu_custom_call.1} parent=11 // pred_check
          %p460 = pneg %p251
        $region42: #{tpu_custom_call.1} parent=11 // pred_check_branch
          %462 = sbr.rel (%p460) target = $region44
        $region43: #{tpu_custom_call.1} parent=11 // pred_region
          %s464 = ssub.s32 1024, 1024
          %465 = vsyncadd [#allocation6], %s464
          %s466 = sshll.u32 [#allocation5], 4
          %s467 = int_to_ptr.vmem [resolvable:$true] %s466
          %472 = dma.hbm_to_vmem [thread:$0]  %s9, 1024, %s467, [#allocation6], 64, 64, 4
        $region44: #{tpu_custom_call.1} parent=11 // pred_fallthru
          _
        // Predicated region
        $region45: #{tpu_custom_call.1} parent=11 // pred_check
          %p473 = pneg %p272
        $region46: #{tpu_custom_call.1} parent=11 // pred_check_branch
          %475 = sbr.rel (%p473) target = $region48
        $region47: #{tpu_custom_call.1} parent=11 // pred_region
          _
        $region48: #{tpu_custom_call.1} parent=11 // pred_fallthru
          _
        // Predicated region
        $region49: #{tpu_custom_call.1} parent=11 // pred_check
          %p476 = pneg %p293
        $region50: #{tpu_custom_call.1} parent=11 // pred_check_branch
          %478 = sbr.rel (%p476) target = $region52
        $region51: #{tpu_custom_call.1} parent=11 // pred_region
          _
        $region52: #{tpu_custom_call.1} parent=11 // pred_fallthru
          _
        // Predicated region
        $region53: #{tpu_custom_call.1} parent=11 // pred_check
          %p479 = pneg %p314
        $region54: #{tpu_custom_call.1} parent=11 // pred_check_branch
          %481 = sbr.rel (%p479) target = $region56
        $region55: #{tpu_custom_call.1} parent=11 // pred_region
          _
        $region56: #{tpu_custom_call.1} parent=11 // pred_fallthru
          _
        // Predicated region
        $region57: #{tpu_custom_call.1} parent=11 // pred_check
          %p482 = pneg %p335
        $region58: #{tpu_custom_call.1} parent=11 // pred_check_branch
          %484 = sbr.rel (%p482) target = $region60
        $region59: #{tpu_custom_call.1} parent=11 // pred_region
          %s486 = ssub.s32 4096, 4096
          %487 = vsyncadd [#allocation6], %s486
          %s488 = sshll.u32 [#allocation7], 4
          %s489 = int_to_ptr.vmem [resolvable:$true] %s488
          %494 = dma.hbm_to_vmem [thread:$0]  %s13, 4096, %s489, [#allocation6], 128, 128, 8
        $region60: #{tpu_custom_call.1} parent=11 // pred_fallthru
          _
        // Predicated region
        $region61: #{tpu_custom_call.1} parent=11 // pred_check
          %p495 = pneg %p356
        $region62: #{tpu_custom_call.1} parent=11 // pred_check_branch
          %497 = sbr.rel (%p495) target = $region64
        $region63: #{tpu_custom_call.1} parent=11 // pred_region
          _
        $region64: #{tpu_custom_call.1} parent=11 // pred_fallthru
          _
        // Predicated region
        $region65: #{tpu_custom_call.1} parent=11 // pred_check
          %p498 = pneg %p377
        $region66: #{tpu_custom_call.1} parent=11 // pred_check_branch
          %500 = sbr.rel (%p498) target = $region68
        $region67: #{tpu_custom_call.1} parent=11 // pred_region
          %s502 = ssub.s32 4096, 4096
          %503 = vsyncadd [#allocation9], %s502
          %s504 = sshll.u32 [#allocation8], 4
          %s505 = int_to_ptr.vmem [resolvable:$true] %s504
          %510 = dma.hbm_to_vmem [thread:$0]  %s15, 4096, %s505, [#allocation9], 64, 64, 4
        $region68: #{tpu_custom_call.1} parent=11 // pred_fallthru
          _
        // Predicated region
        $region69: #{tpu_custom_call.1} parent=11 // pred_check
          %p511 = pneg %p398
        $region70: #{tpu_custom_call.1} parent=11 // pred_check_branch
          %513 = sbr.rel (%p511) target = $region72
        $region71: #{tpu_custom_call.1} parent=11 // pred_region
          _
        $region72: #{tpu_custom_call.1} parent=11 // pred_fallthru
          _
      $region12: #{tpu_custom_call.1} parent=5 // pred_fallthru
        _
      %p514 = scmp.lt.s32.totalorder %s31, 2
      // Predicated region
      $region73: #{tpu_custom_call.1} parent=5 // pred_check
        %p515 = pneg %p514
      $region74: #{tpu_custom_call.1} parent=5 // pred_check_branch
        %517 = sbr.rel (%p515) target = $region76
      $region75: #{tpu_custom_call.1} parent=5 // pred_region
        // Predicated region
        $region77: #{tpu_custom_call.1} parent=75 // pred_check
          %p518 = pneg %p51
        $region78: #{tpu_custom_call.1} parent=75 // pred_check_branch
          %520 = sbr.rel (%p518) target = $region80
        $region79: #{tpu_custom_call.1} parent=75 // pred_region
          %s521 = sand.u32 %s41, 1
          %s522 = scalar_lea.sflag [#allocation3], %s521
          %s523 = sand.u32 %s41, 1
          %s524 = smul.addr %s523, 32
          %s525 = scalar_lea.vmem [#allocation2], %s524
          %s526 = smul.u32 4, %s31
          %s528 = ssub.s32 512, 512
          %529 = vsyncadd %s522, %s528
          %s530 = smul.addr %s526, 128
          %s531 = scalar_lea.hbm %s0, %s530
          %s532 = sshll.u32 %s525, 4
          %s533 = int_to_ptr.vmem [resolvable:$true] %s532
          %538 = dma.hbm_to_vmem [thread:$0]  %s531, 512, %s533, %s522, 128, 128, 8
        $region80: #{tpu_custom_call.1} parent=75 // pred_fallthru
          _
        // Predicated region
        $region81: #{tpu_custom_call.1} parent=75 // pred_check
          %p539 = pneg %p77
        $region82: #{tpu_custom_call.1} parent=75 // pred_check_branch
          %541 = sbr.rel (%p539) target = $region84
        $region83: #{tpu_custom_call.1} parent=75 // pred_region
          %s542 = smul.u32 4, %s31
          %p543 = scmp.lt.s32.totalorder %s542, 7
          %s544 = scalar_select %p543, %s542, 7
          %s545 = smul.addr %s544, 8
          %s546 = scalar_lea.vmem %s1, %s545
          %s547 = smul.u32 4, %s31
        $region84: #{tpu_custom_call.1} parent=75 // pred_fallthru
          _
      $region76: #{tpu_custom_call.1} parent=5 // pred_fallthru
        _
      %p548 = scmp.le.s32.totalorder 1, %s31
      %p549 = scmp.lt.s32.totalorder %s31, 3
      %p550 = pnand %p548, %p549
      %p551 = pneg %p550
      // Predicated region
      $region85: #{tpu_custom_call.1} parent=5 // pred_check
        _
      $region86: #{tpu_custom_call.1} parent=5 // pred_check_branch
        %553 = sbr.rel (%p550) target = $region88
      $region87: #{tpu_custom_call.1} parent=5 // pred_region
        %s554 = ssub.s32 %s31, 1
        %s555 = sand.u32 %s44, 1
        %s556 = scalar_lea.sflag [#allocation3], %s555
        %s557 = sand.u32 %s44, 1
        %s558 = smul.addr %s557, 32
        %s559 = scalar_lea.vmem [#allocation2], %s558
        // Predicated region
        $region89: #{tpu_custom_call.1} parent=87 // pred_check
          %p560 = pneg %p57
        $region90: #{tpu_custom_call.1} parent=87 // pred_check_branch
          %562 = sbr.rel (%p560) target = $region92
        $region91: #{tpu_custom_call.1} parent=87 // pred_region
          %563 = dma.done %s556, 512
        $region92: #{tpu_custom_call.1} parent=87 // pred_fallthru
          _
        // Predicated region
        $region93: #{tpu_custom_call.1} parent=87 // pred_check
          %p564 = pneg %p251
        $region94: #{tpu_custom_call.1} parent=87 // pred_check_branch
          %566 = sbr.rel (%p564) target = $region96
        $region95: #{tpu_custom_call.1} parent=87 // pred_region
          %567 = dma.done [#allocation6], 1024
        $region96: #{tpu_custom_call.1} parent=87 // pred_fallthru
          _
        // Predicated region
        $region97: #{tpu_custom_call.1} parent=87 // pred_check
          %p568 = pneg %p335
        $region98: #{tpu_custom_call.1} parent=87 // pred_check_branch
          %570 = sbr.rel (%p568) target = $region100
        $region99: #{tpu_custom_call.1} parent=87 // pred_region
          %571 = dma.done [#allocation6], 4096
        $region100: #{tpu_custom_call.1} parent=87 // pred_fallthru
          _
        // Predicated region
        $region101: #{tpu_custom_call.1} parent=87 // pred_check
          %p572 = pneg %p377
        $region102: #{tpu_custom_call.1} parent=87 // pred_check_branch
          %574 = sbr.rel (%p572) target = $region104
        $region103: #{tpu_custom_call.1} parent=87 // pred_region
          %575 = dma.done [#allocation9], 4096
        $region104: #{tpu_custom_call.1} parent=87 // pred_fallthru
          _
        %s576 = sand.u32 %s44, 1
        %s577 = scalar_lea.sflag [#allocation3], %s576
        %s578 = sand.u32 %s44, 1
        %s579 = smul.addr %s578, 32
        %s580 = scalar_lea.vmem [#allocation2], %s579
        %p581 = pneg %p57
        %p582 = pneg %p54
        %s583 = smul.u32 4, %s36
        %p584 = scmp.lt.s32.totalorder %s583, 7
        %s585 = scalar_select %p584, %s583, 7
        %s586 = smul.addr %s585, 8
        %s587 = scalar_lea.vmem %s1, %s586
        %p588 = pneg %p83
        %p589 = pneg %p80
        %p590 = pneg %p104
        %p591 = pneg %p101
        %p592 = pneg %p125
        %p593 = pneg %p122
        %p594 = pneg %p146
        %p595 = pneg %p143
        %p596 = pneg %p167
        %p597 = pneg %p164
        %p598 = pneg %p188
        %p599 = pneg %p185
        %p600 = pneg %p209
        %p601 = pneg %p206
        %p602 = pneg %p230
        %p603 = pneg %p227
        %p604 = pneg %p251
        %p605 = pneg %p248
        %p606 = pneg %p272
        %p607 = pneg %p269
        %p608 = pneg %p293
        %p609 = pneg %p290
        %p610 = pneg %p314
        %p611 = pneg %p311
        %p612 = pneg %p335
        %p613 = pneg %p332
        %p614 = pneg %p356
        %p615 = pneg %p353
        %p616 = pneg %p377
        %p617 = pneg %p374
        %p618 = pneg %p398
        %p619 = pneg %p395
        %p620 = pneg %p424
        %p621 = pneg %p421
        %s622 = sand.u32 %s411, 1
        %s623 = scalar_lea.sflag [#allocation4], %s622
        %s624 = sand.u32 %s411, 1
        %s625 = smul.addr %s624, 32
        %s626 = scalar_lea.vmem [#allocation10], %s625
        %s627 = smul.u32 4, %s36
        %s628 = smul.u32 4, %s36
        %p629 = scmp.lt.s32.totalorder %s628, 7
        %s630 = scalar_select %p629, %s628, 7
        %s631 = smul.addr %s630, 8
        %s632 = scalar_lea.vmem %s1, %s631
        %s633 = smul.u32 4, %s36
        %s634 = smul.u32 4, %s36
        %v636 = vld [vmem:[%s559] sm:$0xff]
        %v637 = vld [vmem:[%s559 + $0x8] sm:$0xff]
        %v638 = vld [vmem:[%s559 + $0x10] sm:$0xff]
        %v639 = vld [vmem:[%s559 + $0x18] sm:$0xff]
        %v640 = vld [vmem:[%s632] sm:$0xff]
        %v641 = vld [vmem:[%s632 + $0x8] sm:$0xff]
        %v642 = vld [vmem:[%s632 + $0x10] sm:$0xff]
        %v643 = vld [vmem:[%s632 + $0x18] sm:$0xff]
        %v644 = vld [vmem:[%s4] sm:$0x1]
        %v645 = vld [vmem:[%s5] sm:$0x1]
        %646 = vadd.xlane.f32.xlu0 %v636
        %v647 = vpop.xlane.xlu0 %646
        %648 = vadd.xlane.f32.xlu0 %v637
        %v649 = vpop.xlane.xlu0 %648
        %650 = vadd.xlane.f32.xlu0 %v638
        %v651 = vpop.xlane.xlu0 %650
        %652 = vadd.xlane.f32.xlu0 %v639
        %v653 = vpop.xlane.xlu0 %652
        %v654 = vrcp.pop 128.0
        %v655 = vmul.f32 %v647, %v654
        %v656 = vmul.f32 %v649, %v654
        %v657 = vmul.f32 %v651, %v654
        %v658 = vmul.f32 %v653, %v654
        %v659 = vsub.f32 %v636, %v655
        %v660 = vsub.f32 %v637, %v656
        %v661 = vsub.f32 %v638, %v657
        %v662 = vsub.f32 %v639, %v658
        %v663 = vmul.f32 %v659, %v659
        %v664 = vmul.f32 %v660, %v660
        %v665 = vmul.f32 %v661, %v661
        %v666 = vmul.f32 %v662, %v662
        %667 = vadd.xlane.f32.xlu0 %v663
        %v668 = vpop.xlane.xlu0 %667
        %669 = vadd.xlane.f32.xlu0 %v664
        %v670 = vpop.xlane.xlu0 %669
        %671 = vadd.xlane.f32.xlu0 %v665
        %v672 = vpop.xlane.xlu0 %671
        %673 = vadd.xlane.f32.xlu0 %v666
        %v674 = vpop.xlane.xlu0 %673
        %v675 = vmul.f32 %v668, 0.007874016
        %v676 = vmul.f32 %v670, 0.007874016
        %v677 = vmul.f32 %v672, 0.007874016
        %v678 = vmul.f32 %v674, 0.007874016
        %v679 = vrsqrt.pop %v675
        %v680 = vmul.f32 %v675, %v679
        %vm681 = vcmp.eq.f32.partialorder %v675, inf
        %v682 = vsel %vm681, %v675, %v680
        %vm683 = vcmp.eq.f32.partialorder %v675, 0.0
        %v684 = vand.u32 %v675, 2147483648
        %v685 = vsel %vm683, %v684, %v682
        %v686 = vrsqrt.pop %v676
        %v687 = vmul.f32 %v676, %v686
        %vm688 = vcmp.eq.f32.partialorder %v676, inf
        %v689 = vsel %vm688, %v676, %v687
        %vm690 = vcmp.eq.f32.partialorder %v676, 0.0
        %v691 = vand.u32 %v676, 2147483648
        %v692 = vsel %vm690, %v691, %v689
        %v693 = vrsqrt.pop %v677
        %v694 = vmul.f32 %v677, %v693
        %vm695 = vcmp.eq.f32.partialorder %v677, inf
        %v696 = vsel %vm695, %v677, %v694
        %vm697 = vcmp.eq.f32.partialorder %v677, 0.0
        %v698 = vand.u32 %v677, 2147483648
        %v699 = vsel %vm697, %v698, %v696
        %v700 = vrsqrt.pop %v678
        %v701 = vmul.f32 %v678, %v700
        %vm702 = vcmp.eq.f32.partialorder %v678, inf
        %v703 = vsel %vm702, %v678, %v701
        %vm704 = vcmp.eq.f32.partialorder %v678, 0.0
        %v705 = vand.u32 %v678, 2147483648
        %v706 = vsel %vm704, %v705, %v703
        %v707 = vadd.f32 %v685, 1e-06
        %v708 = vadd.f32 %v692, 1e-06
        %v709 = vadd.f32 %v699, 1e-06
        %v710 = vadd.f32 %v706, 1e-06
        %v711 = vrcp.pop %v707
        %v712 = vrcp.pop %v708
        %v713 = vrcp.pop %v709
        %v714 = vrcp.pop %v710
        %v715 = vmul.f32 %v659, %v711
        %v716 = vmul.f32 %v660, %v712
        %v717 = vmul.f32 %v661, %v713
        %v718 = vmul.f32 %v662, %v714
        %v720 = vlaneseq
        %v721 = vshrl.u32 %v720, 7
        %v722 = vsub.s32 0, %v721
        %v723 = vrot.slane %v644, %v722
        %v725 = vmul.f32 %v723, %v715
        %v726 = vmul.f32 %v723, %v716
        %v727 = vmul.f32 %v723, %v717
        %v728 = vmul.f32 %v723, %v718
        %v730 = vlaneseq
        %v731 = vshrl.u32 %v730, 7
        %v732 = vsub.s32 0, %v731
        %v733 = vrot.slane %v645, %v732
        %v735 = vadd.f32 %v725, %v733
        %v736 = vadd.f32 %v726, %v733
        %v737 = vadd.f32 %v727, %v733
        %v738 = vadd.f32 %v728, %v733
        %v739 = vpack.c.bf16 %v736, %v735
        %v740 = vpack.c.bf16 %v738, %v737
        %v741 = vld [vmem:[%s6] sm:$0xff]
        %v742 = vld [vmem:[%s6 + $0x8] sm:$0xff]
        %v743 = vld [vmem:[%s6 + $0x10] sm:$0xff]
        %v744 = vld [vmem:[%s6 + $0x18] sm:$0xff]
        %v745 = vld [vmem:[%s6 + $0x20] sm:$0xff]
        %v746 = vld [vmem:[%s6 + $0x28] sm:$0xff]
        %v747 = vld [vmem:[%s6 + $0x30] sm:$0xff]
        %v748 = vld [vmem:[%s6 + $0x38] sm:$0xff]
        %v749 = vld [vmem:[%s6 + $0x40] sm:$0xff]
        %v750 = vld [vmem:[%s6 + $0x48] sm:$0xff]
        %v751 = vld [vmem:[%s6 + $0x50] sm:$0xff]
        %v752 = vld [vmem:[%s6 + $0x58] sm:$0xff]
        %v753 = vld [vmem:[%s6 + $0x60] sm:$0xff]
        %v754 = vld [vmem:[%s6 + $0x68] sm:$0xff]
        %v755 = vld [vmem:[%s6 + $0x70] sm:$0xff]
        %v756 = vld [vmem:[%s6 + $0x78] sm:$0xff]
        %v757 = vld [vmem:[%s7] sm:$0x3]
        %v759 = vlaneseq
        %v760 = vshrl.u32 %v759, 7
        %v761 = vsub.s32 0, %v760
        %v762 = vrot.slane %v757, %v761
        %v763 = vlaneseq
        %v764 = vshrl.u32 %v763, 7
        %v765 = vsub.s32 1, %v764
        %v766 = vrot.slane %v757, %v765
        %v785 = vunpack.c.l.b16 %v741
        %v786 = vunpack.c.h.b16 %v741
        %v787 = vunpack.c.l.b16 %v742
        %v788 = vunpack.c.h.b16 %v742
        %v789 = vunpack.c.l.b16 %v743
        %v790 = vunpack.c.h.b16 %v743
        %v791 = vunpack.c.l.b16 %v744
        %v792 = vunpack.c.h.b16 %v744
        %v793 = vunpack.c.l.b16 %v745
        %v794 = vunpack.c.h.b16 %v745
        %v795 = vunpack.c.l.b16 %v746
        %v796 = vunpack.c.h.b16 %v746
        %v797 = vunpack.c.l.b16 %v747
        %v798 = vunpack.c.h.b16 %v747
        %v799 = vunpack.c.l.b16 %v748
        %v800 = vunpack.c.h.b16 %v748
        %v801 = vunpack.c.l.b16 %v749
        %v802 = vunpack.c.h.b16 %v749
        %v803 = vunpack.c.l.b16 %v750
        %v804 = vunpack.c.h.b16 %v750
        %v805 = vunpack.c.l.b16 %v751
        %v806 = vunpack.c.h.b16 %v751
        %v807 = vunpack.c.l.b16 %v752
        %v808 = vunpack.c.h.b16 %v752
        %v809 = vunpack.c.l.b16 %v753
        %v810 = vunpack.c.h.b16 %v753
        %v811 = vunpack.c.l.b16 %v754
        %v812 = vunpack.c.h.b16 %v754
        %v813 = vunpack.c.l.b16 %v755
        %v814 = vunpack.c.h.b16 %v755
        %v815 = vunpack.c.l.b16 %v756
        %v816 = vunpack.c.h.b16 %v756
        %v817 = vpack.c.b16 %v787, %v785
        %v818 = vpack.c.b16 %v788, %v786
        %v819 = vpack.c.b16 %v791, %v789
        %v820 = vpack.c.b16 %v792, %v790
        %v821 = vpack.c.b16 %v795, %v793
        %v822 = vpack.c.b16 %v796, %v794
        %v823 = vpack.c.b16 %v799, %v797
        %v824 = vpack.c.b16 %v800, %v798
        %v825 = vpack.c.b16 %v803, %v801
        %v826 = vpack.c.b16 %v804, %v802
        %v827 = vpack.c.b16 %v807, %v805
        %v828 = vpack.c.b16 %v808, %v806
        %v829 = vpack.c.b16 %v811, %v809
        %v830 = vpack.c.b16 %v812, %v810
        %v831 = vpack.c.b16 %v815, %v813
        %v832 = vpack.c.b16 %v816, %v814
        %849 = vmatprep.subr.bf16.mxu0 %v832
        %850 = vmatpush1.bf16.msra.mxu0 %v831
        %851 = vmatprep.subr.bf16.mxu0 %v830
        %852 = vmatpush1.bf16.msra.mxu0 %v829
        %853 = vmatprep.subr.bf16.mxu0 %v828
        %854 = vmatpush1.bf16.msra.mxu0 %v827
        %855 = vmatprep.subr.bf16.mxu0 %v826
        %856 = vmatpush1.bf16.msra.mxu0 %v825
        %857 = vmatprep.subr.bf16.mxu0 %v824
        %858 = vmatpush1.bf16.msra.mxu0 %v823
        %859 = vmatprep.subr.bf16.mxu0 %v822
        %860 = vmatpush1.bf16.msra.mxu0 %v821
        %861 = vmatprep.subr.bf16.mxu0 %v820
        %862 = vmatpush1.bf16.msra.mxu0 %v819
        %863 = vmatprep.subr.bf16.mxu0 %v818
        %864 = vmatpush1.bf16.msra.mxu0 %v817
        %865 = vmatprep.subr.bf16.mxu0 0
        %866 = vmatpush2.bf16.msra.mxu0 0
        %867 = vmatprep.subr.bf16.mxu0 0
        %868 = vmatpush2.bf16.msra.mxu0 0
        %869 = vmatprep.subr.bf16.mxu0 0
        %870 = vmatpush2.bf16.msra.mxu0 0
        %871 = vmatprep.subr.bf16.mxu0 0
        %872 = vmatpush2.bf16.msra.mxu0 0
        %873 = vmatprep.subr.bf16.mxu0 0
        %874 = vmatpush2.bf16.msra.mxu0 0
        %875 = vmatprep.subr.bf16.mxu0 0
        %876 = vmatpush2.bf16.msra.mxu0 0
        %877 = vmatprep.subr.bf16.mxu0 0
        %878 = vmatpush2.bf16.msra.mxu0 0
        %879 = vmatprep.subr.bf16.mxu0 0
        %880 = vmatpush2.bf16.msra.mxu0 0
        %881 = vmatprep.mubr.bf16.mxu0 0
        %882 = vmatmul.mubr.bf16.gmra.mxu0 %v739
        %v883 = vpop.f32.mrf.mxu0
        %v884 = vadd.f32 %v762, %v883
        %v885 = vpop.f32.mrf.mxu0
        %v886 = vadd.f32 %v766, %v885
        %v887 = vpop.f32.mrf.mxu0
        %v888 = vadd.f32 %v762, %v887
        %v889 = vpop.f32.mrf.mxu0
        %v890 = vadd.f32 %v766, %v889
        %891 = vmatprep.mubr.bf16.mxu0 0
        %892 = vmatmul.mubr.bf16.gmra.mxu0 %v740
        %v893 = vpop.f32.mrf.mxu0
        %v894 = vadd.f32 %v762, %v893
        %v895 = vpop.f32.mrf.mxu0
        %v896 = vadd.f32 %v766, %v895
        %v897 = vpop.f32.mrf.mxu0
        %v898 = vadd.f32 %v762, %v897
        %v899 = vpop.f32.mrf.mxu0
        %v900 = vadd.f32 %v766, %v899
        %901 = vdwg.mxu0
        %v902 = vxor.u32 %v886, 2147483648
        %v903 = vxor.u32 %v890, 2147483648
        %v904 = vxor.u32 %v896, 2147483648
        %v905 = vxor.u32 %v900, 2147483648
        %v906 = vmul.f32 %v902, 1.442695
        %v907 = vpow.pop %v906
        %v908 = vmul.f32 %v903, 1.442695
        %v909 = vpow.pop %v908
        %v910 = vmul.f32 %v904, 1.442695
        %v911 = vpow.pop %v910
        %v912 = vmul.f32 %v905, 1.442695
        %v913 = vpow.pop %v912
        %v914 = vadd.f32 %v907, 1.0
        %v915 = vadd.f32 %v909, 1.0
        %v916 = vadd.f32 %v911, 1.0
        %v917 = vadd.f32 %v913, 1.0
        %v918 = vrcp.pop %v914
        %v919 = vmul.f32 1.0, %v918
        %v920 = vrcp.pop %v915
        %v921 = vmul.f32 1.0, %v920
        %v922 = vrcp.pop %v916
        %v923 = vmul.f32 1.0, %v922
        %v924 = vrcp.pop %v917
        %v925 = vmul.f32 1.0, %v924
        %v926 = vmul.f32 %v884, %v919
        %v927 = vmul.f32 %v888, %v921
        %v928 = vmul.f32 %v894, %v923
        %v929 = vmul.f32 %v898, %v925
        %931 = vset.pattern.permute.xlu0 0
        %932 = vperm.xlu0 %931, %v640
        %v933 = vpop.permute.xlu0 %932
        %936 = vset.pattern.permute.xlu0 0
        %937 = vperm.xlu0 %936, %v641
        %v938 = vpop.permute.xlu0 %937
        %941 = vset.pattern.permute.xlu0 0
        %942 = vperm.xlu0 %941, %v642
        %v943 = vpop.permute.xlu0 %942
        %946 = vset.pattern.permute.xlu0 0
        %947 = vperm.xlu0 %946, %v643
        %v948 = vpop.permute.xlu0 %947
        %v950 = vmul.f32 %v926, %v933
        %v951 = vmul.f32 %v927, %v938
        %v952 = vmul.f32 %v928, %v943
        %v953 = vmul.f32 %v929, %v948
        %v954 = vrot.slane %v950, 7
        %v955 = vrot.slane %v951, 7
        %v956 = vrot.slane %v952, 7
        %v957 = vrot.slane %v953, 7
        %v958 = vlaneseq
        %v959 = vshrl.u32 %v958, 7
        %vm960 = vcmp.lt.s32.totalorder %v959, 1
        %v961 = vsel %vm960, %v956, %v957
        %v962 = vsel %vm960, %v955, %v956
        %v963 = vsel %vm960, %v954, %v955
        %v964 = vsel %vm960, %v957, %v954
        %v965 = vld [vmem:[%s2] sm:$0xff]
        %v966 = vld [vmem:[%s2 + $0x8] sm:$0xff]
        %v967 = vld [vmem:[%s2 + $0x10] sm:$0xff]
        %v968 = vld [vmem:[%s2 + $0x18] sm:$0xff]
        %970 = vset.pattern.permute.xlu0 0
        %971 = vperm.xlu0 %970, %v965
        %v972 = vpop.permute.xlu0 %971
        %975 = vset.pattern.permute.xlu0 0
        %976 = vperm.xlu0 %975, %v966
        %v977 = vpop.permute.xlu0 %976
        %980 = vset.pattern.permute.xlu0 0
        %981 = vperm.xlu0 %980, %v967
        %v982 = vpop.permute.xlu0 %981
        %985 = vset.pattern.permute.xlu0 0
        %986 = vperm.xlu0 %985, %v968
        %v987 = vpop.permute.xlu0 %986
        %v989 = vmul.f32 %v964, %v972
        %v990 = vmul.f32 %v963, %v977
        %v991 = vmul.f32 %v962, %v982
        %v992 = vmul.f32 %v961, %v987
        %v993 = vrot.slane %v950, 1
        %v994 = vrot.slane %v951, 1
        %v995 = vrot.slane %v952, 1
        %v996 = vrot.slane %v953, 1
        %vm997 = vcmp.lt.s32.totalorder %v959, 7
        %v998 = vsel %vm997, %v995, %v996
        %v999 = vsel %vm997, %v994, %v995
        %v1000 = vsel %vm997, %v993, %v994
        %v1001 = vsel %vm997, %v996, %v993
        %v1002 = vld [vmem:[%s3] sm:$0xff]
        %v1003 = vld [vmem:[%s3 + $0x8] sm:$0xff]
        %v1004 = vld [vmem:[%s3 + $0x10] sm:$0xff]
        %v1005 = vld [vmem:[%s3 + $0x18] sm:$0xff]
        %1007 = vset.pattern.permute.xlu0 0
        %1008 = vperm.xlu0 %1007, %v1002
        %v1009 = vpop.permute.xlu0 %1008
        %1012 = vset.pattern.permute.xlu0 0
        %1013 = vperm.xlu0 %1012, %v1003
        %v1014 = vpop.permute.xlu0 %1013
        %1017 = vset.pattern.permute.xlu0 0
        %1018 = vperm.xlu0 %1017, %v1004
        %v1019 = vpop.permute.xlu0 %1018
        %1022 = vset.pattern.permute.xlu0 0
        %1023 = vperm.xlu0 %1022, %v1005
        %v1024 = vpop.permute.xlu0 %1023
        %v1026 = vmul.f32 %v1000, %v1009
        %v1027 = vmul.f32 %v999, %v1014
        %v1028 = vmul.f32 %v998, %v1019
        %v1029 = vmul.f32 %v1001, %v1024
        %v1030 = vld [vmem:[%s8] sm:$0x1]
        %v1031 = vlaneseq
        %v1032 = vshrl.u32 %v1031, 7
        %v1033 = vsub.s32 0, %v1032
        %v1034 = vrot.slane %v1030, %v1033
        %v1035 = vmul.f32 %v1034, %v989
        %v1036 = vmul.f32 %v1034, %v990
        %v1037 = vmul.f32 %v1034, %v991
        %v1038 = vmul.f32 %v1034, %v992
        %v1039 = vld [vmem:[%s8 + $0x1] sm:$0x1]
        %v1040 = vlaneseq
        %v1041 = vshrl.u32 %v1040, 7
        %v1042 = vsub.s32 0, %v1041
        %v1043 = vrot.slane %v1039, %v1042
        %v1044 = vmul.f32 %v1043, %v950
        %v1045 = vmul.f32 %v1043, %v951
        %v1046 = vmul.f32 %v1043, %v952
        %v1047 = vmul.f32 %v1043, %v953
        %v1048 = vadd.f32 %v1035, %v1044
        %v1049 = vadd.f32 %v1036, %v1045
        %v1050 = vadd.f32 %v1037, %v1046
        %v1051 = vadd.f32 %v1038, %v1047
        %v1052 = vld [vmem:[%s8 + $0x2] sm:$0x1]
        %v1053 = vlaneseq
        %v1054 = vshrl.u32 %v1053, 7
        %v1055 = vsub.s32 0, %v1054
        %v1056 = vrot.slane %v1052, %v1055
        %v1057 = vmul.f32 %v1056, %v1026
        %v1058 = vmul.f32 %v1056, %v1027
        %v1059 = vmul.f32 %v1056, %v1028
        %v1060 = vmul.f32 %v1056, %v1029
        %v1061 = vadd.f32 %v1048, %v1057
        %v1062 = vadd.f32 %v1049, %v1058
        %v1063 = vadd.f32 %v1050, %v1059
        %v1064 = vadd.f32 %v1051, %v1060
        %v1065 = vpack.c.bf16 %v1062, %v1061
        %v1066 = vpack.c.bf16 %v1064, %v1063
        %v1067 = vld [vmem:[#allocation5] sm:$0xf]
        %v1068 = vld [vmem:[#allocation5 + $0x4] sm:$0xf]
        %v1069 = vld [vmem:[#allocation5 + $0x8] sm:$0xf]
        %v1070 = vld [vmem:[#allocation5 + $0xc] sm:$0xf]
        %v1071 = vld [vmem:[#allocation5 + $0x10] sm:$0xf]
        %v1072 = vld [vmem:[#allocation5 + $0x14] sm:$0xf]
        %v1073 = vld [vmem:[#allocation5 + $0x18] sm:$0xf]
        %v1074 = vld [vmem:[#allocation5 + $0x1c] sm:$0xf]
        %v1075 = vld [vmem:[#allocation5 + $0x20] sm:$0xf]
        %v1076 = vld [vmem:[#allocation5 + $0x24] sm:$0xf]
        %v1077 = vld [vmem:[#allocation5 + $0x28] sm:$0xf]
        %v1078 = vld [vmem:[#allocation5 + $0x2c] sm:$0xf]
        %v1079 = vld [vmem:[#allocation5 + $0x30] sm:$0xf]
        %v1080 = vld [vmem:[#allocation5 + $0x34] sm:$0xf]
        %v1081 = vld [vmem:[#allocation5 + $0x38] sm:$0xf]
        %v1082 = vld [vmem:[#allocation5 + $0x3c] sm:$0xf]
        %v1083 = vld [vmem:[%s10] sm:$0x1]
        %v1085 = vlaneseq
        %v1086 = vshrl.u32 %v1085, 7
        %v1087 = vsub.s32 0, %v1086
        %v1088 = vrot.slane %v1083, %v1087
        %v1106 = vunpack.c.l.b16 %v1067
        %v1107 = vunpack.c.l.b16 %v1068
        %v1108 = vunpack.c.l.b16 %v1069
        %v1109 = vunpack.c.l.b16 %v1070
        %v1110 = vunpack.c.l.b16 %v1071
        %v1111 = vunpack.c.l.b16 %v1072
        %v1112 = vunpack.c.l.b16 %v1073
        %v1113 = vunpack.c.l.b16 %v1074
        %v1114 = vunpack.c.l.b16 %v1075
        %v1115 = vunpack.c.l.b16 %v1076
        %v1116 = vunpack.c.l.b16 %v1077
        %v1117 = vunpack.c.l.b16 %v1078
        %v1118 = vunpack.c.l.b16 %v1079
        %v1119 = vunpack.c.l.b16 %v1080
        %v1120 = vunpack.c.l.b16 %v1081
        %v1121 = vunpack.c.l.b16 %v1082
        %v1122 = vpack.c.b16 %v1107, %v1106
        %v1123 = vpack.c.b16 %v1109, %v1108
        %v1124 = vpack.c.b16 %v1111, %v1110
        %v1125 = vpack.c.b16 %v1113, %v1112
        %v1126 = vpack.c.b16 %v1115, %v1114
        %v1127 = vpack.c.b16 %v1117, %v1116
        %v1128 = vpack.c.b16 %v1119, %v1118
        %v1129 = vpack.c.b16 %v1121, %v1120
        %1138 = vmatprep.subr.bf16.mxu0 0
        %1139 = vmatpush1.bf16.msra.mxu0 %v1129
        %1140 = vmatprep.subr.bf16.mxu0 0
        %1141 = vmatpush1.bf16.msra.mxu0 %v1128
        %1142 = vmatprep.subr.bf16.mxu0 0
        %1143 = vmatpush1.bf16.msra.mxu0 %v1127
        %1144 = vmatprep.subr.bf16.mxu0 0
        %1145 = vmatpush1.bf16.msra.mxu0 %v1126
        %1146 = vmatprep.subr.bf16.mxu0 0
        %1147 = vmatpush1.bf16.msra.mxu0 %v1125
        %1148 = vmatprep.subr.bf16.mxu0 0
        %1149 = vmatpush1.bf16.msra.mxu0 %v1124
        %1150 = vmatprep.subr.bf16.mxu0 0
        %1151 = vmatpush1.bf16.msra.mxu0 %v1123
        %1152 = vmatprep.subr.bf16.mxu0 0
        %1153 = vmatpush1.bf16.msra.mxu0 %v1122
        %1154 = vmatprep.subr.bf16.mxu0 0
        %1155 = vmatpush2.bf16.msra.mxu0 0
        %1156 = vmatprep.subr.bf16.mxu0 0
        %1157 = vmatpush2.bf16.msra.mxu0 0
        %1158 = vmatprep.subr.bf16.mxu0 0
        %1159 = vmatpush2.bf16.msra.mxu0 0
        %1160 = vmatprep.subr.bf16.mxu0 0
        %1161 = vmatpush2.bf16.msra.mxu0 0
        %1162 = vmatprep.subr.bf16.mxu0 0
        %1163 = vmatpush2.bf16.msra.mxu0 0
        %1164 = vmatprep.subr.bf16.mxu0 0
        %1165 = vmatpush2.bf16.msra.mxu0 0
        %1166 = vmatprep.subr.bf16.mxu0 0
        %1167 = vmatpush2.bf16.msra.mxu0 0
        %1168 = vmatprep.subr.bf16.mxu0 0
        %1169 = vmatpush2.bf16.msra.mxu0 0
        %1170 = vmatprep.mubr.bf16.mxu0 0
        %1171 = vmatmul.mubr.bf16.gmra.mxu0 %v1065
        %v1172 = vpop.f32.mrf.mxu0
        %v1173 = vadd.f32 %v1088, %v1172
        %v1174 = vpop.f32.mrf.mxu0
        %v1175 = vpop.f32.mrf.mxu0
        %v1176 = vadd.f32 %v1088, %v1175
        %v1177 = vpop.f32.mrf.mxu0
        %1178 = vmatprep.mubr.bf16.mxu0 0
        %1179 = vmatmul.mubr.bf16.gmra.mxu0 %v1066
        %v1180 = vpop.f32.mrf.mxu0
        %v1181 = vadd.f32 %v1088, %v1180
        %v1182 = vpop.f32.mrf.mxu0
        %v1183 = vpop.f32.mrf.mxu0
        %v1184 = vadd.f32 %v1088, %v1183
        %v1185 = vpop.f32.mrf.mxu0
        %1186 = vdwg.mxu0
        %v1187 = vadd.f32 %v636, %v1173
        %v1188 = vadd.f32 %v637, %v1176
        %v1189 = vadd.f32 %v638, %v1181
        %v1190 = vadd.f32 %v639, %v1184
        %v1191 = vld [vmem:[%s11] sm:$0x1]
        %v1192 = vld [vmem:[%s12] sm:$0x1]
        %1193 = vadd.xlane.f32.xlu0 %v1187
        %v1194 = vpop.xlane.xlu0 %1193
        %1195 = vadd.xlane.f32.xlu0 %v1188
        %v1196 = vpop.xlane.xlu0 %1195
        %1197 = vadd.xlane.f32.xlu0 %v1189
        %v1198 = vpop.xlane.xlu0 %1197
        %1199 = vadd.xlane.f32.xlu0 %v1190
        %v1200 = vpop.xlane.xlu0 %1199
        %v1201 = vmul.f32 %v1194, %v654
        %v1202 = vmul.f32 %v1196, %v654
        %v1203 = vmul.f32 %v1198, %v654
        %v1204 = vmul.f32 %v1200, %v654
        %v1205 = vsub.f32 %v1187, %v1201
        %v1206 = vsub.f32 %v1188, %v1202
        %v1207 = vsub.f32 %v1189, %v1203
        %v1208 = vsub.f32 %v1190, %v1204
        %v1209 = vmul.f32 %v1205, %v1205
        %v1210 = vmul.f32 %v1206, %v1206
        %v1211 = vmul.f32 %v1207, %v1207
        %v1212 = vmul.f32 %v1208, %v1208
        %1213 = vadd.xlane.f32.xlu0 %v1209
        %v1214 = vpop.xlane.xlu0 %1213
        %1215 = vadd.xlane.f32.xlu0 %v1210
        %v1216 = vpop.xlane.xlu0 %1215
        %1217 = vadd.xlane.f32.xlu0 %v1211
        %v1218 = vpop.xlane.xlu0 %1217
        %1219 = vadd.xlane.f32.xlu0 %v1212
        %v1220 = vpop.xlane.xlu0 %1219
        %v1221 = vmul.f32 %v1214, 0.007874016
        %v1222 = vmul.f32 %v1216, 0.007874016
        %v1223 = vmul.f32 %v1218, 0.007874016
        %v1224 = vmul.f32 %v1220, 0.007874016
        %v1225 = vrsqrt.pop %v1221
        %v1226 = vmul.f32 %v1221, %v1225
        %vm1227 = vcmp.eq.f32.partialorder %v1221, inf
        %v1228 = vsel %vm1227, %v1221, %v1226
        %vm1229 = vcmp.eq.f32.partialorder %v1221, 0.0
        %v1230 = vand.u32 %v1221, 2147483648
        %v1231 = vsel %vm1229, %v1230, %v1228
        %v1232 = vrsqrt.pop %v1222
        %v1233 = vmul.f32 %v1222, %v1232
        %vm1234 = vcmp.eq.f32.partialorder %v1222, inf
        %v1235 = vsel %vm1234, %v1222, %v1233
        %vm1236 = vcmp.eq.f32.partialorder %v1222, 0.0
        %v1237 = vand.u32 %v1222, 2147483648
        %v1238 = vsel %vm1236, %v1237, %v1235
        %v1239 = vrsqrt.pop %v1223
        %v1240 = vmul.f32 %v1223, %v1239
        %vm1241 = vcmp.eq.f32.partialorder %v1223, inf
        %v1242 = vsel %vm1241, %v1223, %v1240
        %vm1243 = vcmp.eq.f32.partialorder %v1223, 0.0
        %v1244 = vand.u32 %v1223, 2147483648
        %v1245 = vsel %vm1243, %v1244, %v1242
        %v1246 = vrsqrt.pop %v1224
        %v1247 = vmul.f32 %v1224, %v1246
        %vm1248 = vcmp.eq.f32.partialorder %v1224, inf
        %v1249 = vsel %vm1248, %v1224, %v1247
        %vm1250 = vcmp.eq.f32.partialorder %v1224, 0.0
        %v1251 = vand.u32 %v1224, 2147483648
        %v1252 = vsel %vm1250, %v1251, %v1249
        %v1253 = vadd.f32 %v1231, 1e-06
        %v1254 = vadd.f32 %v1238, 1e-06
        %v1255 = vadd.f32 %v1245, 1e-06
        %v1256 = vadd.f32 %v1252, 1e-06
        %v1257 = vrcp.pop %v1253
        %v1258 = vrcp.pop %v1254
        %v1259 = vrcp.pop %v1255
        %v1260 = vrcp.pop %v1256
        %v1261 = vmul.f32 %v1205, %v1257
        %v1262 = vmul.f32 %v1206, %v1258
        %v1263 = vmul.f32 %v1207, %v1259
        %v1264 = vmul.f32 %v1208, %v1260
        %v1266 = vlaneseq
        %v1267 = vshrl.u32 %v1266, 7
        %v1268 = vsub.s32 0, %v1267
        %v1269 = vrot.slane %v1191, %v1268
        %v1271 = vmul.f32 %v1269, %v1261
        %v1272 = vmul.f32 %v1269, %v1262
        %v1273 = vmul.f32 %v1269, %v1263
        %v1274 = vmul.f32 %v1269, %v1264
        %v1276 = vlaneseq
        %v1277 = vshrl.u32 %v1276, 7
        %v1278 = vsub.s32 0, %v1277
        %v1279 = vrot.slane %v1192, %v1278
        %v1281 = vadd.f32 %v1271, %v1279
        %v1282 = vadd.f32 %v1272, %v1279
        %v1283 = vadd.f32 %v1273, %v1279
        %v1284 = vadd.f32 %v1274, %v1279
        %v1285 = vpack.c.bf16 %v1282, %v1281
        %v1286 = vpack.c.bf16 %v1284, %v1283
        %v1287 = vld [vmem:[#allocation7] sm:$0xff]
        %v1288 = vld [vmem:[#allocation7 + $0x8] sm:$0xff]
        %v1289 = vld [vmem:[#allocation7 + $0x10] sm:$0xff]
        %v1290 = vld [vmem:[#allocation7 + $0x18] sm:$0xff]
        %v1291 = vld [vmem:[#allocation7 + $0x20] sm:$0xff]
        %v1292 = vld [vmem:[#allocation7 + $0x28] sm:$0xff]
        %v1293 = vld [vmem:[#allocation7 + $0x30] sm:$0xff]
        %v1294 = vld [vmem:[#allocation7 + $0x38] sm:$0xff]
        %v1295 = vld [vmem:[#allocation7 + $0x40] sm:$0xff]
        %v1296 = vld [vmem:[#allocation7 + $0x48] sm:$0xff]
        %v1297 = vld [vmem:[#allocation7 + $0x50] sm:$0xff]
        %v1298 = vld [vmem:[#allocation7 + $0x58] sm:$0xff]
        %v1299 = vld [vmem:[#allocation7 + $0x60] sm:$0xff]
        %v1300 = vld [vmem:[#allocation7 + $0x68] sm:$0xff]
        %v1301 = vld [vmem:[#allocation7 + $0x70] sm:$0xff]
        %v1302 = vld [vmem:[#allocation7 + $0x78] sm:$0xff]
        %v1303 = vld [vmem:[%s14] sm:$0x3]
        %v1305 = vlaneseq
        %v1306 = vshrl.u32 %v1305, 7
        %v1307 = vsub.s32 0, %v1306
        %v1308 = vrot.slane %v1303, %v1307
        %v1309 = vlaneseq
        %v1310 = vshrl.u32 %v1309, 7
        %v1311 = vsub.s32 1, %v1310
        %v1312 = vrot.slane %v1303, %v1311
        %v1331 = vunpack.c.l.b16 %v1287
        %v1332 = vunpack.c.h.b16 %v1287
        %v1333 = vunpack.c.l.b16 %v1288
        %v1334 = vunpack.c.h.b16 %v1288
        %v1335 = vunpack.c.l.b16 %v1289
        %v1336 = vunpack.c.h.b16 %v1289
        %v1337 = vunpack.c.l.b16 %v1290
        %v1338 = vunpack.c.h.b16 %v1290
        %v1339 = vunpack.c.l.b16 %v1291
        %v1340 = vunpack.c.h.b16 %v1291
        %v1341 = vunpack.c.l.b16 %v1292
        %v1342 = vunpack.c.h.b16 %v1292
        %v1343 = vunpack.c.l.b16 %v1293
        %v1344 = vunpack.c.h.b16 %v1293
        %v1345 = vunpack.c.l.b16 %v1294
        %v1346 = vunpack.c.h.b16 %v1294
        %v1347 = vunpack.c.l.b16 %v1295
        %v1348 = vunpack.c.h.b16 %v1295
        %v1349 = vunpack.c.l.b16 %v1296
        %v1350 = vunpack.c.h.b16 %v1296
        %v1351 = vunpack.c.l.b16 %v1297
        %v1352 = vunpack.c.h.b16 %v1297
        %v1353 = vunpack.c.l.b16 %v1298
        %v1354 = vunpack.c.h.b16 %v1298
        %v1355 = vunpack.c.l.b16 %v1299
        %v1356 = vunpack.c.h.b16 %v1299
        %v1357 = vunpack.c.l.b16 %v1300
        %v1358 = vunpack.c.h.b16 %v1300
        %v1359 = vunpack.c.l.b16 %v1301
        %v1360 = vunpack.c.h.b16 %v1301
        %v1361 = vunpack.c.l.b16 %v1302
        %v1362 = vunpack.c.h.b16 %v1302
        %v1363 = vpack.c.b16 %v1333, %v1331
        %v1364 = vpack.c.b16 %v1334, %v1332
        %v1365 = vpack.c.b16 %v1337, %v1335
        %v1366 = vpack.c.b16 %v1338, %v1336
        %v1367 = vpack.c.b16 %v1341, %v1339
        %v1368 = vpack.c.b16 %v1342, %v1340
        %v1369 = vpack.c.b16 %v1345, %v1343
        %v1370 = vpack.c.b16 %v1346, %v1344
        %v1371 = vpack.c.b16 %v1349, %v1347
        %v1372 = vpack.c.b16 %v1350, %v1348
        %v1373 = vpack.c.b16 %v1353, %v1351
        %v1374 = vpack.c.b16 %v1354, %v1352
        %v1375 = vpack.c.b16 %v1357, %v1355
        %v1376 = vpack.c.b16 %v1358, %v1356
        %v1377 = vpack.c.b16 %v1361, %v1359
        %v1378 = vpack.c.b16 %v1362, %v1360
        %1395 = vmatprep.subr.bf16.mxu0 %v1378
        %1396 = vmatpush1.bf16.msra.mxu0 %v1377
        %1397 = vmatprep.subr.bf16.mxu0 %v1376
        %1398 = vmatpush1.bf16.msra.mxu0 %v1375
        %1399 = vmatprep.subr.bf16.mxu0 %v1374
        %1400 = vmatpush1.bf16.msra.mxu0 %v1373
        %1401 = vmatprep.subr.bf16.mxu0 %v1372
        %1402 = vmatpush1.bf16.msra.mxu0 %v1371
        %1403 = vmatprep.subr.bf16.mxu0 %v1370
        %1404 = vmatpush1.bf16.msra.mxu0 %v1369
        %1405 = vmatprep.subr.bf16.mxu0 %v1368
        %1406 = vmatpush1.bf16.msra.mxu0 %v1367
        %1407 = vmatprep.subr.bf16.mxu0 %v1366
        %1408 = vmatpush1.bf16.msra.mxu0 %v1365
        %1409 = vmatprep.subr.bf16.mxu0 %v1364
        %1410 = vmatpush1.bf16.msra.mxu0 %v1363
        %1411 = vmatprep.subr.bf16.mxu0 0
        %1412 = vmatpush2.bf16.msra.mxu0 0
        %1413 = vmatprep.subr.bf16.mxu0 0
        %1414 = vmatpush2.bf16.msra.mxu0 0
        %1415 = vmatprep.subr.bf16.mxu0 0
        %1416 = vmatpush2.bf16.msra.mxu0 0
        %1417 = vmatprep.subr.bf16.mxu0 0
        %1418 = vmatpush2.bf16.msra.mxu0 0
        %1419 = vmatprep.subr.bf16.mxu0 0
        %1420 = vmatpush2.bf16.msra.mxu0 0
        %1421 = vmatprep.subr.bf16.mxu0 0
        %1422 = vmatpush2.bf16.msra.mxu0 0
        %1423 = vmatprep.subr.bf16.mxu0 0
        %1424 = vmatpush2.bf16.msra.mxu0 0
        %1425 = vmatprep.subr.bf16.mxu0 0
        %1426 = vmatpush2.bf16.msra.mxu0 0
        %1427 = vmatprep.mubr.bf16.mxu0 0
        %1428 = vmatmul.mubr.bf16.gmra.mxu0 %v1285
        %v1429 = vpop.f32.mrf.mxu0
        %v1430 = vadd.f32 %v1308, %v1429
        %v1431 = vpop.f32.mrf.mxu0
        %v1432 = vadd.f32 %v1312, %v1431
        %v1433 = vpop.f32.mrf.mxu0
        %v1434 = vadd.f32 %v1308, %v1433
        %v1435 = vpop.f32.mrf.mxu0
        %v1436 = vadd.f32 %v1312, %v1435
        %1437 = vmatprep.mubr.bf16.mxu0 0
        %1438 = vmatmul.mubr.bf16.gmra.mxu0 %v1286
        %v1439 = vpop.f32.mrf.mxu0
        %v1440 = vadd.f32 %v1308, %v1439
        %v1441 = vpop.f32.mrf.mxu0
        %v1442 = vadd.f32 %v1312, %v1441
        %v1443 = vpop.f32.mrf.mxu0
        %v1444 = vadd.f32 %v1308, %v1443
        %v1445 = vpop.f32.mrf.mxu0
        %v1446 = vadd.f32 %v1312, %v1445
        %1447 = vdwg.mxu0
        %v1448 = vmax.f32 %v1430, 0.0
        %v1449 = vmax.f32 %v1432, 0.0
        %v1450 = vmax.f32 %v1434, 0.0
        %v1451 = vmax.f32 %v1436, 0.0
        %v1452 = vmax.f32 %v1440, 0.0
        %v1453 = vmax.f32 %v1442, 0.0
        %v1454 = vmax.f32 %v1444, 0.0
        %v1455 = vmax.f32 %v1446, 0.0
        %v1456 = vpack.c.bf16 %v1450, %v1448
        %v1457 = vpack.c.bf16 %v1451, %v1449
        %v1458 = vpack.c.bf16 %v1454, %v1452
        %v1459 = vpack.c.bf16 %v1455, %v1453
        %v1460 = vld [vmem:[#allocation8] sm:$0xf]
        %v1461 = vld [vmem:[#allocation8 + $0x4] sm:$0xf]
        %v1462 = vld [vmem:[#allocation8 + $0x8] sm:$0xf]
        %v1463 = vld [vmem:[#allocation8 + $0xc] sm:$0xf]
        %v1464 = vld [vmem:[#allocation8 + $0x10] sm:$0xf]
        %v1465 = vld [vmem:[#allocation8 + $0x14] sm:$0xf]
        %v1466 = vld [vmem:[#allocation8 + $0x18] sm:$0xf]
        %v1467 = vld [vmem:[#allocation8 + $0x1c] sm:$0xf]
        %v1468 = vld [vmem:[#allocation8 + $0x20] sm:$0xf]
        %v1469 = vld [vmem:[#allocation8 + $0x24] sm:$0xf]
        %v1470 = vld [vmem:[#allocation8 + $0x28] sm:$0xf]
        %v1471 = vld [vmem:[#allocation8 + $0x2c] sm:$0xf]
        %v1472 = vld [vmem:[#allocation8 + $0x30] sm:$0xf]
        %v1473 = vld [vmem:[#allocation8 + $0x34] sm:$0xf]
        %v1474 = vld [vmem:[#allocation8 + $0x38] sm:$0xf]
        %v1475 = vld [vmem:[#allocation8 + $0x3c] sm:$0xf]
        %v1476 = vld [vmem:[#allocation8 + $0x40] sm:$0xf]
        %v1477 = vld [vmem:[#allocation8 + $0x44] sm:$0xf]
        %v1478 = vld [vmem:[#allocation8 + $0x48] sm:$0xf]
        %v1479 = vld [vmem:[#allocation8 + $0x4c] sm:$0xf]
        %v1480 = vld [vmem:[#allocation8 + $0x50] sm:$0xf]
        %v1481 = vld [vmem:[#allocation8 + $0x54] sm:$0xf]
        %v1482 = vld [vmem:[#allocation8 + $0x58] sm:$0xf]
        %v1483 = vld [vmem:[#allocation8 + $0x5c] sm:$0xf]
        %v1484 = vld [vmem:[#allocation8 + $0x60] sm:$0xf]
        %v1485 = vld [vmem:[#allocation8 + $0x64] sm:$0xf]
        %v1486 = vld [vmem:[#allocation8 + $0x68] sm:$0xf]
        %v1487 = vld [vmem:[#allocation8 + $0x6c] sm:$0xf]
        %v1488 = vld [vmem:[#allocation8 + $0x70] sm:$0xf]
        %v1489 = vld [vmem:[#allocation8 + $0x74] sm:$0xf]
        %v1490 = vld [vmem:[#allocation8 + $0x78] sm:$0xf]
        %v1491 = vld [vmem:[#allocation8 + $0x7c] sm:$0xf]
        %s1492 = scalar_lea.vmem [#allocation7], 128
        %v1493 = vld [vmem:[%s1492] sm:$0xff]
        %v1494 = vld [vmem:[%s1492 + $0x8] sm:$0xff]
        %v1495 = vld [vmem:[%s1492 + $0x10] sm:$0xff]
        %v1496 = vld [vmem:[%s1492 + $0x18] sm:$0xff]
        %v1497 = vld [vmem:[%s1492 + $0x20] sm:$0xff]
        %v1498 = vld [vmem:[%s1492 + $0x28] sm:$0xff]
        %v1499 = vld [vmem:[%s1492 + $0x30] sm:$0xff]
        %v1500 = vld [vmem:[%s1492 + $0x38] sm:$0xff]
        %v1501 = vld [vmem:[%s1492 + $0x40] sm:$0xff]
        %v1502 = vld [vmem:[%s1492 + $0x48] sm:$0xff]
        %v1503 = vld [vmem:[%s1492 + $0x50] sm:$0xff]
        %v1504 = vld [vmem:[%s1492 + $0x58] sm:$0xff]
        %v1505 = vld [vmem:[%s1492 + $0x60] sm:$0xff]
        %v1506 = vld [vmem:[%s1492 + $0x68] sm:$0xff]
        %v1507 = vld [vmem:[%s1492 + $0x70] sm:$0xff]
        %v1508 = vld [vmem:[%s1492 + $0x78] sm:$0xff]
        %s1509 = scalar_lea.vmem %s14, 2
        %v1510 = vld [vmem:[%s1509] sm:$0x3]
        %v1512 = vlaneseq
        %v1513 = vshrl.u32 %v1512, 7
        %v1514 = vsub.s32 0, %v1513
        %v1515 = vrot.slane %v1510, %v1514
        %v1516 = vlaneseq
        %v1517 = vshrl.u32 %v1516, 7
        %v1518 = vsub.s32 1, %v1517
        %v1519 = vrot.slane %v1510, %v1518
        %v1538 = vunpack.c.l.b16 %v1493
        %v1539 = vunpack.c.h.b16 %v1493
        %v1540 = vunpack.c.l.b16 %v1494
        %v1541 = vunpack.c.h.b16 %v1494
        %v1542 = vunpack.c.l.b16 %v1495
        %v1543 = vunpack.c.h.b16 %v1495
        %v1544 = vunpack.c.l.b16 %v1496
        %v1545 = vunpack.c.h.b16 %v1496
        %v1546 = vunpack.c.l.b16 %v1497
        %v1547 = vunpack.c.h.b16 %v1497
        %v1548 = vunpack.c.l.b16 %v1498
        %v1549 = vunpack.c.h.b16 %v1498
        %v1550 = vunpack.c.l.b16 %v1499
        %v1551 = vunpack.c.h.b16 %v1499
        %v1552 = vunpack.c.l.b16 %v1500
        %v1553 = vunpack.c.h.b16 %v1500
        %v1554 = vunpack.c.l.b16 %v1501
        %v1555 = vunpack.c.h.b16 %v1501
        %v1556 = vunpack.c.l.b16 %v1502
        %v1557 = vunpack.c.h.b16 %v1502
        %v1558 = vunpack.c.l.b16 %v1503
        %v1559 = vunpack.c.h.b16 %v1503
        %v1560 = vunpack.c.l.b16 %v1504
        %v1561 = vunpack.c.h.b16 %v1504
        %v1562 = vunpack.c.l.b16 %v1505
        %v1563 = vunpack.c.h.b16 %v1505
        %v1564 = vunpack.c.l.b16 %v1506
        %v1565 = vunpack.c.h.b16 %v1506
        %v1566 = vunpack.c.l.b16 %v1507
        %v1567 = vunpack.c.h.b16 %v1507
        %v1568 = vunpack.c.l.b16 %v1508
        %v1569 = vunpack.c.h.b16 %v1508
        %v1570 = vpack.c.b16 %v1540, %v1538
        %v1571 = vpack.c.b16 %v1541, %v1539
        %v1572 = vpack.c.b16 %v1544, %v1542
        %v1573 = vpack.c.b16 %v1545, %v1543
        %v1574 = vpack.c.b16 %v1548, %v1546
        %v1575 = vpack.c.b16 %v1549, %v1547
        %v1576 = vpack.c.b16 %v1552, %v1550
        %v1577 = vpack.c.b16 %v1553, %v1551
        %v1578 = vpack.c.b16 %v1556, %v1554
        %v1579 = vpack.c.b16 %v1557, %v1555
        %v1580 = vpack.c.b16 %v1560, %v1558
        %v1581 = vpack.c.b16 %v1561, %v1559
        %v1582 = vpack.c.b16 %v1564, %v1562
        %v1583 = vpack.c.b16 %v1565, %v1563
        %v1584 = vpack.c.b16 %v1568, %v1566
        %v1585 = vpack.c.b16 %v1569, %v1567
        %1602 = vmatprep.subr.bf16.mxu0 %v1585
        %1603 = vmatpush1.bf16.msra.mxu0 %v1584
        %1604 = vmatprep.subr.bf16.mxu0 %v1583
        %1605 = vmatpush1.bf16.msra.mxu0 %v1582
        %1606 = vmatprep.subr.bf16.mxu0 %v1581
        %1607 = vmatpush1.bf16.msra.mxu0 %v1580
        %1608 = vmatprep.subr.bf16.mxu0 %v1579
        %1609 = vmatpush1.bf16.msra.mxu0 %v1578
        %1610 = vmatprep.subr.bf16.mxu0 %v1577
        %1611 = vmatpush1.bf16.msra.mxu0 %v1576
        %1612 = vmatprep.subr.bf16.mxu0 %v1575
        %1613 = vmatpush1.bf16.msra.mxu0 %v1574
        %1614 = vmatprep.subr.bf16.mxu0 %v1573
        %1615 = vmatpush1.bf16.msra.mxu0 %v1572
        %1616 = vmatprep.subr.bf16.mxu0 %v1571
        %1617 = vmatpush1.bf16.msra.mxu0 %v1570
        %1618 = vmatprep.subr.bf16.mxu0 0
        %1619 = vmatpush2.bf16.msra.mxu0 0
        %1620 = vmatprep.subr.bf16.mxu0 0
        %1621 = vmatpush2.bf16.msra.mxu0 0
        %1622 = vmatprep.subr.bf16.mxu0 0
        %1623 = vmatpush2.bf16.msra.mxu0 0
        %1624 = vmatprep.subr.bf16.mxu0 0
        %1625 = vmatpush2.bf16.msra.mxu0 0
        %1626 = vmatprep.subr.bf16.mxu0 0
        %1627 = vmatpush2.bf16.msra.mxu0 0
        %1628 = vmatprep.subr.bf16.mxu0 0
        %1629 = vmatpush2.bf16.msra.mxu0 0
        %1630 = vmatprep.subr.bf16.mxu0 0
        %1631 = vmatpush2.bf16.msra.mxu0 0
        %1632 = vmatprep.subr.bf16.mxu0 0
        %1633 = vmatpush2.bf16.msra.mxu0 0
        %1634 = vmatprep.mubr.bf16.mxu0 0
        %1635 = vmatmul.mubr.bf16.gmra.mxu0 %v1285
        %v1636 = vpop.f32.mrf.mxu0
        %v1637 = vadd.f32 %v1515, %v1636
        %v1638 = vpop.f32.mrf.mxu0
        %v1639 = vadd.f32 %v1519, %v1638
        %v1640 = vpop.f32.mrf.mxu0
        %v1641 = vadd.f32 %v1515, %v1640
        %v1642 = vpop.f32.mrf.mxu0
        %v1643 = vadd.f32 %v1519, %v1642
        %1644 = vmatprep.mubr.bf16.mxu0 0
        %1645 = vmatmul.mubr.bf16.gmra.mxu0 %v1286
        %v1646 = vpop.f32.mrf.mxu0
        %v1647 = vadd.f32 %v1515, %v1646
        %v1648 = vpop.f32.mrf.mxu0
        %v1649 = vadd.f32 %v1519, %v1648
        %v1650 = vpop.f32.mrf.mxu0
        %v1651 = vadd.f32 %v1515, %v1650
        %v1652 = vpop.f32.mrf.mxu0
        %v1653 = vadd.f32 %v1519, %v1652
        %1654 = vdwg.mxu0
        %v1655 = vmax.f32 %v1637, 0.0
        %v1656 = vmax.f32 %v1639, 0.0
        %v1657 = vmax.f32 %v1641, 0.0
        %v1658 = vmax.f32 %v1643, 0.0
        %v1659 = vmax.f32 %v1647, 0.0
        %v1660 = vmax.f32 %v1649, 0.0
        %v1661 = vmax.f32 %v1651, 0.0
        %v1662 = vmax.f32 %v1653, 0.0
        %v1663 = vpack.c.bf16 %v1657, %v1655
        %v1664 = vpack.c.bf16 %v1658, %v1656
        %v1665 = vpack.c.bf16 %v1661, %v1659
        %v1666 = vpack.c.bf16 %v1662, %v1660
        %s1667 = scalar_lea.vmem [#allocation8], 128
        %v1668 = vld [vmem:[%s1667] sm:$0xf]
        %v1669 = vld [vmem:[%s1667 + $0x4] sm:$0xf]
        %v1670 = vld [vmem:[%s1667 + $0x8] sm:$0xf]
        %v1671 = vld [vmem:[%s1667 + $0xc] sm:$0xf]
        %v1672 = vld [vmem:[%s1667 + $0x10] sm:$0xf]
        %v1673 = vld [vmem:[%s1667 + $0x14] sm:$0xf]
        %v1674 = vld [vmem:[%s1667 + $0x18] sm:$0xf]
        %v1675 = vld [vmem:[%s1667 + $0x1c] sm:$0xf]
        %v1676 = vld [vmem:[%s1667 + $0x20] sm:$0xf]
        %v1677 = vld [vmem:[%s1667 + $0x24] sm:$0xf]
        %v1678 = vld [vmem:[%s1667 + $0x28] sm:$0xf]
        %v1679 = vld [vmem:[%s1667 + $0x2c] sm:$0xf]
        %v1680 = vld [vmem:[%s1667 + $0x30] sm:$0xf]
        %v1681 = vld [vmem:[%s1667 + $0x34] sm:$0xf]
        %v1682 = vld [vmem:[%s1667 + $0x38] sm:$0xf]
        %v1683 = vld [vmem:[%s1667 + $0x3c] sm:$0xf]
        %v1684 = vld [vmem:[%s1667 + $0x40] sm:$0xf]
        %v1685 = vld [vmem:[%s1667 + $0x44] sm:$0xf]
        %v1686 = vld [vmem:[%s1667 + $0x48] sm:$0xf]
        %v1687 = vld [vmem:[%s1667 + $0x4c] sm:$0xf]
        %v1688 = vld [vmem:[%s1667 + $0x50] sm:$0xf]
        %v1689 = vld [vmem:[%s1667 + $0x54] sm:$0xf]
        %v1690 = vld [vmem:[%s1667 + $0x58] sm:$0xf]
        %v1691 = vld [vmem:[%s1667 + $0x5c] sm:$0xf]
        %v1692 = vld [vmem:[%s1667 + $0x60] sm:$0xf]
        %v1693 = vld [vmem:[%s1667 + $0x64] sm:$0xf]
        %v1694 = vld [vmem:[%s1667 + $0x68] sm:$0xf]
        %v1695 = vld [vmem:[%s1667 + $0x6c] sm:$0xf]
        %v1696 = vld [vmem:[%s1667 + $0x70] sm:$0xf]
        %v1697 = vld [vmem:[%s1667 + $0x74] sm:$0xf]
        %v1698 = vld [vmem:[%s1667 + $0x78] sm:$0xf]
        %v1699 = vld [vmem:[%s1667 + $0x7c] sm:$0xf]
        %v1732 = vunpack.c.l.b16 %v1668
        %v1733 = vunpack.c.l.b16 %v1669
        %v1734 = vunpack.c.l.b16 %v1670
        %v1735 = vunpack.c.l.b16 %v1671
        %v1736 = vunpack.c.l.b16 %v1672
        %v1737 = vunpack.c.l.b16 %v1673
        %v1738 = vunpack.c.l.b16 %v1674
        %v1739 = vunpack.c.l.b16 %v1675
        %v1740 = vunpack.c.l.b16 %v1676
        %v1741 = vunpack.c.l.b16 %v1677
        %v1742 = vunpack.c.l.b16 %v1678
        %v1743 = vunpack.c.l.b16 %v1679
        %v1744 = vunpack.c.l.b16 %v1680
        %v1745 = vunpack.c.l.b16 %v1681
        %v1746 = vunpack.c.l.b16 %v1682
        %v1747 = vunpack.c.l.b16 %v1683
        %v1748 = vunpack.c.l.b16 %v1684
        %v1749 = vunpack.c.l.b16 %v1685
        %v1750 = vunpack.c.l.b16 %v1686
        %v1751 = vunpack.c.l.b16 %v1687
        %v1752 = vunpack.c.l.b16 %v1688
        %v1753 = vunpack.c.l.b16 %v1689
        %v1754 = vunpack.c.l.b16 %v1690
        %v1755 = vunpack.c.l.b16 %v1691
        %v1756 = vunpack.c.l.b16 %v1692
        %v1757 = vunpack.c.l.b16 %v1693
        %v1758 = vunpack.c.l.b16 %v1694
        %v1759 = vunpack.c.l.b16 %v1695
        %v1760 = vunpack.c.l.b16 %v1696
        %v1761 = vunpack.c.l.b16 %v1697
        %v1762 = vunpack.c.l.b16 %v1698
        %v1763 = vunpack.c.l.b16 %v1699
        %v1764 = vpack.c.b16 %v1733, %v1732
        %v1765 = vpack.c.b16 %v1735, %v1734
        %v1766 = vpack.c.b16 %v1737, %v1736
        %v1767 = vpack.c.b16 %v1739, %v1738
        %v1768 = vpack.c.b16 %v1741, %v1740
        %v1769 = vpack.c.b16 %v1743, %v1742
        %v1770 = vpack.c.b16 %v1745, %v1744
        %v1771 = vpack.c.b16 %v1747, %v1746
        %v1772 = vpack.c.b16 %v1749, %v1748
        %v1773 = vpack.c.b16 %v1751, %v1750
        %v1774 = vpack.c.b16 %v1753, %v1752
        %v1775 = vpack.c.b16 %v1755, %v1754
        %v1776 = vpack.c.b16 %v1757, %v1756
        %v1777 = vpack.c.b16 %v1759, %v1758
        %v1778 = vpack.c.b16 %v1761, %v1760
        %v1779 = vpack.c.b16 %v1763, %v1762
        %1796 = vmatprep.subr.bf16.mxu0 0
        %1797 = vmatpush1.bf16.msra.mxu0 %v1771
        %1798 = vmatprep.subr.bf16.mxu0 0
        %1799 = vmatpush1.bf16.msra.mxu0 %v1770
        %1800 = vmatprep.subr.bf16.mxu0 0
        %1801 = vmatpush1.bf16.msra.mxu0 %v1769
        %1802 = vmatprep.subr.bf16.mxu0 0
        %1803 = vmatpush1.bf16.msra.mxu0 %v1768
        %1804 = vmatprep.subr.bf16.mxu0 0
        %1805 = vmatpush1.bf16.msra.mxu0 %v1767
        %1806 = vmatprep.subr.bf16.mxu0 0
        %1807 = vmatpush1.bf16.msra.mxu0 %v1766
        %1808 = vmatprep.subr.bf16.mxu0 0
        %1809 = vmatpush1.bf16.msra.mxu0 %v1765
        %1810 = vmatprep.subr.bf16.mxu0 0
        %1811 = vmatpush1.bf16.msra.mxu0 %v1764
        %1812 = vmatprep.subr.bf16.mxu0 0
        %1813 = vmatpush2.bf16.msra.mxu0 %v1779
        %1814 = vmatprep.subr.bf16.mxu0 0
        %1815 = vmatpush2.bf16.msra.mxu0 %v1778
        %1816 = vmatprep.subr.bf16.mxu0 0
        %1817 = vmatpush2.bf16.msra.mxu0 %v1777
        %1818 = vmatprep.subr.bf16.mxu0 0
        %1819 = vmatpush2.bf16.msra.mxu0 %v1776
        %1820 = vmatprep.subr.bf16.mxu0 0
        %1821 = vmatpush2.bf16.msra.mxu0 %v1775
        %1822 = vmatprep.subr.bf16.mxu0 0
        %1823 = vmatpush2.bf16.msra.mxu0 %v1774
        %1824 = vmatprep.subr.bf16.mxu0 0
        %1825 = vmatpush2.bf16.msra.mxu0 %v1773
        %1826 = vmatprep.subr.bf16.mxu0 0
        %1827 = vmatpush2.bf16.msra.mxu0 %v1772
        %1828 = vmatprep.mubr.bf16.mxu0 %v1664
        %1829 = vmatmul.mubr.bf16.gmra.mxu0 %v1663
        %v1830 = vpop.f32.mrf.mxu0
        %v1831 = vadd.f32 0.0, %v1830
        %v1832 = vpop.f32.mrf.mxu0
        %v1833 = vpop.f32.mrf.mxu0
        %v1834 = vadd.f32 0.0, %v1833
        %v1835 = vpop.f32.mrf.mxu0
        %1836 = vmatprep.mubr.bf16.mxu0 %v1666
        %1837 = vmatmul.mubr.bf16.gmra.mxu0 %v1665
        %v1838 = vpop.f32.mrf.mxu0
        %v1839 = vadd.f32 0.0, %v1838
        %v1840 = vpop.f32.mrf.mxu0
        %v1841 = vpop.f32.mrf.mxu0
        %v1842 = vadd.f32 0.0, %v1841
        %v1843 = vpop.f32.mrf.mxu0
        %1844 = vdwg.mxu0
        %v1877 = vunpack.c.l.b16 %v1460
        %v1878 = vunpack.c.l.b16 %v1461
        %v1879 = vunpack.c.l.b16 %v1462
        %v1880 = vunpack.c.l.b16 %v1463
        %v1881 = vunpack.c.l.b16 %v1464
        %v1882 = vunpack.c.l.b16 %v1465
        %v1883 = vunpack.c.l.b16 %v1466
        %v1884 = vunpack.c.l.b16 %v1467
        %v1885 = vunpack.c.l.b16 %v1468
        %v1886 = vunpack.c.l.b16 %v1469
        %v1887 = vunpack.c.l.b16 %v1470
        %v1888 = vunpack.c.l.b16 %v1471
        %v1889 = vunpack.c.l.b16 %v1472
        %v1890 = vunpack.c.l.b16 %v1473
        %v1891 = vunpack.c.l.b16 %v1474
        %v1892 = vunpack.c.l.b16 %v1475
        %v1893 = vunpack.c.l.b16 %v1476
        %v1894 = vunpack.c.l.b16 %v1477
        %v1895 = vunpack.c.l.b16 %v1478
        %v1896 = vunpack.c.l.b16 %v1479
        %v1897 = vunpack.c.l.b16 %v1480
        %v1898 = vunpack.c.l.b16 %v1481
        %v1899 = vunpack.c.l.b16 %v1482
        %v1900 = vunpack.c.l.b16 %v1483
        %v1901 = vunpack.c.l.b16 %v1484
        %v1902 = vunpack.c.l.b16 %v1485
        %v1903 = vunpack.c.l.b16 %v1486
        %v1904 = vunpack.c.l.b16 %v1487
        %v1905 = vunpack.c.l.b16 %v1488
        %v1906 = vunpack.c.l.b16 %v1489
        %v1907 = vunpack.c.l.b16 %v1490
        %v1908 = vunpack.c.l.b16 %v1491
        %v1909 = vpack.c.b16 %v1878, %v1877
        %v1910 = vpack.c.b16 %v1880, %v1879
        %v1911 = vpack.c.b16 %v1882, %v1881
        %v1912 = vpack.c.b16 %v1884, %v1883
        %v1913 = vpack.c.b16 %v1886, %v1885
        %v1914 = vpack.c.b16 %v1888, %v1887
        %v1915 = vpack.c.b16 %v1890, %v1889
        %v1916 = vpack.c.b16 %v1892, %v1891
        %v1917 = vpack.c.b16 %v1894, %v1893
        %v1918 = vpack.c.b16 %v1896, %v1895
        %v1919 = vpack.c.b16 %v1898, %v1897
        %v1920 = vpack.c.b16 %v1900, %v1899
        %v1921 = vpack.c.b16 %v1902, %v1901
        %v1922 = vpack.c.b16 %v1904, %v1903
        %v1923 = vpack.c.b16 %v1906, %v1905
        %v1924 = vpack.c.b16 %v1908, %v1907
        %1941 = vmatprep.subr.bf16.mxu0 0
        %1942 = vmatpush1.bf16.msra.mxu0 %v1916
        %1943 = vmatprep.subr.bf16.mxu0 0
        %1944 = vmatpush1.bf16.msra.mxu0 %v1915
        %1945 = vmatprep.subr.bf16.mxu0 0
        %1946 = vmatpush1.bf16.msra.mxu0 %v1914
        %1947 = vmatprep.subr.bf16.mxu0 0
        %1948 = vmatpush1.bf16.msra.mxu0 %v1913
        %1949 = vmatprep.subr.bf16.mxu0 0
        %1950 = vmatpush1.bf16.msra.mxu0 %v1912
        %1951 = vmatprep.subr.bf16.mxu0 0
        %1952 = vmatpush1.bf16.msra.mxu0 %v1911
        %1953 = vmatprep.subr.bf16.mxu0 0
        %1954 = vmatpush1.bf16.msra.mxu0 %v1910
        %1955 = vmatprep.subr.bf16.mxu0 0
        %1956 = vmatpush1.bf16.msra.mxu0 %v1909
        %1957 = vmatprep.subr.bf16.mxu0 0
        %1958 = vmatpush2.bf16.msra.mxu0 %v1924
        %1959 = vmatprep.subr.bf16.mxu0 0
        %1960 = vmatpush2.bf16.msra.mxu0 %v1923
        %1961 = vmatprep.subr.bf16.mxu0 0
        %1962 = vmatpush2.bf16.msra.mxu0 %v1922
        %1963 = vmatprep.subr.bf16.mxu0 0
        %1964 = vmatpush2.bf16.msra.mxu0 %v1921
        %1965 = vmatprep.subr.bf16.mxu0 0
        %1966 = vmatpush2.bf16.msra.mxu0 %v1920
        %1967 = vmatprep.subr.bf16.mxu0 0
        %1968 = vmatpush2.bf16.msra.mxu0 %v1919
        %1969 = vmatprep.subr.bf16.mxu0 0
        %1970 = vmatpush2.bf16.msra.mxu0 %v1918
        %1971 = vmatprep.subr.bf16.mxu0 0
        %1972 = vmatpush2.bf16.msra.mxu0 %v1917
        %1973 = vmatprep.mubr.bf16.mxu0 %v1457
        %1974 = vmatmul.mubr.bf16.gmra.mxu0 %v1456
        %v1975 = vpop.f32.mrf.mxu0
        %v1976 = vadd.f32 %v1831, %v1975
        %v1977 = vpop.f32.mrf.mxu0
        %v1978 = vpop.f32.mrf.mxu0
        %v1979 = vadd.f32 %v1834, %v1978
        %v1980 = vpop.f32.mrf.mxu0
        %1981 = vmatprep.mubr.bf16.mxu0 %v1459
        %1982 = vmatmul.mubr.bf16.gmra.mxu0 %v1458
        %v1983 = vpop.f32.mrf.mxu0
        %v1984 = vadd.f32 %v1839, %v1983
        %v1985 = vpop.f32.mrf.mxu0
        %v1986 = vpop.f32.mrf.mxu0
        %v1987 = vadd.f32 %v1842, %v1986
        %v1988 = vpop.f32.mrf.mxu0
        %1989 = vdwg.mxu0
        %v1990 = vadd.f32 %v1187, %v1976
        %v1991 = vadd.f32 %v1188, %v1979
        %v1992 = vadd.f32 %v1189, %v1984
        %v1993 = vadd.f32 %v1190, %v1987
        %v1994 = vld [vmem:[%s16] sm:$0x1]
        %v1996 = vlaneseq
        %v1997 = vshrl.u32 %v1996, 7
        %v1998 = vsub.s32 0, %v1997
        %v1999 = vrot.slane %v1994, %v1998
        %v2001 = vadd.f32 %v1990, %v1999
        %v2002 = vadd.f32 %v1991, %v1999
        %v2003 = vadd.f32 %v1992, %v1999
        %v2004 = vadd.f32 %v1993, %v1999
        %2005 = vst [vmem:[%s626] sm:$0xff] %v2001
        %2006 = vst [vmem:[%s626 + $0x8] sm:$0xff] %v2002
        %2007 = vst [vmem:[%s626 + $0x10] sm:$0xff] %v2003
        %2008 = vst [vmem:[%s626 + $0x18] sm:$0xff] %v2004
        %s2009 = sand.u32 %s411, 1
        %s2010 = scalar_lea.sflag [#allocation4], %s2009
        %s2011 = sand.u32 %s411, 1
        %s2012 = smul.addr %s2011, 32
        %s2013 = scalar_lea.vmem [#allocation10], %s2012
        // Predicated region
        $region105: #{tpu_custom_call.1} parent=87 // pred_check
          %p2014 = pneg %p421
        $region106: #{tpu_custom_call.1} parent=87 // pred_check_branch
          %2016 = sbr.rel (%p2014) target = $region108
        $region107: #{tpu_custom_call.1} parent=87 // pred_region
          %s2017 = smul.u32 4, %s36
          %s2019 = ssub.s32 512, 512
          %2020 = vsyncadd %s2010, %s2019
          %s2021 = smul.addr %s2017, 128
          %s2022 = scalar_lea.hbm %s17, %s2021
          %s2023 = sshll.u32 %s2013, 4
          %s2024 = int_to_ptr.vmem [resolvable:$true] %s2023
          %2029 = dma.vmem_to_hbm [thread:$0]  %s2024, 512, %s2022, %s2010, 128, 128, 8
        $region108: #{tpu_custom_call.1} parent=87 // pred_fallthru
          _
      $region88: #{tpu_custom_call.1} parent=5 // pred_fallthru
        _
      %p2030 = scmp.le.s32.totalorder 2, %s31
      // Predicated region
      $region109: #{tpu_custom_call.1} parent=5 // pred_check
        %p2031 = pneg %p2030
      $region110: #{tpu_custom_call.1} parent=5 // pred_check_branch
        %2033 = sbr.rel (%p2031) target = $region112
      $region111: #{tpu_custom_call.1} parent=5 // pred_region
        %s2034 = ssub.s32 %s31, 2
        // Predicated region
        $region113: #{tpu_custom_call.1} parent=111 // pred_check
          %p2035 = pneg %p427
        $region114: #{tpu_custom_call.1} parent=111 // pred_check_branch
          %2037 = sbr.rel (%p2035) target = $region116
        $region115: #{tpu_custom_call.1} parent=111 // pred_region
          %s2038 = sand.u32 %s412, 1
          %s2039 = scalar_lea.sflag [#allocation4], %s2038
          %s2040 = sand.u32 %s412, 1
          %s2041 = smul.addr %s2040, 32
          %s2042 = scalar_lea.vmem [#allocation10], %s2041
          %2043 = dma.done %s2039, 512
        $region116: #{tpu_custom_call.1} parent=111 // pred_fallthru
          _
      $region112: #{tpu_custom_call.1} parent=5 // pred_fallthru
        _
    $region6: #{tpu_custom_call.1} parent=1 // loop_footer
      %s35 = sadd.s32 1, %s31
    $region7: #{tpu_custom_call.1} parent=1 // loop_footer_branch
      %30 = sbr.rel target = $region3
    $region8: #{tpu_custom_call.1} parent=1 // loop_exit
      _
    %2044 = vsyncpa [#allocation3], 1
    %s2045 = scalar_lea.sflag [#allocation3], 1
    %2046 = vsyncpa %s2045, 1
    %2047 = vsyncpa [#allocation6], 1
    %2048 = vsyncpa [#allocation9], 1
    %2049 = vsyncpa [#allocation4], 1
    %s2050 = scalar_lea.sflag [#allocation4], 1
    %2051 = vsyncpa %s2050, 1

</llo_original>
